<compile_context>
chip_gen: v7x
topology: tpu7x:2x2x1
jax: 0.10.0
libtpu: 0.0.40
codegen_flags: <defaults>
</compile_context>

<pallas_src>
import functools

import jax
import jax.numpy as jnp
import numpy as np
from jax.experimental import pallas as pl
from jax.experimental.pallas import tpu as pltpu


def _round_up(x, m):
    return ((x + m - 1) // m) * m


def _deform_roi_pool_kernel(gb_ref, geo_ref, ylane_ref, xlane_ref, data_ref,
                            out_ref, *, spp, H, W, M, HW_pad, C_pad):
    # gb_ref (scalar prefetch) is only used by the index_maps.
    geo = geo_ref[...]                         # (M, 4) f32
    wstart = geo[:, 0:1]                       # (M, 1)
    hstart = geo[:, 1:2]
    sub_w = geo[:, 2:3]
    sub_h = geo[:, 3:4]

    ylane = ylane_ref[...]                     # (1, HW_pad) f32: y index per lane (-1 on pad)
    xlane = xlane_ref[...]                     # (1, HW_pad) f32: x index per lane (-1 on pad)

    wy = jnp.zeros((M, HW_pad), jnp.float32)   # y-factor of the bilinear weights
    wx = jnp.zeros((M, HW_pad), jnp.float32)   # x-factor of the bilinear weights
    cy = jnp.zeros((M, 1), jnp.float32)        # number of valid y samples
    cx = jnp.zeros((M, 1), jnp.float32)        # number of valid x samples

    # Separable sample loop: only spp iterations, each touching (M, HW_pad)
    # with 3 big vector ops per tap (compare/select/add).  The sum over the
    # spp^2 sample grid factorises as (sum_ih wy) * (sum_iw wx).
    for i in range(spp):
        fi = float(i)
        # ---- y direction -------------------------------------------------
        h = hstart + fi * sub_h                                  # (M, 1)
        vh = ((h >= -0.5) & (h <= H - 0.5)).astype(jnp.float32)  # validity
        hc = jnp.clip(h, 0.0, H - 1.0)
        y1 = jnp.floor(hc)
        dy = hc - y1
        y2 = jnp.minimum(y1 + 1.0, H - 1.0)    # clamped tap carries dy == 0
        wy = (wy
              + jnp.where(ylane == y1, (1.0 - dy) * vh, 0.0)
              + jnp.where(ylane == y2, dy * vh, 0.0))
        cy = cy + vh
        # ---- x direction -------------------------------------------------
        w = wstart + fi * sub_w
        vw = ((w >= -0.5) & (w <= W - 0.5)).astype(jnp.float32)
        wc = jnp.clip(w, 0.0, W - 1.0)
        x1 = jnp.floor(wc)
        dx = wc - x1
        x2 = jnp.minimum(x1 + 1.0, W - 1.0)
        wx = (wx
              + jnp.where(xlane == x1, (1.0 - dx) * vw, 0.0)
              + jnp.where(xlane == x2, dx * vw, 0.0))
        cx = cx + vw

    wmat = wy * wx                             # (M, HW_pad) interpolation weights
    cnt = cy * cx                              # (M, 1) valid-sample counts

    data2 = data_ref[0]                        # (HW_pad, C_pad)
    if data2.dtype != jnp.float32:
        data2 = data2.astype(jnp.float32)      # TODO(synk): native bf16 MXU path

    pooled = jnp.dot(wmat, data2, preferred_element_type=jnp.float32)  # (M, C_pad)

    # (M, 1) reciprocal + broadcast multiply instead of a (M, C_pad) divide.
    scale = jnp.where(cnt > 0.0, 1.0 / jnp.maximum(cnt, 1.0), 0.0)
    out_ref[...] = (pooled * scale)[None].astype(out_ref.dtype)        # (1, M, C_pad)


def deform_roi_pool_pallas(data, rois, offset, *, spatial_scale, out_size,
                           out_channels, no_trans, group_size=1,
                           part_size=None, sample_per_part=4, trans_std=0.0):
    B, C, H, W = data.shape
    n = rois.shape[0]
    part_size = out_size if part_size is None else part_size
    assert group_size == 1, "only group_size=1 supported"      # TODO(synk)
    assert part_size == out_size, "only part_size=out_size"    # TODO(synk)
    assert C == out_channels * group_size * group_size
    spp = int(sample_per_part)
    P = out_size * out_size
    HW = H * W

    # ---- static tiling configuration --------------------------------------
    P_pad = _round_up(P, 8)                 # bins padded to a sublane multiple
    R = max(1, 256 // P_pad)                # ROIs per grid step (M ~ 256 MXU rows)
    M = R * P_pad
    HW_pad = _round_up(HW, 128)             # lane-dense flattened spatial axis
    C_pad = _round_up(C, 128)               # lane-dense channel axis

    if no_trans or offset is None or offset.size == 0:
        offset = jnp.zeros((n, 2, out_size, out_size), jnp.float32)

    # ---- per-ROI / per-bin geometry, vectorised in the wrapper -------------
    rois_f = rois.astype(jnp.float32)
    # Clamp batch index so a malformed ROI can never drive an OOB HBM DMA
    # (it silently pools from batch 0 / B-1 instead).
    bi = jnp.clip(jnp.floor(rois_f[:, 0] + 0.5).astype(jnp.int32), 0, B - 1)

    ss = jnp.float32(spatial_scale)
    x1r = jnp.floor(rois_f[:, 1] + 0.5)
    y1r = jnp.floor(rois_f[:, 2] + 0.5)
    x2r = jnp.floor(rois_f[:, 3] + 0.5)
    y2r = jnp.floor(rois_f[:, 4] + 0.5)
    rsw = x1r * ss - 0.5
    rsh = y1r * ss - 0.5
    rew = (x2r + 1.0) * ss - 0.5
    reh = (y2r + 1.0) * ss - 0.5
    roi_w = jnp.maximum(rew - rsw, 0.1)
    roi_h = jnp.maximum(reh - rsh, 0.1)
    bin_w = roi_w / float(out_size)
    bin_h = roi_h / float(out_size)
    sub_w = bin_w / float(spp)
    sub_h = bin_h / float(spp)

    bins = jnp.arange(P, dtype=jnp.int32)
    phb = (bins // out_size).astype(jnp.float32)
    pwb = (bins % out_size).astype(jnp.float32)
    off = offset.astype(jnp.float32).reshape(n, 2, P)
    tx = off[:, 0, :] * float(trans_std)                      # (n, P)
    ty = off[:, 1, :] * float(trans_std)
    wstart = pwb[None, :] * bin_w[:, None] + rsw[:, None] + tx * roi_w[:, None]
    hstart = phb[None, :] * bin_h[:, None] + rsh[:, None] + ty * roi_h[:, None]
    geo = jnp.stack([wstart, hstart,
                     jnp.broadcast_to(sub_w[:, None], (n, P)),
                     jnp.broadcast_to(sub_h[:, None], (n, P))], axis=-1)  # (n, P, 4)
    geo = jnp.pad(geo, ((0, 0), (0, P_pad - P), (0, 0)))                  # (n, P_pad, 4)

    # ---- group ROIs per batch index, R ROIs per group ----------------------
    order = jnp.argsort(bi)                                   # sort by batch index
    bs = bi[order]
    cnt_b = jnp.zeros((B,), jnp.int32).at[bi].add(1)
    batch_start = jnp.cumsum(cnt_b) - cnt_b                   # exclusive cumsum
    g_b = (cnt_b + R - 1) // R                                # groups per batch
    goff = jnp.cumsum(g_b) - g_b
    within = jnp.arange(n, dtype=jnp.int32) - batch_start[bs]
    slot_sorted = (goff[bs] + within // R) * R + within % R   # padded slot per sorted ROI

    # static upper bound on the number of (per-batch padded) groups
    n_groups = int(max(1, min(n, (n + B * (R - 1)) // R)))
    n_slots = n_groups * R

    slot_of_roi = jnp.zeros((n,), jnp.int32).at[order].set(slot_sorted.astype(jnp.int32))
    roi_at_slot = jnp.zeros((n_slots,), jnp.int32).at[slot_sorted].set(order.astype(jnp.int32))
    group_batch = bi[roi_at_slot[::R]]                        # (n_groups,) batch per group

    geo_flat = geo[roi_at_slot].reshape(n_slots * P_pad, 4)   # (n_groups*M, 4)

    # ---- lane index LUT (avoids in-kernel integer divide / relayout) -------
    s_np = np.arange(HW_pad)
    ylane = np.where(s_np < HW, s_np // W, -1).astype(np.float32)[None, :]
    xlane = np.where(s_np < HW, s_np % W, -1).astype(np.float32)[None, :]
    ylane = jnp.asarray(ylane)                                # (1, HW_pad)
    xlane = jnp.asarray(xlane)

    # ---- feature map: NCHW -> (B, HW_pad, C_pad), zero-padded --------------
    data_flat = jnp.transpose(data, (0, 2, 3, 1)).reshape(B, HW, C)
    data_flat = jnp.pad(data_flat, ((0, 0), (0, HW_pad - HW), (0, C_pad - C)))

    kernel = functools.partial(
        _deform_roi_pool_kernel, spp=spp, H=H, W=W, M=M,
        HW_pad=HW_pad, C_pad=C_pad)

    grid_spec = pltpu.PrefetchScalarGridSpec(
        num_scalar_prefetch=1,                # group_batch: per-group batch index
        grid=(n_groups,),
        in_specs=[
            pl.BlockSpec((M, 4), lambda g, gb: (g, 0)),                   # geometry
            pl.BlockSpec((1, HW_pad), lambda g, gb: (0, 0)),              # ylane (resident)
            pl.BlockSpec((1, HW_pad), lambda g, gb: (0, 0)),              # xlane (resident)
            pl.BlockSpec((1, HW_pad, C_pad), lambda g, gb: (gb[g], 0, 0)),  # image slab
        ],
        out_specs=pl.BlockSpec((1, M, C_pad), lambda g, gb: (g, 0, 0)),
    )

    # ---- generation-gated VMEM budget --------------------------------------
    try:
        vmem_cap = int(pltpu.get_tpu_info().vmem_capacity_bytes)
    except Exception:
        vmem_cap = 64 * 1024 * 1024
    budget_cap = (vmem_cap * 3) // 4          # v7x 64MiB -> 48MiB, v5e/v6e 128MiB -> 96MiB
    est = 4 * (2 * HW_pad * C_pad             # data slab (double-buffered)
               + 2 * M * C_pad                # out block (double-buffered)
               + 2 * M * 4                    # geometry block
               + 4 * HW_pad                   # lane LUTs
               + 6 * M * HW_pad)              # wy / wx / wmat + temporaries
    est += 2 * 1024 * 1024
    vmem_limit = int(min(max(est, 16 * 1024 * 1024), budget_cap))

    out = pl.pallas_call(
        kernel,
        grid_spec=grid_spec,
        out_shape=jax.ShapeDtypeStruct((n_groups, M, C_pad), data.dtype),
        compiler_params=pltpu.CompilerParams(
            dimension_semantics=("parallel",),     # ROI groups independent (v7x: 2 TCs)
            vmem_limit_bytes=vmem_limit),
    )(group_batch, geo_flat, ylane, xlane, data_flat)

    # ---- un-pad / un-group / restore NCHW-style layout ---------------------
    out = out.reshape(n_slots, P_pad, C_pad)[:, :P, :C]       # drop pad bins/channels
    out = out[slot_of_roi]                                    # back to original ROI order
    out = jnp.transpose(out, (0, 2, 1)).reshape(n, out_channels, out_size, out_size)
    return out


class DeformRoIPooling3D:
    """JAX/Pallas port of the PyTorch DeformRoIPooling3D forward pass."""

    def __init__(self, spatial_scale, out_size, out_channels, no_trans,
                 group_size=1, part_size=None, sample_per_part=4, trans_std=0.0):
        out_size = out_size if isinstance(out_size, int) else out_size[0]
        self.spatial_scale = spatial_scale
        self.out_size = out_size
        self.out_channels = out_channels
        self.no_trans = no_trans
        self.group_size = group_size
        self.part_size = out_size if part_size is None else part_size
        self.sample_per_part = sample_per_part
        self.trans_std = trans_std
        assert 0.0 <= trans_std <= 1.0

    def __call__(self, data, rois, offset):
        return deform_roi_pool_pallas(
            data, rois, offset,
            spatial_scale=self.spatial_scale, out_size=self.out_size,
            out_channels=self.out_channels, no_trans=self.no_trans,
            group_size=self.group_size, part_size=self.part_size,
            sample_per_part=self.sample_per_part, trans_std=self.trans_std)


# --------------------------- pure-numpy reference ---------------------------
def _ref_deform_roi_pool(data, rois, offset, spatial_scale, out_size,
                         out_channels, no_trans, sample_per_part, trans_std):
    data = np.asarray(data, np.float64)
    rois = np.asarray(rois, np.float64)
    offset = np.asarray(offset, np.float64)
    n = rois.shape[0]
    _, C, H, W = data.shape
    out = np.zeros((n, out_channels, out_size, out_size), np.float64)
    for i in range(n):
        b = int(np.floor(rois[i, 0] + 0.5))
        rsw = np.floor(rois[i, 1] + 0.5) * spatial_scale - 0.5
        rsh = np.floor(rois[i, 2] + 0.5) * spatial_scale - 0.5
        rew = (np.floor(rois[i, 3] + 0.5) + 1.0) * spatial_scale - 0.5
        reh = (np.floor(rois[i, 4] + 0.5) + 1.0) * spatial_scale - 0.5
        roi_w = max(rew - rsw, 0.1)
        roi_h = max(reh - rsh, 0.1)
        bw, bh = roi_w / out_size, roi_h / out_size
        sw, sh = bw / sample_per_part, bh / sample_per_part
        for c in range(out_channels):
            for ph in range(out_size):
                for pw in range(out_size):
                    tx = 0.0 if no_trans else offset[i, 0, ph, pw] * trans_std
                    ty = 0.0 if no_trans else offset[i, 1, ph, pw] * trans_std
                    wstart = pw * bw + rsw + tx * roi_w
                    hstart = ph * bh + rsh + ty * roi_h
                    s, cnt = 0.0, 0
                    for ih in range(sample_per_part):
                        for iw in range(sample_per_part):
                            w = wstart + iw * sw
                            h = hstart + ih * sh
                            if w < -0.5 or w > W - 0.5 or h < -0.5 or h > H - 0.5:
                                continue
                            w = min(max(w, 0.0), W - 1.0)
                            h = min(max(h, 0.0), H - 1.0)
                            x1, x2 = int(np.floor(w)), int(np.ceil(w))
                            y1, y2 = int(np.floor(h)), int(np.ceil(h))
                            dx, dy = w - x1, h - y1
                            v = ((1 - dx) * (1 - dy) * data[b, c, y1, x1] +
                                 (1 - dx) * dy * data[b, c, y2, x1] +
                                 dx * (1 - dy) * data[b, c, y1, x2] +
                                 dx * dy * data[b, c, y2, x2])
                            s += v
                            cnt += 1
                    out[i, c, ph, pw] = 0.0 if cnt == 0 else s / cnt
    return out


if __name__ == "__main__":
    key = jax.random.PRNGKey(0)
    k1, k2 = jax.random.split(key)

    B, C, H, W = 2, 4, 16, 16
    out_size, out_channels = 4, 4
    spatial_scale = 0.5
    sample_per_part = 2
    trans_std = 0.1
    no_trans = False

    data = jax.random.normal(k1, (B, C, H, W), jnp.float32)
    # rois: [batch_index, x1, y1, x2, y2] in image coordinates
    rois = jnp.array([[0.0, 2.0, 3.0, 20.0, 24.0],
                      [1.0, 0.0, 0.0, 31.0, 31.0],
                      [0.0, 10.0, 6.0, 18.0, 14.0]], jnp.float32)
    n = rois.shape[0]
    offset = 0.5 * jax.random.normal(k2, (n, 2, out_size, out_size), jnp.float32)

    module = DeformRoIPooling3D(spatial_scale, out_size, out_channels, no_trans,
                                group_size=1, part_size=None,
                                sample_per_part=sample_per_part,
                                trans_std=trans_std)
    out = module(data, rois, offset)
    out = jax.block_until_ready(out)

    ref = _ref_deform_roi_pool(np.array(data), np.array(rois), np.array(offset),
                               spatial_scale, out_size, out_channels, no_trans,
                               sample_per_part, trans_std)
    np.testing.assert_allclose(np.array(out), ref, rtol=1e-4, atol=1e-4)
    print("KERNEL_OK")
</pallas_src>

<mosaic_0001>
module attributes {stable_mosaic.version = 11 : i64} {
  func.func @_deform_roi_pool_kernel(%arg0: i32, %arg1: memref<2xi32, #tpu.memory_space<smem>>, %arg2: memref<256x4xf32, #tpu.memory_space<vmem>>, %arg3: memref<1x256xf32, #tpu.memory_space<vmem>>, %arg4: memref<1x256xf32, #tpu.memory_space<vmem>>, %arg5: memref<1x256x128xf32, #tpu.memory_space<vmem>>, %arg6: memref<1x256x128xf32, #tpu.memory_space<vmem>>) attributes {dimension_semantics = [#tpu.dimension_semantics<parallel>], iteration_bounds = array<i64: 2>, scalar_prefetch = 1 : i64, scratch_operands = 0 : i64, tpu.core_type = #tpu.core_type<tc>, window_params = [{transform_indices = @transform_0, window_bounds = array<i64: 256, 4>}, {pipeline_mode = #tpu.pipeline_mode<synchronous>, transform_indices = @transform_1, window_bounds = array<i64: 1, 256>}, {pipeline_mode = #tpu.pipeline_mode<synchronous>, transform_indices = @transform_2, window_bounds = array<i64: 1, 256>}, {transform_indices = @transform_3, window_bounds = array<i64: 1, 256, 128>}, {transform_indices = @transform_4, window_bounds = array<i64: 1, 256, 128>}]} {
    %c0 = arith.constant 0 : index
    %c0_0 = arith.constant 0 : index
    %0 = vector.load %arg2[%c0, %c0_0] : memref<256x4xf32, #tpu.memory_space<vmem>>, vector<256x4xf32>
    %1 = vector.extract_strided_slice %0 {offsets = [0, 0], sizes = [256, 1], strides = [1, 1]} : vector<256x4xf32> to vector<256x1xf32>
    %2 = vector.extract_strided_slice %0 {offsets = [0, 1], sizes = [256, 1], strides = [1, 1]} : vector<256x4xf32> to vector<256x1xf32>
    %3 = vector.extract_strided_slice %0 {offsets = [0, 2], sizes = [256, 1], strides = [1, 1]} : vector<256x4xf32> to vector<256x1xf32>
    %4 = vector.extract_strided_slice %0 {offsets = [0, 3], sizes = [256, 1], strides = [1, 1]} : vector<256x4xf32> to vector<256x1xf32>
    %c0_1 = arith.constant 0 : index
    %c0_2 = arith.constant 0 : index
    %5 = vector.load %arg3[%c0_1, %c0_2] : memref<1x256xf32, #tpu.memory_space<vmem>>, vector<1x256xf32>
    %c0_3 = arith.constant 0 : index
    %c0_4 = arith.constant 0 : index
    %6 = vector.load %arg4[%c0_3, %c0_4] : memref<1x256xf32, #tpu.memory_space<vmem>>, vector<1x256xf32>
    %cst = arith.constant 0.000000e+00 : f32
    %7 = vector.broadcast %cst : f32 to vector<256x256xf32>
    %cst_5 = arith.constant 0.000000e+00 : f32
    %8 = vector.broadcast %cst_5 : f32 to vector<256x256xf32>
    %cst_6 = arith.constant 0.000000e+00 : f32
    %9 = vector.broadcast %cst_6 : f32 to vector<256x1xf32>
    %cst_7 = arith.constant 0.000000e+00 : f32
    %10 = vector.broadcast %cst_7 : f32 to vector<256x1xf32>
    %cst_8 = arith.constant 0.000000e+00 : f32
    %11 = vector.broadcast %cst_8 : f32 to vector<256x1xf32>
    %12 = arith.mulf %11, %4 : vector<256x1xf32>
    %13 = arith.addf %2, %12 : vector<256x1xf32>
    %cst_9 = arith.constant -5.000000e-01 : f32
    %14 = vector.broadcast %cst_9 : f32 to vector<256x1xf32>
    %15 = arith.cmpf oge, %13, %14 : vector<256x1xf32>
    %cst_10 = arith.constant 1.550000e+01 : f32
    %16 = vector.broadcast %cst_10 : f32 to vector<256x1xf32>
    %17 = arith.cmpf ole, %13, %16 : vector<256x1xf32>
    %18 = arith.andi %15, %17 : vector<256x1xi1>
    %19 = arith.extui %18 : vector<256x1xi1> to vector<256x1xi32>
    %20 = arith.sitofp %19 : vector<256x1xi32> to vector<256x1xf32>
    %cst_11 = arith.constant 0.000000e+00 : f32
    %cst_12 = arith.constant 1.500000e+01 : f32
    %21 = vector.broadcast %cst_11 : f32 to vector<256x1xf32>
    %22 = arith.maximumf %21, %13 : vector<256x1xf32>
    %23 = vector.broadcast %cst_12 : f32 to vector<256x1xf32>
    %24 = arith.minimumf %23, %22 : vector<256x1xf32>
    %25 = math.floor %24 : vector<256x1xf32>
    %26 = arith.subf %24, %25 : vector<256x1xf32>
    %cst_13 = arith.constant 1.000000e+00 : f32
    %27 = vector.broadcast %cst_13 : f32 to vector<256x1xf32>
    %28 = arith.addf %25, %27 : vector<256x1xf32>
    %cst_14 = arith.constant 1.500000e+01 : f32
    %29 = vector.broadcast %cst_14 : f32 to vector<256x1xf32>
    %30 = arith.minimumf %28, %29 : vector<256x1xf32>
    %31 = vector.broadcast %5 : vector<1x256xf32> to vector<256x256xf32>
    %32 = vector.broadcast %25 : vector<256x1xf32> to vector<256x256xf32>
    %33 = arith.cmpf oeq, %31, %32 : vector<256x256xf32>
    %cst_15 = arith.constant 1.000000e+00 : f32
    %34 = vector.broadcast %cst_15 : f32 to vector<256x1xf32>
    %35 = arith.subf %34, %26 : vector<256x1xf32>
    %36 = arith.mulf %35, %20 : vector<256x1xf32>
    %cst_16 = arith.constant 0.000000e+00 : f32
    %37 = vector.shape_cast %36 : vector<256x1xf32> to vector<256x1xf32>
    %38 = vector.broadcast %37 : vector<256x1xf32> to vector<256x256xf32>
    %39 = vector.broadcast %cst_16 : f32 to vector<256x256xf32>
    %40 = arith.select %33, %38, %39 : vector<256x256xi1>, vector<256x256xf32>
    %41 = arith.addf %7, %40 : vector<256x256xf32>
    %42 = vector.broadcast %5 : vector<1x256xf32> to vector<256x256xf32>
    %43 = vector.broadcast %30 : vector<256x1xf32> to vector<256x256xf32>
    %44 = arith.cmpf oeq, %42, %43 : vector<256x256xf32>
    %45 = arith.mulf %26, %20 : vector<256x1xf32>
    %cst_17 = arith.constant 0.000000e+00 : f32
    %46 = vector.shape_cast %45 : vector<256x1xf32> to vector<256x1xf32>
    %47 = vector.broadcast %46 : vector<256x1xf32> to vector<256x256xf32>
    %48 = vector.broadcast %cst_17 : f32 to vector<256x256xf32>
    %49 = arith.select %44, %47, %48 : vector<256x256xi1>, vector<256x256xf32>
    %50 = arith.addf %41, %49 : vector<256x256xf32>
    %51 = arith.addf %9, %20 : vector<256x1xf32>
    %cst_18 = arith.constant 0.000000e+00 : f32
    %52 = vector.broadcast %cst_18 : f32 to vector<256x1xf32>
    %53 = arith.mulf %52, %3 : vector<256x1xf32>
    %54 = arith.addf %1, %53 : vector<256x1xf32>
    %cst_19 = arith.constant -5.000000e-01 : f32
    %55 = vector.broadcast %cst_19 : f32 to vector<256x1xf32>
    %56 = arith.cmpf oge, %54, %55 : vector<256x1xf32>
    %cst_20 = arith.constant 1.550000e+01 : f32
    %57 = vector.broadcast %cst_20 : f32 to vector<256x1xf32>
    %58 = arith.cmpf ole, %54, %57 : vector<256x1xf32>
    %59 = arith.andi %56, %58 : vector<256x1xi1>
    %60 = arith.extui %59 : vector<256x1xi1> to vector<256x1xi32>
    %61 = arith.sitofp %60 : vector<256x1xi32> to vector<256x1xf32>
    %cst_21 = arith.constant 0.000000e+00 : f32
    %cst_22 = arith.constant 1.500000e+01 : f32
    %62 = vector.broadcast %cst_21 : f32 to vector<256x1xf32>
    %63 = arith.maximumf %62, %54 : vector<256x1xf32>
    %64 = vector.broadcast %cst_22 : f32 to vector<256x1xf32>
    %65 = arith.minimumf %64, %63 : vector<256x1xf32>
    %66 = math.floor %65 : vector<256x1xf32>
    %67 = arith.subf %65, %66 : vector<256x1xf32>
    %cst_23 = arith.constant 1.000000e+00 : f32
    %68 = vector.broadcast %cst_23 : f32 to vector<256x1xf32>
    %69 = arith.addf %66, %68 : vector<256x1xf32>
    %cst_24 = arith.constant 1.500000e+01 : f32
    %70 = vector.broadcast %cst_24 : f32 to vector<256x1xf32>
    %71 = arith.minimumf %69, %70 : vector<256x1xf32>
    %72 = vector.broadcast %6 : vector<1x256xf32> to vector<256x256xf32>
    %73 = vector.broadcast %66 : vector<256x1xf32> to vector<256x256xf32>
    %74 = arith.cmpf oeq, %72, %73 : vector<256x256xf32>
    %cst_25 = arith.constant 1.000000e+00 : f32
    %75 = vector.broadcast %cst_25 : f32 to vector<256x1xf32>
    %76 = arith.subf %75, %67 : vector<256x1xf32>
    %77 = arith.mulf %76, %61 : vector<256x1xf32>
    %cst_26 = arith.constant 0.000000e+00 : f32
    %78 = vector.shape_cast %77 : vector<256x1xf32> to vector<256x1xf32>
    %79 = vector.broadcast %78 : vector<256x1xf32> to vector<256x256xf32>
    %80 = vector.broadcast %cst_26 : f32 to vector<256x256xf32>
    %81 = arith.select %74, %79, %80 : vector<256x256xi1>, vector<256x256xf32>
    %82 = arith.addf %8, %81 : vector<256x256xf32>
    %83 = vector.broadcast %6 : vector<1x256xf32> to vector<256x256xf32>
    %84 = vector.broadcast %71 : vector<256x1xf32> to vector<256x256xf32>
    %85 = arith.cmpf oeq, %83, %84 : vector<256x256xf32>
    %86 = arith.mulf %67, %61 : vector<256x1xf32>
    %cst_27 = arith.constant 0.000000e+00 : f32
    %87 = vector.shape_cast %86 : vector<256x1xf32> to vector<256x1xf32>
    %88 = vector.broadcast %87 : vector<256x1xf32> to vector<256x256xf32>
    %89 = vector.broadcast %cst_27 : f32 to vector<256x256xf32>
    %90 = arith.select %85, %88, %89 : vector<256x256xi1>, vector<256x256xf32>
    %91 = arith.addf %82, %90 : vector<256x256xf32>
    %92 = arith.addf %10, %61 : vector<256x1xf32>
    %cst_28 = arith.constant 1.000000e+00 : f32
    %93 = vector.broadcast %cst_28 : f32 to vector<256x1xf32>
    %94 = arith.mulf %93, %4 : vector<256x1xf32>
    %95 = arith.addf %2, %94 : vector<256x1xf32>
    %cst_29 = arith.constant -5.000000e-01 : f32
    %96 = vector.broadcast %cst_29 : f32 to vector<256x1xf32>
    %97 = arith.cmpf oge, %95, %96 : vector<256x1xf32>
    %cst_30 = arith.constant 1.550000e+01 : f32
    %98 = vector.broadcast %cst_30 : f32 to vector<256x1xf32>
    %99 = arith.cmpf ole, %95, %98 : vector<256x1xf32>
    %100 = arith.andi %97, %99 : vector<256x1xi1>
    %101 = arith.extui %100 : vector<256x1xi1> to vector<256x1xi32>
    %102 = arith.sitofp %101 : vector<256x1xi32> to vector<256x1xf32>
    %cst_31 = arith.constant 0.000000e+00 : f32
    %cst_32 = arith.constant 1.500000e+01 : f32
    %103 = vector.broadcast %cst_31 : f32 to vector<256x1xf32>
    %104 = arith.maximumf %103, %95 : vector<256x1xf32>
    %105 = vector.broadcast %cst_32 : f32 to vector<256x1xf32>
    %106 = arith.minimumf %105, %104 : vector<256x1xf32>
    %107 = math.floor %106 : vector<256x1xf32>
    %108 = arith.subf %106, %107 : vector<256x1xf32>
    %cst_33 = arith.constant 1.000000e+00 : f32
    %109 = vector.broadcast %cst_33 : f32 to vector<256x1xf32>
    %110 = arith.addf %107, %109 : vector<256x1xf32>
    %cst_34 = arith.constant 1.500000e+01 : f32
    %111 = vector.broadcast %cst_34 : f32 to vector<256x1xf32>
    %112 = arith.minimumf %110, %111 : vector<256x1xf32>
    %113 = vector.broadcast %5 : vector<1x256xf32> to vector<256x256xf32>
    %114 = vector.broadcast %107 : vector<256x1xf32> to vector<256x256xf32>
    %115 = arith.cmpf oeq, %113, %114 : vector<256x256xf32>
    %cst_35 = arith.constant 1.000000e+00 : f32
    %116 = vector.broadcast %cst_35 : f32 to vector<256x1xf32>
    %117 = arith.subf %116, %108 : vector<256x1xf32>
    %118 = arith.mulf %117, %102 : vector<256x1xf32>
    %cst_36 = arith.constant 0.000000e+00 : f32
    %119 = vector.shape_cast %118 : vector<256x1xf32> to vector<256x1xf32>
    %120 = vector.broadcast %119 : vector<256x1xf32> to vector<256x256xf32>
    %121 = vector.broadcast %cst_36 : f32 to vector<256x256xf32>
    %122 = arith.select %115, %120, %121 : vector<256x256xi1>, vector<256x256xf32>
    %123 = arith.addf %50, %122 : vector<256x256xf32>
    %124 = vector.broadcast %5 : vector<1x256xf32> to vector<256x256xf32>
    %125 = vector.broadcast %112 : vector<256x1xf32> to vector<256x256xf32>
    %126 = arith.cmpf oeq, %124, %125 : vector<256x256xf32>
    %127 = arith.mulf %108, %102 : vector<256x1xf32>
    %cst_37 = arith.constant 0.000000e+00 : f32
    %128 = vector.shape_cast %127 : vector<256x1xf32> to vector<256x1xf32>
    %129 = vector.broadcast %128 : vector<256x1xf32> to vector<256x256xf32>
    %130 = vector.broadcast %cst_37 : f32 to vector<256x256xf32>
    %131 = arith.select %126, %129, %130 : vector<256x256xi1>, vector<256x256xf32>
    %132 = arith.addf %123, %131 : vector<256x256xf32>
    %133 = arith.addf %51, %102 : vector<256x1xf32>
    %cst_38 = arith.constant 1.000000e+00 : f32
    %134 = vector.broadcast %cst_38 : f32 to vector<256x1xf32>
    %135 = arith.mulf %134, %3 : vector<256x1xf32>
    %136 = arith.addf %1, %135 : vector<256x1xf32>
    %cst_39 = arith.constant -5.000000e-01 : f32
    %137 = vector.broadcast %cst_39 : f32 to vector<256x1xf32>
    %138 = arith.cmpf oge, %136, %137 : vector<256x1xf32>
    %cst_40 = arith.constant 1.550000e+01 : f32
    %139 = vector.broadcast %cst_40 : f32 to vector<256x1xf32>
    %140 = arith.cmpf ole, %136, %139 : vector<256x1xf32>
    %141 = arith.andi %138, %140 : vector<256x1xi1>
    %142 = arith.extui %141 : vector<256x1xi1> to vector<256x1xi32>
    %143 = arith.sitofp %142 : vector<256x1xi32> to vector<256x1xf32>
    %cst_41 = arith.constant 0.000000e+00 : f32
    %cst_42 = arith.constant 1.500000e+01 : f32
    %144 = vector.broadcast %cst_41 : f32 to vector<256x1xf32>
    %145 = arith.maximumf %144, %136 : vector<256x1xf32>
    %146 = vector.broadcast %cst_42 : f32 to vector<256x1xf32>
    %147 = arith.minimumf %146, %145 : vector<256x1xf32>
    %148 = math.floor %147 : vector<256x1xf32>
    %149 = arith.subf %147, %148 : vector<256x1xf32>
    %cst_43 = arith.constant 1.000000e+00 : f32
    %150 = vector.broadcast %cst_43 : f32 to vector<256x1xf32>
    %151 = arith.addf %148, %150 : vector<256x1xf32>
    %cst_44 = arith.constant 1.500000e+01 : f32
    %152 = vector.broadcast %cst_44 : f32 to vector<256x1xf32>
    %153 = arith.minimumf %151, %152 : vector<256x1xf32>
    %154 = vector.broadcast %6 : vector<1x256xf32> to vector<256x256xf32>
    %155 = vector.broadcast %148 : vector<256x1xf32> to vector<256x256xf32>
    %156 = arith.cmpf oeq, %154, %155 : vector<256x256xf32>
    %cst_45 = arith.constant 1.000000e+00 : f32
    %157 = vector.broadcast %cst_45 : f32 to vector<256x1xf32>
    %158 = arith.subf %157, %149 : vector<256x1xf32>
    %159 = arith.mulf %158, %143 : vector<256x1xf32>
    %cst_46 = arith.constant 0.000000e+00 : f32
    %160 = vector.shape_cast %159 : vector<256x1xf32> to vector<256x1xf32>
    %161 = vector.broadcast %160 : vector<256x1xf32> to vector<256x256xf32>
    %162 = vector.broadcast %cst_46 : f32 to vector<256x256xf32>
    %163 = arith.select %156, %161, %162 : vector<256x256xi1>, vector<256x256xf32>
    %164 = arith.addf %91, %163 : vector<256x256xf32>
    %165 = vector.broadcast %6 : vector<1x256xf32> to vector<256x256xf32>
    %166 = vector.broadcast %153 : vector<256x1xf32> to vector<256x256xf32>
    %167 = arith.cmpf oeq, %165, %166 : vector<256x256xf32>
    %168 = arith.mulf %149, %143 : vector<256x1xf32>
    %cst_47 = arith.constant 0.000000e+00 : f32
    %169 = vector.shape_cast %168 : vector<256x1xf32> to vector<256x1xf32>
    %170 = vector.broadcast %169 : vector<256x1xf32> to vector<256x256xf32>
    %171 = vector.broadcast %cst_47 : f32 to vector<256x256xf32>
    %172 = arith.select %167, %170, %171 : vector<256x256xi1>, vector<256x256xf32>
    %173 = arith.addf %164, %172 : vector<256x256xf32>
    %174 = arith.addf %92, %143 : vector<256x1xf32>
    %175 = arith.mulf %132, %173 : vector<256x256xf32>
    %176 = arith.mulf %133, %174 : vector<256x1xf32>
    %c0_48 = arith.constant 0 : index
    %c0_49 = arith.constant 0 : index
    %c0_50 = arith.constant 0 : index
    %177 = vector.load %arg5[%c0_48, %c0_49, %c0_50] : memref<1x256x128xf32, #tpu.memory_space<vmem>>, vector<1x256x128xf32>
    %178 = vector.shape_cast %177 : vector<1x256x128xf32> to vector<256x128xf32>
    %cst_51 = arith.constant dense<0.000000e+00> : vector<256x128xf32>
    %179 = tpu.matmul %175, %178, %cst_51 {dimension_numbers = #tpu.dot_dimension_numbers<[1], [0], [0], [1], [0, 0, 1, 1], [], []>} : vector<256x256xf32>, vector<256x128xf32>, vector<256x128xf32> -> vector<256x128xf32>
    %cst_52 = arith.constant 0.000000e+00 : f32
    %180 = vector.broadcast %cst_52 : f32 to vector<256x1xf32>
    %181 = arith.cmpf ogt, %176, %180 : vector<256x1xf32>
    %cst_53 = arith.constant 1.000000e+00 : f32
    %182 = vector.broadcast %cst_53 : f32 to vector<256x1xf32>
    %183 = arith.maximumf %176, %182 : vector<256x1xf32>
    %cst_54 = arith.constant 1.000000e+00 : f32
    %184 = vector.broadcast %cst_54 : f32 to vector<256x1xf32>
    %185 = arith.divf %184, %183 : vector<256x1xf32>
    %cst_55 = arith.constant 0.000000e+00 : f32
    %186 = vector.broadcast %cst_55 : f32 to vector<256x1xf32>
    %187 = arith.select %181, %185, %186 : vector<256x1xi1>, vector<256x1xf32>
    %188 = vector.broadcast %187 : vector<256x1xf32> to vector<256x128xf32>
    %189 = arith.mulf %179, %188 : vector<256x128xf32>
    %190 = vector.shape_cast %189 : vector<256x128xf32> to vector<1x256x128xf32>
    %c0_56 = arith.constant 0 : index
    %c0_57 = arith.constant 0 : index
    %c0_58 = arith.constant 0 : index
    %191 = vector.load %arg6[%c0_56, %c0_57, %c0_58] : memref<1x256x128xf32, #tpu.memory_space<vmem>>, vector<1x256x128xf32>
    tpu.vector_store %arg6[%c0_56, %c0_57, %c0_58], %190 {strides = array<i32>} : memref<1x256x128xf32, #tpu.memory_space<vmem>>, vector<1x256x128xf32>,
    return
  }
  func.func @transform_0(%arg0: i32, %arg1: memref<2xi32, #tpu.memory_space<smem>>) -> (i32, i32) {
    %c0_i32 = arith.constant 0 : i32
    %c0_i32_0 = arith.constant 0 : i32
    return %arg0, %c0_i32 : i32, i32
  }
  func.func @transform_1(%arg0: i32, %arg1: memref<2xi32, #tpu.memory_space<smem>>) -> (i32, i32) {
    %c0_i32 = arith.constant 0 : i32
    %c0_i32_0 = arith.constant 0 : i32
    %c0_i32_1 = arith.constant 0 : i32
    return %c0_i32, %c0_i32_0 : i32, i32
  }
  func.func @transform_2(%arg0: i32, %arg1: memref<2xi32, #tpu.memory_space<smem>>) -> (i32, i32) {
    %c0_i32 = arith.constant 0 : i32
    %c0_i32_0 = arith.constant 0 : i32
    %c0_i32_1 = arith.constant 0 : i32
    return %c0_i32, %c0_i32_0 : i32, i32
  }
  func.func @transform_3(%arg0: i32, %arg1: memref<2xi32, #tpu.memory_space<smem>>) -> (i32, i32, i32) {
    %0 = arith.index_cast %arg0 : i32 to index
    %1 = memref.load %arg1[%0] : memref<2xi32, #tpu.memory_space<smem>>
    %c0_i32 = arith.constant 0 : i32
    %c0_i32_0 = arith.constant 0 : i32
    %c0_i32_1 = arith.constant 0 : i32
    return %1, %c0_i32, %c0_i32_0 : i32, i32, i32
  }
  func.func @transform_4(%arg0: i32, %arg1: memref<2xi32, #tpu.memory_space<smem>>) -> (i32, i32, i32) {
    %c0_i32 = arith.constant 0 : i32
    %c0_i32_0 = arith.constant 0 : i32
    %c0_i32_1 = arith.constant 0 : i32
    return %arg0, %c0_i32, %c0_i32_0 : i32, i32, i32
  }
}

</mosaic_0001>

<llo_original>
// kernel: tpu_custom_call.1
$region0: #{tpu_custom_call.1}
  #allocation0 [shape = 'u32[]', space=smem, size = 0x4, offset = 0x4, fixed_abs, tag = 'smem constant byte address 0x4 - core index']
  #allocation1 [shape = 'u32[144,128]{1,0:T(1,128)}', space=vmem, size = 0x12000, scoped, tag = 'internal scratch']
  #allocation2 [shape = 's32[1]{0}', space=sflag, size = 0x4, scoped, tag = 'scoped memory for tpu_custom_call.1']
  #allocation3 [shape = 'u8[512]{0}', space=smem, size = 0x200, scoped, tag = 'prefetched SMEM operand 0']
  %s0 = inlined_call_operand.vmem [shape: s32[2], index: 0, kind: input, shape index: {}]
  %s1 = inlined_call_operand.vmem [shape: f32[512,4], index: 1, kind: input, shape index: {}]
  %s2 = inlined_call_operand.vmem [shape: f32[1,256], index: 2, kind: input, shape index: {}]
  %s3 = inlined_call_operand.vmem [shape: f32[1,256], index: 3, kind: input, shape index: {}]
  %s4 = inlined_call_operand.vmem [shape: f32[2,256,128], index: 4, kind: input, shape index: {}]
  %s5 = inlined_call_operand.hbm [shape: f32[2,256,128], index: 5, kind: output, shape index: {}]
  %s6 = sld [smem:[#allocation0]]
  $region49: #{tpu_custom_call.1} parent=0
    _
  %s8 = ssub.s32 1, %s6
  %s9 = scalar_select 0, %s8, %s6
  %s10 = sshll.u32 %s0, 4
  %s11 = int_to_ptr.vmem [resolvable:$true] %s10
  %13 = dma.vmem_to_smem %s11, 16, [#allocation3], [#allocation2]
  %14 = dma.done [#allocation2], 16
  %15 = sfence
  $region1: #{tpu_custom_call.1} parent=0
    #allocation4 [shape = 'u8[262144]{0}', space=vmem, size = 0x40000, scoped, tag = 'output window, operand 0']
    #allocation5 [shape = 's32[2]{0}', space=sflag, size = 0x8, scoped, tag = 'scoped memory for tpu_custom_call.1']
    %16 = vsyncpa [#allocation5], 0
    %s17 = scalar_lea.sflag [#allocation5], 1
    %18 = vsyncpa %s17, 0
    loop: start=0, step=1, limit=4
    $region2: #{tpu_custom_call.1} parent=1 // loop_pre_header
      _
    $region3: #{tpu_custom_call.1} parent=1 // loop_header
      %s20 = sphi 0, %s24
      %p21 = scmp.ge.s32.totalorder %s20, 4
      %s30 = sphi 0, %s32
      %s33 = sphi 0, %s30
      %s34 = sphi 0, %s33
      %s50 = sphi 0, %s34
      %s54 = sphi 0, %s54
      %s56 = sphi 0, %s54
      %s57 = sphi 0, %s56
      %s71 = sphi 0, %s57
      %s75 = sphi 0, %s75
      %s77 = sphi 0, %s75
      %s78 = sphi 0, %s77
      %s92 = sphi 0, %s78
      %s100 = sphi 0, %s102
      %s103 = sphi 0, %s100
      %s104 = sphi 0, %s103
      %s120 = sphi 0, %s104
      %s126 = sphi 0, %s128
      %s129 = sphi 0, %s126
      %s130 = sphi 0, %s129
      %s146 = sphi 0, %s130
    $region4: #{tpu_custom_call.1} parent=1 // loop_header_branch
      %23 = sbr.rel (%p21) target = $region8
    $region5: #{tpu_custom_call.1} parent=1 // loop_body
      %s25 = ssub.s32 %s20, 1
      %s26 = ssub.s32 %s20, 2
      %s27 = sadd.s32 %s20, 1
      %s28 = ssub.s32 %s20, %s27
      %p29 = scmp.eq.s32.totalorder %s28, 0
      %s31 = sadd.s32 %s30, 1
      %s32 = scalar_select %p29, %s30, %s31
      %p35 = pneg %p29
      %p36 = scmp.eq.s32.totalorder %s20, 1
      %p37 = por %p35, %p36
      %p38 = scmp.ne.s32.totalorder %s30, %s33
      %p39 = scmp.eq.s32.totalorder %s20, 0
      %p40 = por %p38, %p39
      %p41 = scmp.ne.s32.totalorder %s30, %s33
      %p42 = scmp.eq.s32.totalorder %s25, 1
      %p43 = por %p41, %p42
      %p44 = scmp.ne.s32.totalorder %s33, %s34
      %p45 = scmp.eq.s32.totalorder %s25, 0
      %p46 = por %p44, %p45
      %p47 = scmp.ne.s32.totalorder %s33, %s34
      %p48 = scmp.eq.s32.totalorder %s26, 1
      %p49 = por %p47, %p48
      %p51 = scmp.ne.s32.totalorder %s34, %s50
      %p52 = scmp.eq.s32.totalorder %s26, 0
      %p53 = por %p51, %p52
      %s55 = sadd.s32 %s54, 1
      %p58 = scmp.eq.s32.totalorder %s20, 1
      %p59 = scmp.ne.s32.totalorder %s54, %s56
      %p60 = scmp.eq.s32.totalorder %s20, 0
      %p61 = por %p59, %p60
      %p62 = scmp.ne.s32.totalorder %s54, %s56
      %p63 = scmp.eq.s32.totalorder %s25, 1
      %p64 = por %p62, %p63
      %p65 = scmp.ne.s32.totalorder %s56, %s57
      %p66 = scmp.eq.s32.totalorder %s25, 0
      %p67 = por %p65, %p66
      %p68 = scmp.ne.s32.totalorder %s56, %s57
      %p69 = scmp.eq.s32.totalorder %s26, 1
      %p70 = por %p68, %p69
      %p72 = scmp.ne.s32.totalorder %s57, %s71
      %p73 = scmp.eq.s32.totalorder %s26, 0
      %p74 = por %p72, %p73
      %s76 = sadd.s32 %s75, 1
      %p79 = scmp.eq.s32.totalorder %s20, 1
      %p80 = scmp.ne.s32.totalorder %s75, %s77
      %p81 = scmp.eq.s32.totalorder %s20, 0
      %p82 = por %p80, %p81
      %p83 = scmp.ne.s32.totalorder %s75, %s77
      %p84 = scmp.eq.s32.totalorder %s25, 1
      %p85 = por %p83, %p84
      %p86 = scmp.ne.s32.totalorder %s77, %s78
      %p87 = scmp.eq.s32.totalorder %s25, 0
      %p88 = por %p86, %p87
      %p89 = scmp.ne.s32.totalorder %s77, %s78
      %p90 = scmp.eq.s32.totalorder %s26, 1
      %p91 = por %p89, %p90
      %p93 = scmp.ne.s32.totalorder %s78, %s92
      %p94 = scmp.eq.s32.totalorder %s26, 0
      %p95 = por %p93, %p94
      %s96 = sld [smem:[#allocation3 + %s20]]
      %s97 = sld [smem:[#allocation3 + %s27]]
      %s98 = ssub.s32 %s96, %s97
      %p99 = scmp.eq.s32.totalorder %s98, 0
      %s101 = sadd.s32 %s100, 1
      %s102 = scalar_select %p99, %s100, %s101
      %p105 = pneg %p99
      %p106 = scmp.eq.s32.totalorder %s20, 1
      %p107 = por %p105, %p106
      %p108 = scmp.ne.s32.totalorder %s100, %s103
      %p109 = scmp.eq.s32.totalorder %s20, 0
      %p110 = por %p108, %p109
      %p111 = scmp.ne.s32.totalorder %s100, %s103
      %p112 = scmp.eq.s32.totalorder %s25, 1
      %p113 = por %p111, %p112
      %p114 = scmp.ne.s32.totalorder %s103, %s104
      %p115 = scmp.eq.s32.totalorder %s25, 0
      %p116 = por %p114, %p115
      %p117 = scmp.ne.s32.totalorder %s103, %s104
      %p118 = scmp.eq.s32.totalorder %s26, 1
      %p119 = por %p117, %p118
      %p121 = scmp.ne.s32.totalorder %s104, %s120
      %p122 = scmp.eq.s32.totalorder %s26, 0
      %p123 = por %p121, %p122
      %s124 = ssub.s32 %s20, %s27
      %p125 = scmp.eq.s32.totalorder %s124, 0
      %s127 = sadd.s32 %s126, 1
      %s128 = scalar_select %p125, %s126, %s127
      %p131 = pneg %p125
      %p132 = scmp.eq.s32.totalorder %s20, 1
      %p133 = por %p131, %p132
      %p134 = scmp.ne.s32.totalorder %s126, %s129
      %p135 = scmp.eq.s32.totalorder %s20, 0
      %p136 = por %p134, %p135
      %p137 = scmp.ne.s32.totalorder %s126, %s129
      %p138 = scmp.eq.s32.totalorder %s25, 1
      %p139 = por %p137, %p138
      %p140 = scmp.ne.s32.totalorder %s129, %s130
      %p141 = scmp.eq.s32.totalorder %s25, 0
      %p142 = por %p140, %p141
      %p143 = scmp.ne.s32.totalorder %s129, %s130
      %p144 = scmp.eq.s32.totalorder %s26, 1
      %p145 = por %p143, %p144
      %p147 = scmp.ne.s32.totalorder %s130, %s146
      %p148 = scmp.eq.s32.totalorder %s26, 0
      %p149 = por %p147, %p148
      %p150 = scmp.le.s32.totalorder 1, %s20
      %p151 = scmp.lt.s32.totalorder %s20, 3
      %p152 = pnand %p150, %p151
      %p153 = pneg %p152
      // Predicated region
      $region9: #{tpu_custom_call.1} parent=5 // pred_check
        _
      $region10: #{tpu_custom_call.1} parent=5 // pred_check_branch
        %155 = sbr.rel (%p152) target = $region12
      $region11: #{tpu_custom_call.1} parent=5 // pred_region
        %s156 = ssub.s32 %s20, 1
        // Predicated region
        $region13: #{tpu_custom_call.1} parent=11 // pred_check
          %p157 = pneg %p67
        $region14: #{tpu_custom_call.1} parent=11 // pred_check_branch
          %159 = sbr.rel (%p157) target = $region16
        $region15: #{tpu_custom_call.1} parent=11 // pred_region
          _
        $region16: #{tpu_custom_call.1} parent=11 // pred_fallthru
          _
        // Predicated region
        $region17: #{tpu_custom_call.1} parent=11 // pred_check
          %p160 = pneg %p88
        $region18: #{tpu_custom_call.1} parent=11 // pred_check_branch
          %162 = sbr.rel (%p160) target = $region20
        $region19: #{tpu_custom_call.1} parent=11 // pred_region
          _
        $region20: #{tpu_custom_call.1} parent=11 // pred_fallthru
          _
      $region12: #{tpu_custom_call.1} parent=5 // pred_fallthru
        _
      %p163 = scmp.lt.s32.totalorder %s20, 2
      // Predicated region
      $region21: #{tpu_custom_call.1} parent=5 // pred_check
        %p164 = pneg %p163
      $region22: #{tpu_custom_call.1} parent=5 // pred_check_branch
        %166 = sbr.rel (%p164) target = $region24
      $region23: #{tpu_custom_call.1} parent=5 // pred_region
        // Predicated region
        $region25: #{tpu_custom_call.1} parent=23 // pred_check
          %p167 = pneg %p40
        $region26: #{tpu_custom_call.1} parent=23 // pred_check_branch
          %169 = sbr.rel (%p167) target = $region28
        $region27: #{tpu_custom_call.1} parent=23 // pred_region
          %s170 = smul.u32 32, %s20
          %p171 = scmp.lt.s32.totalorder %s170, 63
          %s172 = scalar_select %p171, %s170, 63
          %s173 = smul.addr %s172, 8
          %s174 = scalar_lea.vmem %s1, %s173
          %s175 = smul.u32 32, %s20
        $region28: #{tpu_custom_call.1} parent=23 // pred_fallthru
          _
        // Predicated region
        $region29: #{tpu_custom_call.1} parent=23 // pred_check
          %p176 = pneg %p110
        $region30: #{tpu_custom_call.1} parent=23 // pred_check_branch
          %178 = sbr.rel (%p176) target = $region32
        $region31: #{tpu_custom_call.1} parent=23 // pred_region
          %s179 = sld [smem:[#allocation3 + %s20]]
          %p180 = scmp.lt.s32.totalorder %s179, 1
          %s181 = scalar_select %p180, %s179, 1
          %s182 = smul.addr %s181, 32
          %s183 = smul.addr %s182, 8
          %s184 = scalar_lea.vmem %s4, %s183
          %s185 = sld [smem:[#allocation3 + %s20]]
        $region32: #{tpu_custom_call.1} parent=23 // pred_fallthru
          _
      $region24: #{tpu_custom_call.1} parent=5 // pred_fallthru
        _
      %p186 = scmp.le.s32.totalorder 1, %s20
      %p187 = scmp.lt.s32.totalorder %s20, 3
      %p188 = pnand %p186, %p187
      %p189 = pneg %p188
      // Predicated region
      $region33: #{tpu_custom_call.1} parent=5 // pred_check
        _
      $region34: #{tpu_custom_call.1} parent=5 // pred_check_branch
        %191 = sbr.rel (%p188) target = $region36
      $region35: #{tpu_custom_call.1} parent=5 // pred_region
        %s192 = ssub.s32 %s20, 1
        %s193 = smul.u32 32, %s25
        %p194 = scmp.lt.s32.totalorder %s193, 63
        %s195 = scalar_select %p194, %s193, 63
        %s196 = smul.addr %s195, 8
        %s197 = scalar_lea.vmem %s1, %s196
        %p198 = pneg %p46
        %p199 = pneg %p43
        %p200 = pneg %p67
        %p201 = pneg %p64
        %p202 = pneg %p88
        %p203 = pneg %p85
        %s204 = sld [smem:[#allocation3 + %s25]]
        %p205 = scmp.lt.s32.totalorder %s204, 1
        %s206 = scalar_select %p205, %s204, 1
        %s207 = smul.addr %s206, 32
        %s208 = smul.addr %s207, 8
        %s209 = scalar_lea.vmem %s4, %s208
        %p210 = pneg %p116
        %p211 = pneg %p113
        %p212 = pneg %p142
        %p213 = pneg %p139
        %s214 = sand.u32 %s129, 1
        %s215 = scalar_lea.sflag [#allocation5], %s214
        %s216 = sand.u32 %s129, 1
        %s217 = smul.addr %s216, 256
        %s218 = scalar_lea.vmem [#allocation4], %s217
        %s219 = smul.u32 32, %s25
        %p220 = scmp.lt.s32.totalorder %s219, 63
        %s221 = scalar_select %p220, %s219, 63
        %s222 = smul.addr %s221, 8
        %s223 = scalar_lea.vmem %s1, %s222
        %s224 = smul.u32 32, %s25
        %s225 = sld [smem:[#allocation3 + %s25]]
        %p226 = scmp.lt.s32.totalorder %s225, 1
        %s227 = scalar_select %p226, %s225, 1
        %s228 = smul.addr %s227, 32
        %s229 = smul.addr %s228, 8
        %s230 = scalar_lea.vmem %s4, %s229
        %s231 = sld [smem:[#allocation3 + %s25]]
        %v232 = vld [vmem:[%s223] sm:$0xff]
        %v233 = vld [vmem:[%s223 + $0x8] sm:$0xff]
        %v234 = vld [vmem:[%s223 + $0x10] sm:$0xff]
        %v235 = vld [vmem:[%s223 + $0x18] sm:$0xff]
        %v236 = vld [vmem:[%s223 + $0x20] sm:$0xff]
        %v237 = vld [vmem:[%s223 + $0x28] sm:$0xff]
        %v238 = vld [vmem:[%s223 + $0x30] sm:$0xff]
        %v239 = vld [vmem:[%s223 + $0x38] sm:$0xff]
        %v240 = vld [vmem:[%s223 + $0x40] sm:$0xff]
        %v241 = vld [vmem:[%s223 + $0x48] sm:$0xff]
        %v242 = vld [vmem:[%s223 + $0x50] sm:$0xff]
        %v243 = vld [vmem:[%s223 + $0x58] sm:$0xff]
        %v244 = vld [vmem:[%s223 + $0x60] sm:$0xff]
        %v245 = vld [vmem:[%s223 + $0x68] sm:$0xff]
        %v246 = vld [vmem:[%s223 + $0x70] sm:$0xff]
        %v247 = vld [vmem:[%s223 + $0x78] sm:$0xff]
        %v248 = vld [vmem:[%s223 + $0x80] sm:$0xff]
        %v249 = vld [vmem:[%s223 + $0x88] sm:$0xff]
        %v250 = vld [vmem:[%s223 + $0x90] sm:$0xff]
        %v251 = vld [vmem:[%s223 + $0x98] sm:$0xff]
        %v252 = vld [vmem:[%s223 + $0xa0] sm:$0xff]
        %v253 = vld [vmem:[%s223 + $0xa8] sm:$0xff]
        %v254 = vld [vmem:[%s223 + $0xb0] sm:$0xff]
        %v255 = vld [vmem:[%s223 + $0xb8] sm:$0xff]
        %v256 = vld [vmem:[%s223 + $0xc0] sm:$0xff]
        %v257 = vld [vmem:[%s223 + $0xc8] sm:$0xff]
        %v258 = vld [vmem:[%s223 + $0xd0] sm:$0xff]
        %v259 = vld [vmem:[%s223 + $0xd8] sm:$0xff]
        %v260 = vld [vmem:[%s223 + $0xe0] sm:$0xff]
        %v261 = vld [vmem:[%s223 + $0xe8] sm:$0xff]
        %v262 = vld [vmem:[%s223 + $0xf0] sm:$0xff]
        %v263 = vld [vmem:[%s223 + $0xf8] sm:$0xff]
        %v264 = vld [vmem:[%s2] sm:$0x3]
        %v265 = vld [vmem:[%s3] sm:$0x3]
        %v266 = vmul.f32 %v232, 0.0
        %v267 = vmul.f32 %v233, 0.0
        %v268 = vmul.f32 %v234, 0.0
        %v269 = vmul.f32 %v235, 0.0
        %v270 = vmul.f32 %v236, 0.0
        %v271 = vmul.f32 %v237, 0.0
        %v272 = vmul.f32 %v238, 0.0
        %v273 = vmul.f32 %v239, 0.0
        %v274 = vmul.f32 %v240, 0.0
        %v275 = vmul.f32 %v241, 0.0
        %v276 = vmul.f32 %v242, 0.0
        %v277 = vmul.f32 %v243, 0.0
        %v278 = vmul.f32 %v244, 0.0
        %v279 = vmul.f32 %v245, 0.0
        %v280 = vmul.f32 %v246, 0.0
        %v281 = vmul.f32 %v247, 0.0
        %v282 = vmul.f32 %v248, 0.0
        %v283 = vmul.f32 %v249, 0.0
        %v284 = vmul.f32 %v250, 0.0
        %v285 = vmul.f32 %v251, 0.0
        %v286 = vmul.f32 %v252, 0.0
        %v287 = vmul.f32 %v253, 0.0
        %v288 = vmul.f32 %v254, 0.0
        %v289 = vmul.f32 %v255, 0.0
        %v290 = vmul.f32 %v256, 0.0
        %v291 = vmul.f32 %v257, 0.0
        %v292 = vmul.f32 %v258, 0.0
        %v293 = vmul.f32 %v259, 0.0
        %v294 = vmul.f32 %v260, 0.0
        %v295 = vmul.f32 %v261, 0.0
        %v296 = vmul.f32 %v262, 0.0
        %v297 = vmul.f32 %v263, 0.0
        %330 = vrot.lane.b32.xlu0 %v266, 126
        %v331 = vpop.permute.xlu0 %330
        %332 = vrot.lane.b32.xlu0 %v267, 126
        %v333 = vpop.permute.xlu0 %332
        %334 = vrot.lane.b32.xlu0 %v268, 126
        %v335 = vpop.permute.xlu0 %334
        %336 = vrot.lane.b32.xlu0 %v269, 126
        %v337 = vpop.permute.xlu0 %336
        %338 = vrot.lane.b32.xlu0 %v270, 126
        %v339 = vpop.permute.xlu0 %338
        %340 = vrot.lane.b32.xlu0 %v271, 126
        %v341 = vpop.permute.xlu0 %340
        %342 = vrot.lane.b32.xlu0 %v272, 126
        %v343 = vpop.permute.xlu0 %342
        %344 = vrot.lane.b32.xlu0 %v273, 126
        %v345 = vpop.permute.xlu0 %344
        %346 = vrot.lane.b32.xlu0 %v274, 126
        %v347 = vpop.permute.xlu0 %346
        %348 = vrot.lane.b32.xlu0 %v275, 126
        %v349 = vpop.permute.xlu0 %348
        %350 = vrot.lane.b32.xlu0 %v276, 126
        %v351 = vpop.permute.xlu0 %350
        %352 = vrot.lane.b32.xlu0 %v277, 126
        %v353 = vpop.permute.xlu0 %352
        %354 = vrot.lane.b32.xlu0 %v278, 126
        %v355 = vpop.permute.xlu0 %354
        %356 = vrot.lane.b32.xlu0 %v279, 126
        %v357 = vpop.permute.xlu0 %356
        %358 = vrot.lane.b32.xlu0 %v280, 126
        %v359 = vpop.permute.xlu0 %358
        %360 = vrot.lane.b32.xlu0 %v281, 126
        %v361 = vpop.permute.xlu0 %360
        %362 = vrot.lane.b32.xlu0 %v282, 126
        %v363 = vpop.permute.xlu0 %362
        %364 = vrot.lane.b32.xlu0 %v283, 126
        %v365 = vpop.permute.xlu0 %364
        %366 = vrot.lane.b32.xlu0 %v284, 126
        %v367 = vpop.permute.xlu0 %366
        %368 = vrot.lane.b32.xlu0 %v285, 126
        %v369 = vpop.permute.xlu0 %368
        %370 = vrot.lane.b32.xlu0 %v286, 126
        %v371 = vpop.permute.xlu0 %370
        %372 = vrot.lane.b32.xlu0 %v287, 126
        %v373 = vpop.permute.xlu0 %372
        %374 = vrot.lane.b32.xlu0 %v288, 126
        %v375 = vpop.permute.xlu0 %374
        %376 = vrot.lane.b32.xlu0 %v289, 126
        %v377 = vpop.permute.xlu0 %376
        %378 = vrot.lane.b32.xlu0 %v290, 126
        %v379 = vpop.permute.xlu0 %378
        %380 = vrot.lane.b32.xlu0 %v291, 126
        %v381 = vpop.permute.xlu0 %380
        %382 = vrot.lane.b32.xlu0 %v292, 126
        %v383 = vpop.permute.xlu0 %382
        %384 = vrot.lane.b32.xlu0 %v293, 126
        %v385 = vpop.permute.xlu0 %384
        %386 = vrot.lane.b32.xlu0 %v294, 126
        %v387 = vpop.permute.xlu0 %386
        %388 = vrot.lane.b32.xlu0 %v295, 126
        %v389 = vpop.permute.xlu0 %388
        %390 = vrot.lane.b32.xlu0 %v296, 126
        %v391 = vpop.permute.xlu0 %390
        %392 = vrot.lane.b32.xlu0 %v297, 126
        %v393 = vpop.permute.xlu0 %392
        %v426 = vadd.f32 %v232, %v331
        %v427 = vadd.f32 %v233, %v333
        %v428 = vadd.f32 %v234, %v335
        %v429 = vadd.f32 %v235, %v337
        %v430 = vadd.f32 %v236, %v339
        %v431 = vadd.f32 %v237, %v341
        %v432 = vadd.f32 %v238, %v343
        %v433 = vadd.f32 %v239, %v345
        %v434 = vadd.f32 %v240, %v347
        %v435 = vadd.f32 %v241, %v349
        %v436 = vadd.f32 %v242, %v351
        %v437 = vadd.f32 %v243, %v353
        %v438 = vadd.f32 %v244, %v355
        %v439 = vadd.f32 %v245, %v357
        %v440 = vadd.f32 %v246, %v359
        %v441 = vadd.f32 %v247, %v361
        %v442 = vadd.f32 %v248, %v363
        %v443 = vadd.f32 %v249, %v365
        %v444 = vadd.f32 %v250, %v367
        %v445 = vadd.f32 %v251, %v369
        %v446 = vadd.f32 %v252, %v371
        %v447 = vadd.f32 %v253, %v373
        %v448 = vadd.f32 %v254, %v375
        %v449 = vadd.f32 %v255, %v377
        %v450 = vadd.f32 %v256, %v379
        %v451 = vadd.f32 %v257, %v381
        %v452 = vadd.f32 %v258, %v383
        %v453 = vadd.f32 %v259, %v385
        %v454 = vadd.f32 %v260, %v387
        %v455 = vadd.f32 %v261, %v389
        %v456 = vadd.f32 %v262, %v391
        %v457 = vadd.f32 %v263, %v393
        %vm458 = vcmp.ge.f32.partialorder %v426, -0.5
        %vm459 = vcmp.ge.f32.partialorder %v427, -0.5
        %vm460 = vcmp.ge.f32.partialorder %v428, -0.5
        %vm461 = vcmp.ge.f32.partialorder %v429, -0.5
        %vm462 = vcmp.ge.f32.partialorder %v430, -0.5
        %vm463 = vcmp.ge.f32.partialorder %v431, -0.5
        %vm464 = vcmp.ge.f32.partialorder %v432, -0.5
        %vm465 = vcmp.ge.f32.partialorder %v433, -0.5
        %vm466 = vcmp.ge.f32.partialorder %v434, -0.5
        %vm467 = vcmp.ge.f32.partialorder %v435, -0.5
        %vm468 = vcmp.ge.f32.partialorder %v436, -0.5
        %vm469 = vcmp.ge.f32.partialorder %v437, -0.5
        %vm470 = vcmp.ge.f32.partialorder %v438, -0.5
        %vm471 = vcmp.ge.f32.partialorder %v439, -0.5
        %vm472 = vcmp.ge.f32.partialorder %v440, -0.5
        %vm473 = vcmp.ge.f32.partialorder %v441, -0.5
        %vm474 = vcmp.ge.f32.partialorder %v442, -0.5
        %vm475 = vcmp.ge.f32.partialorder %v443, -0.5
        %vm476 = vcmp.ge.f32.partialorder %v444, -0.5
        %vm477 = vcmp.ge.f32.partialorder %v445, -0.5
        %vm478 = vcmp.ge.f32.partialorder %v446, -0.5
        %vm479 = vcmp.ge.f32.partialorder %v447, -0.5
        %vm480 = vcmp.ge.f32.partialorder %v448, -0.5
        %vm481 = vcmp.ge.f32.partialorder %v449, -0.5
        %vm482 = vcmp.ge.f32.partialorder %v450, -0.5
        %vm483 = vcmp.ge.f32.partialorder %v451, -0.5
        %vm484 = vcmp.ge.f32.partialorder %v452, -0.5
        %vm485 = vcmp.ge.f32.partialorder %v453, -0.5
        %vm486 = vcmp.ge.f32.partialorder %v454, -0.5
        %vm487 = vcmp.ge.f32.partialorder %v455, -0.5
        %vm488 = vcmp.ge.f32.partialorder %v456, -0.5
        %vm489 = vcmp.ge.f32.partialorder %v457, -0.5
        %vm490 = vcmp.le.f32.partialorder %v426, 15.5
        %vm491 = vcmp.le.f32.partialorder %v427, 15.5
        %vm492 = vcmp.le.f32.partialorder %v428, 15.5
        %vm493 = vcmp.le.f32.partialorder %v429, 15.5
        %vm494 = vcmp.le.f32.partialorder %v430, 15.5
        %vm495 = vcmp.le.f32.partialorder %v431, 15.5
        %vm496 = vcmp.le.f32.partialorder %v432, 15.5
        %vm497 = vcmp.le.f32.partialorder %v433, 15.5
        %vm498 = vcmp.le.f32.partialorder %v434, 15.5
        %vm499 = vcmp.le.f32.partialorder %v435, 15.5
        %vm500 = vcmp.le.f32.partialorder %v436, 15.5
        %vm501 = vcmp.le.f32.partialorder %v437, 15.5
        %vm502 = vcmp.le.f32.partialorder %v438, 15.5
        %vm503 = vcmp.le.f32.partialorder %v439, 15.5
        %vm504 = vcmp.le.f32.partialorder %v440, 15.5
        %vm505 = vcmp.le.f32.partialorder %v441, 15.5
        %vm506 = vcmp.le.f32.partialorder %v442, 15.5
        %vm507 = vcmp.le.f32.partialorder %v443, 15.5
        %vm508 = vcmp.le.f32.partialorder %v444, 15.5
        %vm509 = vcmp.le.f32.partialorder %v445, 15.5
        %vm510 = vcmp.le.f32.partialorder %v446, 15.5
        %vm511 = vcmp.le.f32.partialorder %v447, 15.5
        %vm512 = vcmp.le.f32.partialorder %v448, 15.5
        %vm513 = vcmp.le.f32.partialorder %v449, 15.5
        %vm514 = vcmp.le.f32.partialorder %v450, 15.5
        %vm515 = vcmp.le.f32.partialorder %v451, 15.5
        %vm516 = vcmp.le.f32.partialorder %v452, 15.5
        %vm517 = vcmp.le.f32.partialorder %v453, 15.5
        %vm518 = vcmp.le.f32.partialorder %v454, 15.5
        %vm519 = vcmp.le.f32.partialorder %v455, 15.5
        %vm520 = vcmp.le.f32.partialorder %v456, 15.5
        %vm521 = vcmp.le.f32.partialorder %v457, 15.5
        %vm522 = vmand %vm458, %vm490
        %vm523 = vmand %vm459, %vm491
        %vm524 = vmand %vm460, %vm492
        %vm525 = vmand %vm461, %vm493
        %vm526 = vmand %vm462, %vm494
        %vm527 = vmand %vm463, %vm495
        %vm528 = vmand %vm464, %vm496
        %vm529 = vmand %vm465, %vm497
        %vm530 = vmand %vm466, %vm498
        %vm531 = vmand %vm467, %vm499
        %vm532 = vmand %vm468, %vm500
        %vm533 = vmand %vm469, %vm501
        %vm534 = vmand %vm470, %vm502
        %vm535 = vmand %vm471, %vm503
        %vm536 = vmand %vm472, %vm504
        %vm537 = vmand %vm473, %vm505
        %vm538 = vmand %vm474, %vm506
        %vm539 = vmand %vm475, %vm507
        %vm540 = vmand %vm476, %vm508
        %vm541 = vmand %vm477, %vm509
        %vm542 = vmand %vm478, %vm510
        %vm543 = vmand %vm479, %vm511
        %vm544 = vmand %vm480, %vm512
        %vm545 = vmand %vm481, %vm513
        %vm546 = vmand %vm482, %vm514
        %vm547 = vmand %vm483, %vm515
        %vm548 = vmand %vm484, %vm516
        %vm549 = vmand %vm485, %vm517
        %vm550 = vmand %vm486, %vm518
        %vm551 = vmand %vm487, %vm519
        %vm552 = vmand %vm488, %vm520
        %vm553 = vmand %vm489, %vm521
        %v554 = vsel %vm522, 1, 0
        %v555 = vsel %vm523, 1, 0
        %v556 = vsel %vm524, 1, 0
        %v557 = vsel %vm525, 1, 0
        %v558 = vsel %vm526, 1, 0
        %v559 = vsel %vm527, 1, 0
        %v560 = vsel %vm528, 1, 0
        %v561 = vsel %vm529, 1, 0
        %v562 = vsel %vm530, 1, 0
        %v563 = vsel %vm531, 1, 0
        %v564 = vsel %vm532, 1, 0
        %v565 = vsel %vm533, 1, 0
        %v566 = vsel %vm534, 1, 0
        %v567 = vsel %vm535, 1, 0
        %v568 = vsel %vm536, 1, 0
        %v569 = vsel %vm537, 1, 0
        %v570 = vsel %vm538, 1, 0
        %v571 = vsel %vm539, 1, 0
        %v572 = vsel %vm540, 1, 0
        %v573 = vsel %vm541, 1, 0
        %v574 = vsel %vm542, 1, 0
        %v575 = vsel %vm543, 1, 0
        %v576 = vsel %vm544, 1, 0
        %v577 = vsel %vm545, 1, 0
        %v578 = vsel %vm546, 1, 0
        %v579 = vsel %vm547, 1, 0
        %v580 = vsel %vm548, 1, 0
        %v581 = vsel %vm549, 1, 0
        %v582 = vsel %vm550, 1, 0
        %v583 = vsel %vm551, 1, 0
        %v584 = vsel %vm552, 1, 0
        %v585 = vsel %vm553, 1, 0
        %v586 = vcvt.s32.f32 %v554
        %v587 = vcvt.s32.f32 %v555
        %v588 = vcvt.s32.f32 %v556
        %v589 = vcvt.s32.f32 %v557
        %v590 = vcvt.s32.f32 %v558
        %v591 = vcvt.s32.f32 %v559
        %v592 = vcvt.s32.f32 %v560
        %v593 = vcvt.s32.f32 %v561
        %v594 = vcvt.s32.f32 %v562
        %v595 = vcvt.s32.f32 %v563
        %v596 = vcvt.s32.f32 %v564
        %v597 = vcvt.s32.f32 %v565
        %v598 = vcvt.s32.f32 %v566
        %v599 = vcvt.s32.f32 %v567
        %v600 = vcvt.s32.f32 %v568
        %v601 = vcvt.s32.f32 %v569
        %v602 = vcvt.s32.f32 %v570
        %v603 = vcvt.s32.f32 %v571
        %v604 = vcvt.s32.f32 %v572
        %v605 = vcvt.s32.f32 %v573
        %v606 = vcvt.s32.f32 %v574
        %v607 = vcvt.s32.f32 %v575
        %v608 = vcvt.s32.f32 %v576
        %v609 = vcvt.s32.f32 %v577
        %v610 = vcvt.s32.f32 %v578
        %v611 = vcvt.s32.f32 %v579
        %v612 = vcvt.s32.f32 %v580
        %v613 = vcvt.s32.f32 %v581
        %v614 = vcvt.s32.f32 %v582
        %v615 = vcvt.s32.f32 %v583
        %v616 = vcvt.s32.f32 %v584
        %v617 = vcvt.s32.f32 %v585
        %v618 = vmax.f32 %v426, 0.0
        %v619 = vmax.f32 %v427, 0.0
        %v620 = vmax.f32 %v428, 0.0
        %v621 = vmax.f32 %v429, 0.0
        %v622 = vmax.f32 %v430, 0.0
        %v623 = vmax.f32 %v431, 0.0
        %v624 = vmax.f32 %v432, 0.0
        %v625 = vmax.f32 %v433, 0.0
        %v626 = vmax.f32 %v434, 0.0
        %v627 = vmax.f32 %v435, 0.0
        %v628 = vmax.f32 %v436, 0.0
        %v629 = vmax.f32 %v437, 0.0
        %v630 = vmax.f32 %v438, 0.0
        %v631 = vmax.f32 %v439, 0.0
        %v632 = vmax.f32 %v440, 0.0
        %v633 = vmax.f32 %v441, 0.0
        %v634 = vmax.f32 %v442, 0.0
        %v635 = vmax.f32 %v443, 0.0
        %v636 = vmax.f32 %v444, 0.0
        %v637 = vmax.f32 %v445, 0.0
        %v638 = vmax.f32 %v446, 0.0
        %v639 = vmax.f32 %v447, 0.0
        %v640 = vmax.f32 %v448, 0.0
        %v641 = vmax.f32 %v449, 0.0
        %v642 = vmax.f32 %v450, 0.0
        %v643 = vmax.f32 %v451, 0.0
        %v644 = vmax.f32 %v452, 0.0
        %v645 = vmax.f32 %v453, 0.0
        %v646 = vmax.f32 %v454, 0.0
        %v647 = vmax.f32 %v455, 0.0
        %v648 = vmax.f32 %v456, 0.0
        %v649 = vmax.f32 %v457, 0.0
        %v650 = vmin.f32 %v618, 15.0
        %v651 = vmin.f32 %v619, 15.0
        %v652 = vmin.f32 %v620, 15.0
        %v653 = vmin.f32 %v621, 15.0
        %v654 = vmin.f32 %v622, 15.0
        %v655 = vmin.f32 %v623, 15.0
        %v656 = vmin.f32 %v624, 15.0
        %v657 = vmin.f32 %v625, 15.0
        %v658 = vmin.f32 %v626, 15.0
        %v659 = vmin.f32 %v627, 15.0
        %v660 = vmin.f32 %v628, 15.0
        %v661 = vmin.f32 %v629, 15.0
        %v662 = vmin.f32 %v630, 15.0
        %v663 = vmin.f32 %v631, 15.0
        %v664 = vmin.f32 %v632, 15.0
        %v665 = vmin.f32 %v633, 15.0
        %v666 = vmin.f32 %v634, 15.0
        %v667 = vmin.f32 %v635, 15.0
        %v668 = vmin.f32 %v636, 15.0
        %v669 = vmin.f32 %v637, 15.0
        %v670 = vmin.f32 %v638, 15.0
        %v671 = vmin.f32 %v639, 15.0
        %v672 = vmin.f32 %v640, 15.0
        %v673 = vmin.f32 %v641, 15.0
        %v674 = vmin.f32 %v642, 15.0
        %v675 = vmin.f32 %v643, 15.0
        %v676 = vmin.f32 %v644, 15.0
        %v677 = vmin.f32 %v645, 15.0
        %v678 = vmin.f32 %v646, 15.0
        %v679 = vmin.f32 %v647, 15.0
        %v680 = vmin.f32 %v648, 15.0
        %v681 = vmin.f32 %v649, 15.0
        %v682 = vfloor.f32 %v650
        %v683 = vfloor.f32 %v651
        %v684 = vfloor.f32 %v652
        %v685 = vfloor.f32 %v653
        %v686 = vfloor.f32 %v654
        %v687 = vfloor.f32 %v655
        %v688 = vfloor.f32 %v656
        %v689 = vfloor.f32 %v657
        %v690 = vfloor.f32 %v658
        %v691 = vfloor.f32 %v659
        %v692 = vfloor.f32 %v660
        %v693 = vfloor.f32 %v661
        %v694 = vfloor.f32 %v662
        %v695 = vfloor.f32 %v663
        %v696 = vfloor.f32 %v664
        %v697 = vfloor.f32 %v665
        %v698 = vfloor.f32 %v666
        %v699 = vfloor.f32 %v667
        %v700 = vfloor.f32 %v668
        %v701 = vfloor.f32 %v669
        %v702 = vfloor.f32 %v670
        %v703 = vfloor.f32 %v671
        %v704 = vfloor.f32 %v672
        %v705 = vfloor.f32 %v673
        %v706 = vfloor.f32 %v674
        %v707 = vfloor.f32 %v675
        %v708 = vfloor.f32 %v676
        %v709 = vfloor.f32 %v677
        %v710 = vfloor.f32 %v678
        %v711 = vfloor.f32 %v679
        %v712 = vfloor.f32 %v680
        %v713 = vfloor.f32 %v681
        %v714 = vsub.f32 %v650, %v682
        %v715 = vsub.f32 %v651, %v683
        %v716 = vsub.f32 %v652, %v684
        %v717 = vsub.f32 %v653, %v685
        %v718 = vsub.f32 %v654, %v686
        %v719 = vsub.f32 %v655, %v687
        %v720 = vsub.f32 %v656, %v688
        %v721 = vsub.f32 %v657, %v689
        %v722 = vsub.f32 %v658, %v690
        %v723 = vsub.f32 %v659, %v691
        %v724 = vsub.f32 %v660, %v692
        %v725 = vsub.f32 %v661, %v693
        %v726 = vsub.f32 %v662, %v694
        %v727 = vsub.f32 %v663, %v695
        %v728 = vsub.f32 %v664, %v696
        %v729 = vsub.f32 %v665, %v697
        %v730 = vsub.f32 %v666, %v698
        %v731 = vsub.f32 %v667, %v699
        %v732 = vsub.f32 %v668, %v700
        %v733 = vsub.f32 %v669, %v701
        %v734 = vsub.f32 %v670, %v702
        %v735 = vsub.f32 %v671, %v703
        %v736 = vsub.f32 %v672, %v704
        %v737 = vsub.f32 %v673, %v705
        %v738 = vsub.f32 %v674, %v706
        %v739 = vsub.f32 %v675, %v707
        %v740 = vsub.f32 %v676, %v708
        %v741 = vsub.f32 %v677, %v709
        %v742 = vsub.f32 %v678, %v710
        %v743 = vsub.f32 %v679, %v711
        %v744 = vsub.f32 %v680, %v712
        %v745 = vsub.f32 %v681, %v713
        %v746 = vadd.f32 %v682, 1.0
        %v747 = vadd.f32 %v683, 1.0
        %v748 = vadd.f32 %v684, 1.0
        %v749 = vadd.f32 %v685, 1.0
        %v750 = vadd.f32 %v686, 1.0
        %v751 = vadd.f32 %v687, 1.0
        %v752 = vadd.f32 %v688, 1.0
        %v753 = vadd.f32 %v689, 1.0
        %v754 = vadd.f32 %v690, 1.0
        %v755 = vadd.f32 %v691, 1.0
        %v756 = vadd.f32 %v692, 1.0
        %v757 = vadd.f32 %v693, 1.0
        %v758 = vadd.f32 %v694, 1.0
        %v759 = vadd.f32 %v695, 1.0
        %v760 = vadd.f32 %v696, 1.0
        %v761 = vadd.f32 %v697, 1.0
        %v762 = vadd.f32 %v698, 1.0
        %v763 = vadd.f32 %v699, 1.0
        %v764 = vadd.f32 %v700, 1.0
        %v765 = vadd.f32 %v701, 1.0
        %v766 = vadd.f32 %v702, 1.0
        %v767 = vadd.f32 %v703, 1.0
        %v768 = vadd.f32 %v704, 1.0
        %v769 = vadd.f32 %v705, 1.0
        %v770 = vadd.f32 %v706, 1.0
        %v771 = vadd.f32 %v707, 1.0
        %v772 = vadd.f32 %v708, 1.0
        %v773 = vadd.f32 %v709, 1.0
        %v774 = vadd.f32 %v710, 1.0
        %v775 = vadd.f32 %v711, 1.0
        %v776 = vadd.f32 %v712, 1.0
        %v777 = vadd.f32 %v713, 1.0
        %v778 = vmin.f32 %v746, 15.0
        %v779 = vmin.f32 %v747, 15.0
        %v780 = vmin.f32 %v748, 15.0
        %v781 = vmin.f32 %v749, 15.0
        %v782 = vmin.f32 %v750, 15.0
        %v783 = vmin.f32 %v751, 15.0
        %v784 = vmin.f32 %v752, 15.0
        %v785 = vmin.f32 %v753, 15.0
        %v786 = vmin.f32 %v754, 15.0
        %v787 = vmin.f32 %v755, 15.0
        %v788 = vmin.f32 %v756, 15.0
        %v789 = vmin.f32 %v757, 15.0
        %v790 = vmin.f32 %v758, 15.0
        %v791 = vmin.f32 %v759, 15.0
        %v792 = vmin.f32 %v760, 15.0
        %v793 = vmin.f32 %v761, 15.0
        %v794 = vmin.f32 %v762, 15.0
        %v795 = vmin.f32 %v763, 15.0
        %v796 = vmin.f32 %v764, 15.0
        %v797 = vmin.f32 %v765, 15.0
        %v798 = vmin.f32 %v766, 15.0
        %v799 = vmin.f32 %v767, 15.0
        %v800 = vmin.f32 %v768, 15.0
        %v801 = vmin.f32 %v769, 15.0
        %v802 = vmin.f32 %v770, 15.0
        %v803 = vmin.f32 %v771, 15.0
        %v804 = vmin.f32 %v772, 15.0
        %v805 = vmin.f32 %v773, 15.0
        %v806 = vmin.f32 %v774, 15.0
        %v807 = vmin.f32 %v775, 15.0
        %v808 = vmin.f32 %v776, 15.0
        %v809 = vmin.f32 %v777, 15.0
        %v811 = vlaneseq
        %v812 = vshrl.u32 %v811, 7
        %v813 = vsub.s32 0, %v812
        %v814 = vrot.slane %v264, %v813
        %v815 = vlaneseq
        %v816 = vshrl.u32 %v815, 7
        %v817 = vsub.s32 1, %v816
        %v818 = vrot.slane %v264, %v817
        %822 = vset.pattern.permute.xlu0 1
        %823 = vperm.xlu0 %822, %v682
        %v824 = vpop.permute.xlu0 %823
        %827 = vset.pattern.permute.xlu0 1
        %828 = vperm.xlu0 %827, %v683
        %v829 = vpop.permute.xlu0 %828
        %832 = vset.pattern.permute.xlu0 1
        %833 = vperm.xlu0 %832, %v684
        %v834 = vpop.permute.xlu0 %833
        %837 = vset.pattern.permute.xlu0 1
        %838 = vperm.xlu0 %837, %v685
        %v839 = vpop.permute.xlu0 %838
        %842 = vset.pattern.permute.xlu0 1
        %843 = vperm.xlu0 %842, %v686
        %v844 = vpop.permute.xlu0 %843
        %847 = vset.pattern.permute.xlu0 1
        %848 = vperm.xlu0 %847, %v687
        %v849 = vpop.permute.xlu0 %848
        %852 = vset.pattern.permute.xlu0 1
        %853 = vperm.xlu0 %852, %v688
        %v854 = vpop.permute.xlu0 %853
        %857 = vset.pattern.permute.xlu0 1
        %858 = vperm.xlu0 %857, %v689
        %v859 = vpop.permute.xlu0 %858
        %862 = vset.pattern.permute.xlu0 1
        %863 = vperm.xlu0 %862, %v690
        %v864 = vpop.permute.xlu0 %863
        %867 = vset.pattern.permute.xlu0 1
        %868 = vperm.xlu0 %867, %v691
        %v869 = vpop.permute.xlu0 %868
        %872 = vset.pattern.permute.xlu0 1
        %873 = vperm.xlu0 %872, %v692
        %v874 = vpop.permute.xlu0 %873
        %877 = vset.pattern.permute.xlu0 1
        %878 = vperm.xlu0 %877, %v693
        %v879 = vpop.permute.xlu0 %878
        %882 = vset.pattern.permute.xlu0 1
        %883 = vperm.xlu0 %882, %v694
        %v884 = vpop.permute.xlu0 %883
        %887 = vset.pattern.permute.xlu0 1
        %888 = vperm.xlu0 %887, %v695
        %v889 = vpop.permute.xlu0 %888
        %892 = vset.pattern.permute.xlu0 1
        %893 = vperm.xlu0 %892, %v696
        %v894 = vpop.permute.xlu0 %893
        %897 = vset.pattern.permute.xlu0 1
        %898 = vperm.xlu0 %897, %v697
        %v899 = vpop.permute.xlu0 %898
        %902 = vset.pattern.permute.xlu0 1
        %903 = vperm.xlu0 %902, %v698
        %v904 = vpop.permute.xlu0 %903
        %907 = vset.pattern.permute.xlu0 1
        %908 = vperm.xlu0 %907, %v699
        %v909 = vpop.permute.xlu0 %908
        %912 = vset.pattern.permute.xlu0 1
        %913 = vperm.xlu0 %912, %v700
        %v914 = vpop.permute.xlu0 %913
        %917 = vset.pattern.permute.xlu0 1
        %918 = vperm.xlu0 %917, %v701
        %v919 = vpop.permute.xlu0 %918
        %922 = vset.pattern.permute.xlu0 1
        %923 = vperm.xlu0 %922, %v702
        %v924 = vpop.permute.xlu0 %923
        %927 = vset.pattern.permute.xlu0 1
        %928 = vperm.xlu0 %927, %v703
        %v929 = vpop.permute.xlu0 %928
        %932 = vset.pattern.permute.xlu0 1
        %933 = vperm.xlu0 %932, %v704
        %v934 = vpop.permute.xlu0 %933
        %937 = vset.pattern.permute.xlu0 1
        %938 = vperm.xlu0 %937, %v705
        %v939 = vpop.permute.xlu0 %938
        %942 = vset.pattern.permute.xlu0 1
        %943 = vperm.xlu0 %942, %v706
        %v944 = vpop.permute.xlu0 %943
        %947 = vset.pattern.permute.xlu0 1
        %948 = vperm.xlu0 %947, %v707
        %v949 = vpop.permute.xlu0 %948
        %952 = vset.pattern.permute.xlu0 1
        %953 = vperm.xlu0 %952, %v708
        %v954 = vpop.permute.xlu0 %953
        %957 = vset.pattern.permute.xlu0 1
        %958 = vperm.xlu0 %957, %v709
        %v959 = vpop.permute.xlu0 %958
        %962 = vset.pattern.permute.xlu0 1
        %963 = vperm.xlu0 %962, %v710
        %v964 = vpop.permute.xlu0 %963
        %967 = vset.pattern.permute.xlu0 1
        %968 = vperm.xlu0 %967, %v711
        %v969 = vpop.permute.xlu0 %968
        %972 = vset.pattern.permute.xlu0 1
        %973 = vperm.xlu0 %972, %v712
        %v974 = vpop.permute.xlu0 %973
        %977 = vset.pattern.permute.xlu0 1
        %978 = vperm.xlu0 %977, %v713
        %v979 = vpop.permute.xlu0 %978
        %vm981 = vcmp.eq.f32.partialorder %v814, %v824
        %vm982 = vcmp.eq.f32.partialorder %v818, %v824
        %vm983 = vcmp.eq.f32.partialorder %v814, %v829
        %vm984 = vcmp.eq.f32.partialorder %v818, %v829
        %vm985 = vcmp.eq.f32.partialorder %v814, %v834
        %vm986 = vcmp.eq.f32.partialorder %v818, %v834
        %vm987 = vcmp.eq.f32.partialorder %v814, %v839
        %vm988 = vcmp.eq.f32.partialorder %v818, %v839
        %vm989 = vcmp.eq.f32.partialorder %v814, %v844
        %vm990 = vcmp.eq.f32.partialorder %v818, %v844
        %vm991 = vcmp.eq.f32.partialorder %v814, %v849
        %vm992 = vcmp.eq.f32.partialorder %v818, %v849
        %vm993 = vcmp.eq.f32.partialorder %v814, %v854
        %vm994 = vcmp.eq.f32.partialorder %v818, %v854
        %vm995 = vcmp.eq.f32.partialorder %v814, %v859
        %vm996 = vcmp.eq.f32.partialorder %v818, %v859
        %vm997 = vcmp.eq.f32.partialorder %v814, %v864
        %vm998 = vcmp.eq.f32.partialorder %v818, %v864
        %vm999 = vcmp.eq.f32.partialorder %v814, %v869
        %vm1000 = vcmp.eq.f32.partialorder %v818, %v869
        %vm1001 = vcmp.eq.f32.partialorder %v814, %v874
        %vm1002 = vcmp.eq.f32.partialorder %v818, %v874
        %vm1003 = vcmp.eq.f32.partialorder %v814, %v879
        %vm1004 = vcmp.eq.f32.partialorder %v818, %v879
        %vm1005 = vcmp.eq.f32.partialorder %v814, %v884
        %vm1006 = vcmp.eq.f32.partialorder %v818, %v884
        %vm1007 = vcmp.eq.f32.partialorder %v814, %v889
        %vm1008 = vcmp.eq.f32.partialorder %v818, %v889
        %vm1009 = vcmp.eq.f32.partialorder %v814, %v894
        %vm1010 = vcmp.eq.f32.partialorder %v818, %v894
        %vm1011 = vcmp.eq.f32.partialorder %v814, %v899
        %vm1012 = vcmp.eq.f32.partialorder %v818, %v899
        %vm1013 = vcmp.eq.f32.partialorder %v814, %v904
        %vm1014 = vcmp.eq.f32.partialorder %v818, %v904
        %vm1015 = vcmp.eq.f32.partialorder %v814, %v909
        %vm1016 = vcmp.eq.f32.partialorder %v818, %v909
        %vm1017 = vcmp.eq.f32.partialorder %v814, %v914
        %vm1018 = vcmp.eq.f32.partialorder %v818, %v914
        %vm1019 = vcmp.eq.f32.partialorder %v814, %v919
        %vm1020 = vcmp.eq.f32.partialorder %v818, %v919
        %vm1021 = vcmp.eq.f32.partialorder %v814, %v924
        %vm1022 = vcmp.eq.f32.partialorder %v818, %v924
        %vm1023 = vcmp.eq.f32.partialorder %v814, %v929
        %vm1024 = vcmp.eq.f32.partialorder %v818, %v929
        %vm1025 = vcmp.eq.f32.partialorder %v814, %v934
        %vm1026 = vcmp.eq.f32.partialorder %v818, %v934
        %vm1027 = vcmp.eq.f32.partialorder %v814, %v939
        %vm1028 = vcmp.eq.f32.partialorder %v818, %v939
        %vm1029 = vcmp.eq.f32.partialorder %v814, %v944
        %vm1030 = vcmp.eq.f32.partialorder %v818, %v944
        %vm1031 = vcmp.eq.f32.partialorder %v814, %v949
        %vm1032 = vcmp.eq.f32.partialorder %v818, %v949
        %vm1033 = vcmp.eq.f32.partialorder %v814, %v954
        %vm1034 = vcmp.eq.f32.partialorder %v818, %v954
        %vm1035 = vcmp.eq.f32.partialorder %v814, %v959
        %vm1036 = vcmp.eq.f32.partialorder %v818, %v959
        %vm1037 = vcmp.eq.f32.partialorder %v814, %v964
        %vm1038 = vcmp.eq.f32.partialorder %v818, %v964
        %vm1039 = vcmp.eq.f32.partialorder %v814, %v969
        %vm1040 = vcmp.eq.f32.partialorder %v818, %v969
        %vm1041 = vcmp.eq.f32.partialorder %v814, %v974
        %vm1042 = vcmp.eq.f32.partialorder %v818, %v974
        %vm1043 = vcmp.eq.f32.partialorder %v814, %v979
        %vm1044 = vcmp.eq.f32.partialorder %v818, %v979
        %v1045 = vsub.f32 1.0, %v714
        %v1046 = vsub.f32 1.0, %v715
        %v1047 = vsub.f32 1.0, %v716
        %v1048 = vsub.f32 1.0, %v717
        %v1049 = vsub.f32 1.0, %v718
        %v1050 = vsub.f32 1.0, %v719
        %v1051 = vsub.f32 1.0, %v720
        %v1052 = vsub.f32 1.0, %v721
        %v1053 = vsub.f32 1.0, %v722
        %v1054 = vsub.f32 1.0, %v723
        %v1055 = vsub.f32 1.0, %v724
        %v1056 = vsub.f32 1.0, %v725
        %v1057 = vsub.f32 1.0, %v726
        %v1058 = vsub.f32 1.0, %v727
        %v1059 = vsub.f32 1.0, %v728
        %v1060 = vsub.f32 1.0, %v729
        %v1061 = vsub.f32 1.0, %v730
        %v1062 = vsub.f32 1.0, %v731
        %v1063 = vsub.f32 1.0, %v732
        %v1064 = vsub.f32 1.0, %v733
        %v1065 = vsub.f32 1.0, %v734
        %v1066 = vsub.f32 1.0, %v735
        %v1067 = vsub.f32 1.0, %v736
        %v1068 = vsub.f32 1.0, %v737
        %v1069 = vsub.f32 1.0, %v738
        %v1070 = vsub.f32 1.0, %v739
        %v1071 = vsub.f32 1.0, %v740
        %v1072 = vsub.f32 1.0, %v741
        %v1073 = vsub.f32 1.0, %v742
        %v1074 = vsub.f32 1.0, %v743
        %v1075 = vsub.f32 1.0, %v744
        %v1076 = vsub.f32 1.0, %v745
        %v1077 = vmul.f32 %v1045, %v586
        %v1078 = vmul.f32 %v1046, %v587
        %v1079 = vmul.f32 %v1047, %v588
        %v1080 = vmul.f32 %v1048, %v589
        %v1081 = vmul.f32 %v1049, %v590
        %v1082 = vmul.f32 %v1050, %v591
        %v1083 = vmul.f32 %v1051, %v592
        %v1084 = vmul.f32 %v1052, %v593
        %v1085 = vmul.f32 %v1053, %v594
        %v1086 = vmul.f32 %v1054, %v595
        %v1087 = vmul.f32 %v1055, %v596
        %v1088 = vmul.f32 %v1056, %v597
        %v1089 = vmul.f32 %v1057, %v598
        %v1090 = vmul.f32 %v1058, %v599
        %v1091 = vmul.f32 %v1059, %v600
        %v1092 = vmul.f32 %v1060, %v601
        %v1093 = vmul.f32 %v1061, %v602
        %v1094 = vmul.f32 %v1062, %v603
        %v1095 = vmul.f32 %v1063, %v604
        %v1096 = vmul.f32 %v1064, %v605
        %v1097 = vmul.f32 %v1065, %v606
        %v1098 = vmul.f32 %v1066, %v607
        %v1099 = vmul.f32 %v1067, %v608
        %v1100 = vmul.f32 %v1068, %v609
        %v1101 = vmul.f32 %v1069, %v610
        %v1102 = vmul.f32 %v1070, %v611
        %v1103 = vmul.f32 %v1071, %v612
        %v1104 = vmul.f32 %v1072, %v613
        %v1105 = vmul.f32 %v1073, %v614
        %v1106 = vmul.f32 %v1074, %v615
        %v1107 = vmul.f32 %v1075, %v616
        %v1108 = vmul.f32 %v1076, %v617
        %1110 = vset.pattern.permute.xlu0 1
        %1111 = vperm.xlu0 %1110, %v1077
        %v1112 = vpop.permute.xlu0 %1111
        %1115 = vset.pattern.permute.xlu0 1
        %1116 = vperm.xlu0 %1115, %v1078
        %v1117 = vpop.permute.xlu0 %1116
        %1120 = vset.pattern.permute.xlu0 1
        %1121 = vperm.xlu0 %1120, %v1079
        %v1122 = vpop.permute.xlu0 %1121
        %1125 = vset.pattern.permute.xlu0 1
        %1126 = vperm.xlu0 %1125, %v1080
        %v1127 = vpop.permute.xlu0 %1126
        %1130 = vset.pattern.permute.xlu0 1
        %1131 = vperm.xlu0 %1130, %v1081
        %v1132 = vpop.permute.xlu0 %1131
        %1135 = vset.pattern.permute.xlu0 1
        %1136 = vperm.xlu0 %1135, %v1082
        %v1137 = vpop.permute.xlu0 %1136
        %1140 = vset.pattern.permute.xlu0 1
        %1141 = vperm.xlu0 %1140, %v1083
        %v1142 = vpop.permute.xlu0 %1141
        %1145 = vset.pattern.permute.xlu0 1
        %1146 = vperm.xlu0 %1145, %v1084
        %v1147 = vpop.permute.xlu0 %1146
        %1150 = vset.pattern.permute.xlu0 1
        %1151 = vperm.xlu0 %1150, %v1085
        %v1152 = vpop.permute.xlu0 %1151
        %1155 = vset.pattern.permute.xlu0 1
        %1156 = vperm.xlu0 %1155, %v1086
        %v1157 = vpop.permute.xlu0 %1156
        %1160 = vset.pattern.permute.xlu0 1
        %1161 = vperm.xlu0 %1160, %v1087
        %v1162 = vpop.permute.xlu0 %1161
        %1165 = vset.pattern.permute.xlu0 1
        %1166 = vperm.xlu0 %1165, %v1088
        %v1167 = vpop.permute.xlu0 %1166
        %1170 = vset.pattern.permute.xlu0 1
        %1171 = vperm.xlu0 %1170, %v1089
        %v1172 = vpop.permute.xlu0 %1171
        %1175 = vset.pattern.permute.xlu0 1
        %1176 = vperm.xlu0 %1175, %v1090
        %v1177 = vpop.permute.xlu0 %1176
        %1180 = vset.pattern.permute.xlu0 1
        %1181 = vperm.xlu0 %1180, %v1091
        %v1182 = vpop.permute.xlu0 %1181
        %1185 = vset.pattern.permute.xlu0 1
        %1186 = vperm.xlu0 %1185, %v1092
        %v1187 = vpop.permute.xlu0 %1186
        %1190 = vset.pattern.permute.xlu0 1
        %1191 = vperm.xlu0 %1190, %v1093
        %v1192 = vpop.permute.xlu0 %1191
        %1195 = vset.pattern.permute.xlu0 1
        %1196 = vperm.xlu0 %1195, %v1094
        %v1197 = vpop.permute.xlu0 %1196
        %1200 = vset.pattern.permute.xlu0 1
        %1201 = vperm.xlu0 %1200, %v1095
        %v1202 = vpop.permute.xlu0 %1201
        %1205 = vset.pattern.permute.xlu0 1
        %1206 = vperm.xlu0 %1205, %v1096
        %v1207 = vpop.permute.xlu0 %1206
        %1210 = vset.pattern.permute.xlu0 1
        %1211 = vperm.xlu0 %1210, %v1097
        %v1212 = vpop.permute.xlu0 %1211
        %1215 = vset.pattern.permute.xlu0 1
        %1216 = vperm.xlu0 %1215, %v1098
        %v1217 = vpop.permute.xlu0 %1216
        %1220 = vset.pattern.permute.xlu0 1
        %1221 = vperm.xlu0 %1220, %v1099
        %v1222 = vpop.permute.xlu0 %1221
        %1225 = vset.pattern.permute.xlu0 1
        %1226 = vperm.xlu0 %1225, %v1100
        %v1227 = vpop.permute.xlu0 %1226
        %1230 = vset.pattern.permute.xlu0 1
        %1231 = vperm.xlu0 %1230, %v1101
        %v1232 = vpop.permute.xlu0 %1231
        %1235 = vset.pattern.permute.xlu0 1
        %1236 = vperm.xlu0 %1235, %v1102
        %v1237 = vpop.permute.xlu0 %1236
        %1240 = vset.pattern.permute.xlu0 1
        %1241 = vperm.xlu0 %1240, %v1103
        %v1242 = vpop.permute.xlu0 %1241
        %1245 = vset.pattern.permute.xlu0 1
        %1246 = vperm.xlu0 %1245, %v1104
        %v1247 = vpop.permute.xlu0 %1246
        %1250 = vset.pattern.permute.xlu0 1
        %1251 = vperm.xlu0 %1250, %v1105
        %v1252 = vpop.permute.xlu0 %1251
        %1255 = vset.pattern.permute.xlu0 1
        %1256 = vperm.xlu0 %1255, %v1106
        %v1257 = vpop.permute.xlu0 %1256
        %1260 = vset.pattern.permute.xlu0 1
        %1261 = vperm.xlu0 %1260, %v1107
        %v1262 = vpop.permute.xlu0 %1261
        %1265 = vset.pattern.permute.xlu0 1
        %1266 = vperm.xlu0 %1265, %v1108
        %v1267 = vpop.permute.xlu0 %1266
        %v1269 = vsel %vm981, %v1112, 0.0
        %v1270 = vsel %vm982, %v1112, 0.0
        %v1271 = vsel %vm983, %v1117, 0.0
        %v1272 = vsel %vm984, %v1117, 0.0
        %v1273 = vsel %vm985, %v1122, 0.0
        %v1274 = vsel %vm986, %v1122, 0.0
        %v1275 = vsel %vm987, %v1127, 0.0
        %v1276 = vsel %vm988, %v1127, 0.0
        %v1277 = vsel %vm989, %v1132, 0.0
        %v1278 = vsel %vm990, %v1132, 0.0
        %v1279 = vsel %vm991, %v1137, 0.0
        %v1280 = vsel %vm992, %v1137, 0.0
        %v1281 = vsel %vm993, %v1142, 0.0
        %v1282 = vsel %vm994, %v1142, 0.0
        %v1283 = vsel %vm995, %v1147, 0.0
        %v1284 = vsel %vm996, %v1147, 0.0
        %v1285 = vsel %vm997, %v1152, 0.0
        %v1286 = vsel %vm998, %v1152, 0.0
        %v1287 = vsel %vm999, %v1157, 0.0
        %v1288 = vsel %vm1000, %v1157, 0.0
        %v1289 = vsel %vm1001, %v1162, 0.0
        %v1290 = vsel %vm1002, %v1162, 0.0
        %v1291 = vsel %vm1003, %v1167, 0.0
        %v1292 = vsel %vm1004, %v1167, 0.0
        %v1293 = vsel %vm1005, %v1172, 0.0
        %v1294 = vsel %vm1006, %v1172, 0.0
        %v1295 = vsel %vm1007, %v1177, 0.0
        %v1296 = vsel %vm1008, %v1177, 0.0
        %v1297 = vsel %vm1009, %v1182, 0.0
        %v1298 = vsel %vm1010, %v1182, 0.0
        %v1299 = vsel %vm1011, %v1187, 0.0
        %v1300 = vsel %vm1012, %v1187, 0.0
        %v1301 = vsel %vm1013, %v1192, 0.0
        %v1302 = vsel %vm1014, %v1192, 0.0
        %v1303 = vsel %vm1015, %v1197, 0.0
        %v1304 = vsel %vm1016, %v1197, 0.0
        %v1305 = vsel %vm1017, %v1202, 0.0
        %v1306 = vsel %vm1018, %v1202, 0.0
        %v1307 = vsel %vm1019, %v1207, 0.0
        %v1308 = vsel %vm1020, %v1207, 0.0
        %v1309 = vsel %vm1021, %v1212, 0.0
        %v1310 = vsel %vm1022, %v1212, 0.0
        %v1311 = vsel %vm1023, %v1217, 0.0
        %v1312 = vsel %vm1024, %v1217, 0.0
        %v1313 = vsel %vm1025, %v1222, 0.0
        %v1314 = vsel %vm1026, %v1222, 0.0
        %v1315 = vsel %vm1027, %v1227, 0.0
        %v1316 = vsel %vm1028, %v1227, 0.0
        %v1317 = vsel %vm1029, %v1232, 0.0
        %v1318 = vsel %vm1030, %v1232, 0.0
        %v1319 = vsel %vm1031, %v1237, 0.0
        %v1320 = vsel %vm1032, %v1237, 0.0
        %v1321 = vsel %vm1033, %v1242, 0.0
        %v1322 = vsel %vm1034, %v1242, 0.0
        %v1323 = vsel %vm1035, %v1247, 0.0
        %v1324 = vsel %vm1036, %v1247, 0.0
        %v1325 = vsel %vm1037, %v1252, 0.0
        %v1326 = vsel %vm1038, %v1252, 0.0
        %v1327 = vsel %vm1039, %v1257, 0.0
        %v1328 = vsel %vm1040, %v1257, 0.0
        %v1329 = vsel %vm1041, %v1262, 0.0
        %v1330 = vsel %vm1042, %v1262, 0.0
        %v1331 = vsel %vm1043, %v1267, 0.0
        %v1332 = vsel %vm1044, %v1267, 0.0
        %v1333 = vadd.f32 %v1269, 0.0
        %v1334 = vadd.f32 %v1270, 0.0
        %v1335 = vadd.f32 %v1271, 0.0
        %v1336 = vadd.f32 %v1272, 0.0
        %v1337 = vadd.f32 %v1273, 0.0
        %v1338 = vadd.f32 %v1274, 0.0
        %v1339 = vadd.f32 %v1275, 0.0
        %v1340 = vadd.f32 %v1276, 0.0
        %v1341 = vadd.f32 %v1277, 0.0
        %v1342 = vadd.f32 %v1278, 0.0
        %v1343 = vadd.f32 %v1279, 0.0
        %v1344 = vadd.f32 %v1280, 0.0
        %v1345 = vadd.f32 %v1281, 0.0
        %v1346 = vadd.f32 %v1282, 0.0
        %v1347 = vadd.f32 %v1283, 0.0
        %v1348 = vadd.f32 %v1284, 0.0
        %v1349 = vadd.f32 %v1285, 0.0
        %v1350 = vadd.f32 %v1286, 0.0
        %v1351 = vadd.f32 %v1287, 0.0
        %v1352 = vadd.f32 %v1288, 0.0
        %v1353 = vadd.f32 %v1289, 0.0
        %v1354 = vadd.f32 %v1290, 0.0
        %v1355 = vadd.f32 %v1291, 0.0
        %v1356 = vadd.f32 %v1292, 0.0
        %v1357 = vadd.f32 %v1293, 0.0
        %v1358 = vadd.f32 %v1294, 0.0
        %v1359 = vadd.f32 %v1295, 0.0
        %v1360 = vadd.f32 %v1296, 0.0
        %v1361 = vadd.f32 %v1297, 0.0
        %v1362 = vadd.f32 %v1298, 0.0
        %v1363 = vadd.f32 %v1299, 0.0
        %v1364 = vadd.f32 %v1300, 0.0
        %v1365 = vadd.f32 %v1301, 0.0
        %v1366 = vadd.f32 %v1302, 0.0
        %v1367 = vadd.f32 %v1303, 0.0
        %v1368 = vadd.f32 %v1304, 0.0
        %v1369 = vadd.f32 %v1305, 0.0
        %v1370 = vadd.f32 %v1306, 0.0
        %v1371 = vadd.f32 %v1307, 0.0
        %v1372 = vadd.f32 %v1308, 0.0
        %v1373 = vadd.f32 %v1309, 0.0
        %v1374 = vadd.f32 %v1310, 0.0
        %v1375 = vadd.f32 %v1311, 0.0
        %v1376 = vadd.f32 %v1312, 0.0
        %v1377 = vadd.f32 %v1313, 0.0
        %v1378 = vadd.f32 %v1314, 0.0
        %v1379 = vadd.f32 %v1315, 0.0
        %v1380 = vadd.f32 %v1316, 0.0
        %v1381 = vadd.f32 %v1317, 0.0
        %v1382 = vadd.f32 %v1318, 0.0
        %v1383 = vadd.f32 %v1319, 0.0
        %v1384 = vadd.f32 %v1320, 0.0
        %v1385 = vadd.f32 %v1321, 0.0
        %v1386 = vadd.f32 %v1322, 0.0
        %v1387 = vadd.f32 %v1323, 0.0
        %v1388 = vadd.f32 %v1324, 0.0
        %v1389 = vadd.f32 %v1325, 0.0
        %v1390 = vadd.f32 %v1326, 0.0
        %v1391 = vadd.f32 %v1327, 0.0
        %v1392 = vadd.f32 %v1328, 0.0
        %v1393 = vadd.f32 %v1329, 0.0
        %v1394 = vadd.f32 %v1330, 0.0
        %v1395 = vadd.f32 %v1331, 0.0
        %v1396 = vadd.f32 %v1332, 0.0
        %1398 = vset.pattern.permute.xlu0 1
        %1399 = vperm.xlu0 %1398, %v778
        %v1400 = vpop.permute.xlu0 %1399
        %1403 = vset.pattern.permute.xlu0 1
        %1404 = vperm.xlu0 %1403, %v779
        %v1405 = vpop.permute.xlu0 %1404
        %1408 = vset.pattern.permute.xlu0 1
        %1409 = vperm.xlu0 %1408, %v780
        %v1410 = vpop.permute.xlu0 %1409
        %1413 = vset.pattern.permute.xlu0 1
        %1414 = vperm.xlu0 %1413, %v781
        %v1415 = vpop.permute.xlu0 %1414
        %1418 = vset.pattern.permute.xlu0 1
        %1419 = vperm.xlu0 %1418, %v782
        %v1420 = vpop.permute.xlu0 %1419
        %1423 = vset.pattern.permute.xlu0 1
        %1424 = vperm.xlu0 %1423, %v783
        %v1425 = vpop.permute.xlu0 %1424
        %1428 = vset.pattern.permute.xlu0 1
        %1429 = vperm.xlu0 %1428, %v784
        %v1430 = vpop.permute.xlu0 %1429
        %1433 = vset.pattern.permute.xlu0 1
        %1434 = vperm.xlu0 %1433, %v785
        %v1435 = vpop.permute.xlu0 %1434
        %1438 = vset.pattern.permute.xlu0 1
        %1439 = vperm.xlu0 %1438, %v786
        %v1440 = vpop.permute.xlu0 %1439
        %1443 = vset.pattern.permute.xlu0 1
        %1444 = vperm.xlu0 %1443, %v787
        %v1445 = vpop.permute.xlu0 %1444
        %1448 = vset.pattern.permute.xlu0 1
        %1449 = vperm.xlu0 %1448, %v788
        %v1450 = vpop.permute.xlu0 %1449
        %1453 = vset.pattern.permute.xlu0 1
        %1454 = vperm.xlu0 %1453, %v789
        %v1455 = vpop.permute.xlu0 %1454
        %1458 = vset.pattern.permute.xlu0 1
        %1459 = vperm.xlu0 %1458, %v790
        %v1460 = vpop.permute.xlu0 %1459
        %1463 = vset.pattern.permute.xlu0 1
        %1464 = vperm.xlu0 %1463, %v791
        %v1465 = vpop.permute.xlu0 %1464
        %1468 = vset.pattern.permute.xlu0 1
        %1469 = vperm.xlu0 %1468, %v792
        %v1470 = vpop.permute.xlu0 %1469
        %1473 = vset.pattern.permute.xlu0 1
        %1474 = vperm.xlu0 %1473, %v793
        %v1475 = vpop.permute.xlu0 %1474
        %1478 = vset.pattern.permute.xlu0 1
        %1479 = vperm.xlu0 %1478, %v794
        %v1480 = vpop.permute.xlu0 %1479
        %1483 = vset.pattern.permute.xlu0 1
        %1484 = vperm.xlu0 %1483, %v795
        %v1485 = vpop.permute.xlu0 %1484
        %1488 = vset.pattern.permute.xlu0 1
        %1489 = vperm.xlu0 %1488, %v796
        %v1490 = vpop.permute.xlu0 %1489
        %1493 = vset.pattern.permute.xlu0 1
        %1494 = vperm.xlu0 %1493, %v797
        %v1495 = vpop.permute.xlu0 %1494
        %1498 = vset.pattern.permute.xlu0 1
        %1499 = vperm.xlu0 %1498, %v798
        %v1500 = vpop.permute.xlu0 %1499
        %1503 = vset.pattern.permute.xlu0 1
        %1504 = vperm.xlu0 %1503, %v799
        %v1505 = vpop.permute.xlu0 %1504
        %1508 = vset.pattern.permute.xlu0 1
        %1509 = vperm.xlu0 %1508, %v800
        %v1510 = vpop.permute.xlu0 %1509
        %1513 = vset.pattern.permute.xlu0 1
        %1514 = vperm.xlu0 %1513, %v801
        %v1515 = vpop.permute.xlu0 %1514
        %1518 = vset.pattern.permute.xlu0 1
        %1519 = vperm.xlu0 %1518, %v802
        %v1520 = vpop.permute.xlu0 %1519
        %1523 = vset.pattern.permute.xlu0 1
        %1524 = vperm.xlu0 %1523, %v803
        %v1525 = vpop.permute.xlu0 %1524
        %1528 = vset.pattern.permute.xlu0 1
        %1529 = vperm.xlu0 %1528, %v804
        %v1530 = vpop.permute.xlu0 %1529
        %1533 = vset.pattern.permute.xlu0 1
        %1534 = vperm.xlu0 %1533, %v805
        %v1535 = vpop.permute.xlu0 %1534
        %1538 = vset.pattern.permute.xlu0 1
        %1539 = vperm.xlu0 %1538, %v806
        %v1540 = vpop.permute.xlu0 %1539
        %1543 = vset.pattern.permute.xlu0 1
        %1544 = vperm.xlu0 %1543, %v807
        %v1545 = vpop.permute.xlu0 %1544
        %1548 = vset.pattern.permute.xlu0 1
        %1549 = vperm.xlu0 %1548, %v808
        %v1550 = vpop.permute.xlu0 %1549
        %1553 = vset.pattern.permute.xlu0 1
        %1554 = vperm.xlu0 %1553, %v809
        %v1555 = vpop.permute.xlu0 %1554
        %vm1557 = vcmp.eq.f32.partialorder %v814, %v1400
        %vm1558 = vcmp.eq.f32.partialorder %v818, %v1400
        %vm1559 = vcmp.eq.f32.partialorder %v814, %v1405
        %vm1560 = vcmp.eq.f32.partialorder %v818, %v1405
        %vm1561 = vcmp.eq.f32.partialorder %v814, %v1410
        %vm1562 = vcmp.eq.f32.partialorder %v818, %v1410
        %vm1563 = vcmp.eq.f32.partialorder %v814, %v1415
        %vm1564 = vcmp.eq.f32.partialorder %v818, %v1415
        %vm1565 = vcmp.eq.f32.partialorder %v814, %v1420
        %vm1566 = vcmp.eq.f32.partialorder %v818, %v1420
        %vm1567 = vcmp.eq.f32.partialorder %v814, %v1425
        %vm1568 = vcmp.eq.f32.partialorder %v818, %v1425
        %vm1569 = vcmp.eq.f32.partialorder %v814, %v1430
        %vm1570 = vcmp.eq.f32.partialorder %v818, %v1430
        %vm1571 = vcmp.eq.f32.partialorder %v814, %v1435
        %vm1572 = vcmp.eq.f32.partialorder %v818, %v1435
        %vm1573 = vcmp.eq.f32.partialorder %v814, %v1440
        %vm1574 = vcmp.eq.f32.partialorder %v818, %v1440
        %vm1575 = vcmp.eq.f32.partialorder %v814, %v1445
        %vm1576 = vcmp.eq.f32.partialorder %v818, %v1445
        %vm1577 = vcmp.eq.f32.partialorder %v814, %v1450
        %vm1578 = vcmp.eq.f32.partialorder %v818, %v1450
        %vm1579 = vcmp.eq.f32.partialorder %v814, %v1455
        %vm1580 = vcmp.eq.f32.partialorder %v818, %v1455
        %vm1581 = vcmp.eq.f32.partialorder %v814, %v1460
        %vm1582 = vcmp.eq.f32.partialorder %v818, %v1460
        %vm1583 = vcmp.eq.f32.partialorder %v814, %v1465
        %vm1584 = vcmp.eq.f32.partialorder %v818, %v1465
        %vm1585 = vcmp.eq.f32.partialorder %v814, %v1470
        %vm1586 = vcmp.eq.f32.partialorder %v818, %v1470
        %vm1587 = vcmp.eq.f32.partialorder %v814, %v1475
        %vm1588 = vcmp.eq.f32.partialorder %v818, %v1475
        %vm1589 = vcmp.eq.f32.partialorder %v814, %v1480
        %vm1590 = vcmp.eq.f32.partialorder %v818, %v1480
        %vm1591 = vcmp.eq.f32.partialorder %v814, %v1485
        %vm1592 = vcmp.eq.f32.partialorder %v818, %v1485
        %vm1593 = vcmp.eq.f32.partialorder %v814, %v1490
        %vm1594 = vcmp.eq.f32.partialorder %v818, %v1490
        %vm1595 = vcmp.eq.f32.partialorder %v814, %v1495
        %vm1596 = vcmp.eq.f32.partialorder %v818, %v1495
        %vm1597 = vcmp.eq.f32.partialorder %v814, %v1500
        %vm1598 = vcmp.eq.f32.partialorder %v818, %v1500
        %vm1599 = vcmp.eq.f32.partialorder %v814, %v1505
        %vm1600 = vcmp.eq.f32.partialorder %v818, %v1505
        %vm1601 = vcmp.eq.f32.partialorder %v814, %v1510
        %vm1602 = vcmp.eq.f32.partialorder %v818, %v1510
        %vm1603 = vcmp.eq.f32.partialorder %v814, %v1515
        %vm1604 = vcmp.eq.f32.partialorder %v818, %v1515
        %vm1605 = vcmp.eq.f32.partialorder %v814, %v1520
        %vm1606 = vcmp.eq.f32.partialorder %v818, %v1520
        %vm1607 = vcmp.eq.f32.partialorder %v814, %v1525
        %vm1608 = vcmp.eq.f32.partialorder %v818, %v1525
        %vm1609 = vcmp.eq.f32.partialorder %v814, %v1530
        %vm1610 = vcmp.eq.f32.partialorder %v818, %v1530
        %vm1611 = vcmp.eq.f32.partialorder %v814, %v1535
        %vm1612 = vcmp.eq.f32.partialorder %v818, %v1535
        %vm1613 = vcmp.eq.f32.partialorder %v814, %v1540
        %vm1614 = vcmp.eq.f32.partialorder %v818, %v1540
        %vm1615 = vcmp.eq.f32.partialorder %v814, %v1545
        %vm1616 = vcmp.eq.f32.partialorder %v818, %v1545
        %vm1617 = vcmp.eq.f32.partialorder %v814, %v1550
        %vm1618 = vcmp.eq.f32.partialorder %v818, %v1550
        %vm1619 = vcmp.eq.f32.partialorder %v814, %v1555
        %vm1620 = vcmp.eq.f32.partialorder %v818, %v1555
        %v1621 = vmul.f32 %v714, %v586
        %v1622 = vmul.f32 %v715, %v587
        %v1623 = vmul.f32 %v716, %v588
        %v1624 = vmul.f32 %v717, %v589
        %v1625 = vmul.f32 %v718, %v590
        %v1626 = vmul.f32 %v719, %v591
        %v1627 = vmul.f32 %v720, %v592
        %v1628 = vmul.f32 %v721, %v593
        %v1629 = vmul.f32 %v722, %v594
        %v1630 = vmul.f32 %v723, %v595
        %v1631 = vmul.f32 %v724, %v596
        %v1632 = vmul.f32 %v725, %v597
        %v1633 = vmul.f32 %v726, %v598
        %v1634 = vmul.f32 %v727, %v599
        %v1635 = vmul.f32 %v728, %v600
        %v1636 = vmul.f32 %v729, %v601
        %v1637 = vmul.f32 %v730, %v602
        %v1638 = vmul.f32 %v731, %v603
        %v1639 = vmul.f32 %v732, %v604
        %v1640 = vmul.f32 %v733, %v605
        %v1641 = vmul.f32 %v734, %v606
        %v1642 = vmul.f32 %v735, %v607
        %v1643 = vmul.f32 %v736, %v608
        %v1644 = vmul.f32 %v737, %v609
        %v1645 = vmul.f32 %v738, %v610
        %v1646 = vmul.f32 %v739, %v611
        %v1647 = vmul.f32 %v740, %v612
        %v1648 = vmul.f32 %v741, %v613
        %v1649 = vmul.f32 %v742, %v614
        %v1650 = vmul.f32 %v743, %v615
        %v1651 = vmul.f32 %v744, %v616
        %v1652 = vmul.f32 %v745, %v617
        %1654 = vset.pattern.permute.xlu0 1
        %1655 = vperm.xlu0 %1654, %v1621
        %v1656 = vpop.permute.xlu0 %1655
        %1659 = vset.pattern.permute.xlu0 1
        %1660 = vperm.xlu0 %1659, %v1622
        %v1661 = vpop.permute.xlu0 %1660
        %1664 = vset.pattern.permute.xlu0 1
        %1665 = vperm.xlu0 %1664, %v1623
        %v1666 = vpop.permute.xlu0 %1665
        %1669 = vset.pattern.permute.xlu0 1
        %1670 = vperm.xlu0 %1669, %v1624
        %v1671 = vpop.permute.xlu0 %1670
        %1674 = vset.pattern.permute.xlu0 1
        %1675 = vperm.xlu0 %1674, %v1625
        %v1676 = vpop.permute.xlu0 %1675
        %1679 = vset.pattern.permute.xlu0 1
        %1680 = vperm.xlu0 %1679, %v1626
        %v1681 = vpop.permute.xlu0 %1680
        %1684 = vset.pattern.permute.xlu0 1
        %1685 = vperm.xlu0 %1684, %v1627
        %v1686 = vpop.permute.xlu0 %1685
        %1689 = vset.pattern.permute.xlu0 1
        %1690 = vperm.xlu0 %1689, %v1628
        %v1691 = vpop.permute.xlu0 %1690
        %1694 = vset.pattern.permute.xlu0 1
        %1695 = vperm.xlu0 %1694, %v1629
        %v1696 = vpop.permute.xlu0 %1695
        %1699 = vset.pattern.permute.xlu0 1
        %1700 = vperm.xlu0 %1699, %v1630
        %v1701 = vpop.permute.xlu0 %1700
        %1704 = vset.pattern.permute.xlu0 1
        %1705 = vperm.xlu0 %1704, %v1631
        %v1706 = vpop.permute.xlu0 %1705
        %1709 = vset.pattern.permute.xlu0 1
        %1710 = vperm.xlu0 %1709, %v1632
        %v1711 = vpop.permute.xlu0 %1710
        %1714 = vset.pattern.permute.xlu0 1
        %1715 = vperm.xlu0 %1714, %v1633
        %v1716 = vpop.permute.xlu0 %1715
        %1719 = vset.pattern.permute.xlu0 1
        %1720 = vperm.xlu0 %1719, %v1634
        %v1721 = vpop.permute.xlu0 %1720
        %1724 = vset.pattern.permute.xlu0 1
        %1725 = vperm.xlu0 %1724, %v1635
        %v1726 = vpop.permute.xlu0 %1725
        %1729 = vset.pattern.permute.xlu0 1
        %1730 = vperm.xlu0 %1729, %v1636
        %v1731 = vpop.permute.xlu0 %1730
        %1734 = vset.pattern.permute.xlu0 1
        %1735 = vperm.xlu0 %1734, %v1637
        %v1736 = vpop.permute.xlu0 %1735
        %1739 = vset.pattern.permute.xlu0 1
        %1740 = vperm.xlu0 %1739, %v1638
        %v1741 = vpop.permute.xlu0 %1740
        %1744 = vset.pattern.permute.xlu0 1
        %1745 = vperm.xlu0 %1744, %v1639
        %v1746 = vpop.permute.xlu0 %1745
        %1749 = vset.pattern.permute.xlu0 1
        %1750 = vperm.xlu0 %1749, %v1640
        %v1751 = vpop.permute.xlu0 %1750
        %1754 = vset.pattern.permute.xlu0 1
        %1755 = vperm.xlu0 %1754, %v1641
        %v1756 = vpop.permute.xlu0 %1755
        %1759 = vset.pattern.permute.xlu0 1
        %1760 = vperm.xlu0 %1759, %v1642
        %v1761 = vpop.permute.xlu0 %1760
        %1764 = vset.pattern.permute.xlu0 1
        %1765 = vperm.xlu0 %1764, %v1643
        %v1766 = vpop.permute.xlu0 %1765
        %1769 = vset.pattern.permute.xlu0 1
        %1770 = vperm.xlu0 %1769, %v1644
        %v1771 = vpop.permute.xlu0 %1770
        %1774 = vset.pattern.permute.xlu0 1
        %1775 = vperm.xlu0 %1774, %v1645
        %v1776 = vpop.permute.xlu0 %1775
        %1779 = vset.pattern.permute.xlu0 1
        %1780 = vperm.xlu0 %1779, %v1646
        %v1781 = vpop.permute.xlu0 %1780
        %1784 = vset.pattern.permute.xlu0 1
        %1785 = vperm.xlu0 %1784, %v1647
        %v1786 = vpop.permute.xlu0 %1785
        %1789 = vset.pattern.permute.xlu0 1
        %1790 = vperm.xlu0 %1789, %v1648
        %v1791 = vpop.permute.xlu0 %1790
        %1794 = vset.pattern.permute.xlu0 1
        %1795 = vperm.xlu0 %1794, %v1649
        %v1796 = vpop.permute.xlu0 %1795
        %1799 = vset.pattern.permute.xlu0 1
        %1800 = vperm.xlu0 %1799, %v1650
        %v1801 = vpop.permute.xlu0 %1800
        %1804 = vset.pattern.permute.xlu0 1
        %1805 = vperm.xlu0 %1804, %v1651
        %v1806 = vpop.permute.xlu0 %1805
        %1809 = vset.pattern.permute.xlu0 1
        %1810 = vperm.xlu0 %1809, %v1652
        %v1811 = vpop.permute.xlu0 %1810
        %v1813 = vsel %vm1557, %v1656, 0.0
        %v1814 = vsel %vm1558, %v1656, 0.0
        %v1815 = vsel %vm1559, %v1661, 0.0
        %v1816 = vsel %vm1560, %v1661, 0.0
        %v1817 = vsel %vm1561, %v1666, 0.0
        %v1818 = vsel %vm1562, %v1666, 0.0
        %v1819 = vsel %vm1563, %v1671, 0.0
        %v1820 = vsel %vm1564, %v1671, 0.0
        %v1821 = vsel %vm1565, %v1676, 0.0
        %v1822 = vsel %vm1566, %v1676, 0.0
        %v1823 = vsel %vm1567, %v1681, 0.0
        %v1824 = vsel %vm1568, %v1681, 0.0
        %v1825 = vsel %vm1569, %v1686, 0.0
        %v1826 = vsel %vm1570, %v1686, 0.0
        %v1827 = vsel %vm1571, %v1691, 0.0
        %v1828 = vsel %vm1572, %v1691, 0.0
        %v1829 = vsel %vm1573, %v1696, 0.0
        %v1830 = vsel %vm1574, %v1696, 0.0
        %v1831 = vsel %vm1575, %v1701, 0.0
        %v1832 = vsel %vm1576, %v1701, 0.0
        %v1833 = vsel %vm1577, %v1706, 0.0
        %v1834 = vsel %vm1578, %v1706, 0.0
        %v1835 = vsel %vm1579, %v1711, 0.0
        %v1836 = vsel %vm1580, %v1711, 0.0
        %v1837 = vsel %vm1581, %v1716, 0.0
        %v1838 = vsel %vm1582, %v1716, 0.0
        %v1839 = vsel %vm1583, %v1721, 0.0
        %v1840 = vsel %vm1584, %v1721, 0.0
        %v1841 = vsel %vm1585, %v1726, 0.0
        %v1842 = vsel %vm1586, %v1726, 0.0
        %v1843 = vsel %vm1587, %v1731, 0.0
        %v1844 = vsel %vm1588, %v1731, 0.0
        %v1845 = vsel %vm1589, %v1736, 0.0
        %v1846 = vsel %vm1590, %v1736, 0.0
        %v1847 = vsel %vm1591, %v1741, 0.0
        %v1848 = vsel %vm1592, %v1741, 0.0
        %v1849 = vsel %vm1593, %v1746, 0.0
        %v1850 = vsel %vm1594, %v1746, 0.0
        %v1851 = vsel %vm1595, %v1751, 0.0
        %v1852 = vsel %vm1596, %v1751, 0.0
        %v1853 = vsel %vm1597, %v1756, 0.0
        %v1854 = vsel %vm1598, %v1756, 0.0
        %v1855 = vsel %vm1599, %v1761, 0.0
        %v1856 = vsel %vm1600, %v1761, 0.0
        %v1857 = vsel %vm1601, %v1766, 0.0
        %v1858 = vsel %vm1602, %v1766, 0.0
        %v1859 = vsel %vm1603, %v1771, 0.0
        %v1860 = vsel %vm1604, %v1771, 0.0
        %v1861 = vsel %vm1605, %v1776, 0.0
        %v1862 = vsel %vm1606, %v1776, 0.0
        %v1863 = vsel %vm1607, %v1781, 0.0
        %v1864 = vsel %vm1608, %v1781, 0.0
        %v1865 = vsel %vm1609, %v1786, 0.0
        %v1866 = vsel %vm1610, %v1786, 0.0
        %v1867 = vsel %vm1611, %v1791, 0.0
        %v1868 = vsel %vm1612, %v1791, 0.0
        %v1869 = vsel %vm1613, %v1796, 0.0
        %v1870 = vsel %vm1614, %v1796, 0.0
        %v1871 = vsel %vm1615, %v1801, 0.0
        %v1872 = vsel %vm1616, %v1801, 0.0
        %v1873 = vsel %vm1617, %v1806, 0.0
        %v1874 = vsel %vm1618, %v1806, 0.0
        %v1875 = vsel %vm1619, %v1811, 0.0
        %v1876 = vsel %vm1620, %v1811, 0.0
        %v1877 = vadd.f32 %v1333, %v1813
        %v1878 = vadd.f32 %v1334, %v1814
        %v1879 = vadd.f32 %v1335, %v1815
        %v1880 = vadd.f32 %v1336, %v1816
        %v1881 = vadd.f32 %v1337, %v1817
        %v1882 = vadd.f32 %v1338, %v1818
        %v1883 = vadd.f32 %v1339, %v1819
        %v1884 = vadd.f32 %v1340, %v1820
        %v1885 = vadd.f32 %v1341, %v1821
        %v1886 = vadd.f32 %v1342, %v1822
        %v1887 = vadd.f32 %v1343, %v1823
        %v1888 = vadd.f32 %v1344, %v1824
        %v1889 = vadd.f32 %v1345, %v1825
        %v1890 = vadd.f32 %v1346, %v1826
        %v1891 = vadd.f32 %v1347, %v1827
        %v1892 = vadd.f32 %v1348, %v1828
        %v1893 = vadd.f32 %v1349, %v1829
        %v1894 = vadd.f32 %v1350, %v1830
        %v1895 = vadd.f32 %v1351, %v1831
        %v1896 = vadd.f32 %v1352, %v1832
        %v1897 = vadd.f32 %v1353, %v1833
        %v1898 = vadd.f32 %v1354, %v1834
        %v1899 = vadd.f32 %v1355, %v1835
        %v1900 = vadd.f32 %v1356, %v1836
        %v1901 = vadd.f32 %v1357, %v1837
        %v1902 = vadd.f32 %v1358, %v1838
        %v1903 = vadd.f32 %v1359, %v1839
        %v1904 = vadd.f32 %v1360, %v1840
        %v1905 = vadd.f32 %v1361, %v1841
        %v1906 = vadd.f32 %v1362, %v1842
        %v1907 = vadd.f32 %v1363, %v1843
        %v1908 = vadd.f32 %v1364, %v1844
        %v1909 = vadd.f32 %v1365, %v1845
        %v1910 = vadd.f32 %v1366, %v1846
        %v1911 = vadd.f32 %v1367, %v1847
        %v1912 = vadd.f32 %v1368, %v1848
        %v1913 = vadd.f32 %v1369, %v1849
        %v1914 = vadd.f32 %v1370, %v1850
        %v1915 = vadd.f32 %v1371, %v1851
        %v1916 = vadd.f32 %v1372, %v1852
        %v1917 = vadd.f32 %v1373, %v1853
        %v1918 = vadd.f32 %v1374, %v1854
        %v1919 = vadd.f32 %v1375, %v1855
        %v1920 = vadd.f32 %v1376, %v1856
        %v1921 = vadd.f32 %v1377, %v1857
        %v1922 = vadd.f32 %v1378, %v1858
        %v1923 = vadd.f32 %v1379, %v1859
        %v1924 = vadd.f32 %v1380, %v1860
        %v1925 = vadd.f32 %v1381, %v1861
        %v1926 = vadd.f32 %v1382, %v1862
        %v1927 = vadd.f32 %v1383, %v1863
        %v1928 = vadd.f32 %v1384, %v1864
        %v1929 = vadd.f32 %v1385, %v1865
        %v1930 = vadd.f32 %v1386, %v1866
        %v1931 = vadd.f32 %v1387, %v1867
        %v1932 = vadd.f32 %v1388, %v1868
        %v1933 = vadd.f32 %v1389, %v1869
        %v1934 = vadd.f32 %v1390, %v1870
        %v1935 = vadd.f32 %v1391, %v1871
        %v1936 = vadd.f32 %v1392, %v1872
        %v1937 = vadd.f32 %v1393, %v1873
        %v1938 = vadd.f32 %v1394, %v1874
        %v1939 = vadd.f32 %v1395, %v1875
        %v1940 = vadd.f32 %v1396, %v1876
        %v1941 = vadd.f32 %v586, 0.0
        %v1942 = vadd.f32 %v587, 0.0
        %v1943 = vadd.f32 %v588, 0.0
        %v1944 = vadd.f32 %v589, 0.0
        %v1945 = vadd.f32 %v590, 0.0
        %v1946 = vadd.f32 %v591, 0.0
        %v1947 = vadd.f32 %v592, 0.0
        %v1948 = vadd.f32 %v593, 0.0
        %v1949 = vadd.f32 %v594, 0.0
        %v1950 = vadd.f32 %v595, 0.0
        %v1951 = vadd.f32 %v596, 0.0
        %v1952 = vadd.f32 %v597, 0.0
        %v1953 = vadd.f32 %v598, 0.0
        %v1954 = vadd.f32 %v599, 0.0
        %v1955 = vadd.f32 %v600, 0.0
        %v1956 = vadd.f32 %v601, 0.0
        %v1957 = vadd.f32 %v602, 0.0
        %v1958 = vadd.f32 %v603, 0.0
        %v1959 = vadd.f32 %v604, 0.0
        %v1960 = vadd.f32 %v605, 0.0
        %v1961 = vadd.f32 %v606, 0.0
        %v1962 = vadd.f32 %v607, 0.0
        %v1963 = vadd.f32 %v608, 0.0
        %v1964 = vadd.f32 %v609, 0.0
        %v1965 = vadd.f32 %v610, 0.0
        %v1966 = vadd.f32 %v611, 0.0
        %v1967 = vadd.f32 %v612, 0.0
        %v1968 = vadd.f32 %v613, 0.0
        %v1969 = vadd.f32 %v614, 0.0
        %v1970 = vadd.f32 %v615, 0.0
        %v1971 = vadd.f32 %v616, 0.0
        %v1972 = vadd.f32 %v617, 0.0
        %v1974 = vlaneseq
        %v1975 = vshrl.u32 %v1974, 7
        %v1976 = vsub.s32 0, %v1975
        %v1977 = vrot.slane %v265, %v1976
        %v1978 = vlaneseq
        %v1979 = vshrl.u32 %v1978, 7
        %v1980 = vsub.s32 1, %v1979
        %v1981 = vrot.slane %v265, %v1980
        %1984 = vset.pattern.permute.xlu0 0
        %1985 = vperm.xlu0 %1984, %v682
        %v1986 = vpop.permute.xlu0 %1985
        %1988 = vset.pattern.permute.xlu0 0
        %1989 = vperm.xlu0 %1988, %v683
        %v1990 = vpop.permute.xlu0 %1989
        %1992 = vset.pattern.permute.xlu0 0
        %1993 = vperm.xlu0 %1992, %v684
        %v1994 = vpop.permute.xlu0 %1993
        %1996 = vset.pattern.permute.xlu0 0
        %1997 = vperm.xlu0 %1996, %v685
        %v1998 = vpop.permute.xlu0 %1997
        %2000 = vset.pattern.permute.xlu0 0
        %2001 = vperm.xlu0 %2000, %v686
        %v2002 = vpop.permute.xlu0 %2001
        %2004 = vset.pattern.permute.xlu0 0
        %2005 = vperm.xlu0 %2004, %v687
        %v2006 = vpop.permute.xlu0 %2005
        %2008 = vset.pattern.permute.xlu0 0
        %2009 = vperm.xlu0 %2008, %v688
        %v2010 = vpop.permute.xlu0 %2009
        %2012 = vset.pattern.permute.xlu0 0
        %2013 = vperm.xlu0 %2012, %v689
        %v2014 = vpop.permute.xlu0 %2013
        %2016 = vset.pattern.permute.xlu0 0
        %2017 = vperm.xlu0 %2016, %v690
        %v2018 = vpop.permute.xlu0 %2017
        %2020 = vset.pattern.permute.xlu0 0
        %2021 = vperm.xlu0 %2020, %v691
        %v2022 = vpop.permute.xlu0 %2021
        %2024 = vset.pattern.permute.xlu0 0
        %2025 = vperm.xlu0 %2024, %v692
        %v2026 = vpop.permute.xlu0 %2025
        %2028 = vset.pattern.permute.xlu0 0
        %2029 = vperm.xlu0 %2028, %v693
        %v2030 = vpop.permute.xlu0 %2029
        %2032 = vset.pattern.permute.xlu0 0
        %2033 = vperm.xlu0 %2032, %v694
        %v2034 = vpop.permute.xlu0 %2033
        %2036 = vset.pattern.permute.xlu0 0
        %2037 = vperm.xlu0 %2036, %v695
        %v2038 = vpop.permute.xlu0 %2037
        %2040 = vset.pattern.permute.xlu0 0
        %2041 = vperm.xlu0 %2040, %v696
        %v2042 = vpop.permute.xlu0 %2041
        %2044 = vset.pattern.permute.xlu0 0
        %2045 = vperm.xlu0 %2044, %v697
        %v2046 = vpop.permute.xlu0 %2045
        %2048 = vset.pattern.permute.xlu0 0
        %2049 = vperm.xlu0 %2048, %v698
        %v2050 = vpop.permute.xlu0 %2049
        %2052 = vset.pattern.permute.xlu0 0
        %2053 = vperm.xlu0 %2052, %v699
        %v2054 = vpop.permute.xlu0 %2053
        %2056 = vset.pattern.permute.xlu0 0
        %2057 = vperm.xlu0 %2056, %v700
        %v2058 = vpop.permute.xlu0 %2057
        %2060 = vset.pattern.permute.xlu0 0
        %2061 = vperm.xlu0 %2060, %v701
        %v2062 = vpop.permute.xlu0 %2061
        %2064 = vset.pattern.permute.xlu0 0
        %2065 = vperm.xlu0 %2064, %v702
        %v2066 = vpop.permute.xlu0 %2065
        %2068 = vset.pattern.permute.xlu0 0
        %2069 = vperm.xlu0 %2068, %v703
        %v2070 = vpop.permute.xlu0 %2069
        %2072 = vset.pattern.permute.xlu0 0
        %2073 = vperm.xlu0 %2072, %v704
        %v2074 = vpop.permute.xlu0 %2073
        %2076 = vset.pattern.permute.xlu0 0
        %2077 = vperm.xlu0 %2076, %v705
        %v2078 = vpop.permute.xlu0 %2077
        %2080 = vset.pattern.permute.xlu0 0
        %2081 = vperm.xlu0 %2080, %v706
        %v2082 = vpop.permute.xlu0 %2081
        %2084 = vset.pattern.permute.xlu0 0
        %2085 = vperm.xlu0 %2084, %v707
        %v2086 = vpop.permute.xlu0 %2085
        %2088 = vset.pattern.permute.xlu0 0
        %2089 = vperm.xlu0 %2088, %v708
        %v2090 = vpop.permute.xlu0 %2089
        %2092 = vset.pattern.permute.xlu0 0
        %2093 = vperm.xlu0 %2092, %v709
        %v2094 = vpop.permute.xlu0 %2093
        %2096 = vset.pattern.permute.xlu0 0
        %2097 = vperm.xlu0 %2096, %v710
        %v2098 = vpop.permute.xlu0 %2097
        %2100 = vset.pattern.permute.xlu0 0
        %2101 = vperm.xlu0 %2100, %v711
        %v2102 = vpop.permute.xlu0 %2101
        %2104 = vset.pattern.permute.xlu0 0
        %2105 = vperm.xlu0 %2104, %v712
        %v2106 = vpop.permute.xlu0 %2105
        %2108 = vset.pattern.permute.xlu0 0
        %2109 = vperm.xlu0 %2108, %v713
        %v2110 = vpop.permute.xlu0 %2109
        %vm2112 = vcmp.eq.f32.partialorder %v1977, %v1986
        %vm2113 = vcmp.eq.f32.partialorder %v1981, %v1986
        %vm2114 = vcmp.eq.f32.partialorder %v1977, %v1990
        %vm2115 = vcmp.eq.f32.partialorder %v1981, %v1990
        %vm2116 = vcmp.eq.f32.partialorder %v1977, %v1994
        %vm2117 = vcmp.eq.f32.partialorder %v1981, %v1994
        %vm2118 = vcmp.eq.f32.partialorder %v1977, %v1998
        %vm2119 = vcmp.eq.f32.partialorder %v1981, %v1998
        %vm2120 = vcmp.eq.f32.partialorder %v1977, %v2002
        %vm2121 = vcmp.eq.f32.partialorder %v1981, %v2002
        %vm2122 = vcmp.eq.f32.partialorder %v1977, %v2006
        %vm2123 = vcmp.eq.f32.partialorder %v1981, %v2006
        %vm2124 = vcmp.eq.f32.partialorder %v1977, %v2010
        %vm2125 = vcmp.eq.f32.partialorder %v1981, %v2010
        %vm2126 = vcmp.eq.f32.partialorder %v1977, %v2014
        %vm2127 = vcmp.eq.f32.partialorder %v1981, %v2014
        %vm2128 = vcmp.eq.f32.partialorder %v1977, %v2018
        %vm2129 = vcmp.eq.f32.partialorder %v1981, %v2018
        %vm2130 = vcmp.eq.f32.partialorder %v1977, %v2022
        %vm2131 = vcmp.eq.f32.partialorder %v1981, %v2022
        %vm2132 = vcmp.eq.f32.partialorder %v1977, %v2026
        %vm2133 = vcmp.eq.f32.partialorder %v1981, %v2026
        %vm2134 = vcmp.eq.f32.partialorder %v1977, %v2030
        %vm2135 = vcmp.eq.f32.partialorder %v1981, %v2030
        %vm2136 = vcmp.eq.f32.partialorder %v1977, %v2034
        %vm2137 = vcmp.eq.f32.partialorder %v1981, %v2034
        %vm2138 = vcmp.eq.f32.partialorder %v1977, %v2038
        %vm2139 = vcmp.eq.f32.partialorder %v1981, %v2038
        %vm2140 = vcmp.eq.f32.partialorder %v1977, %v2042
        %vm2141 = vcmp.eq.f32.partialorder %v1981, %v2042
        %vm2142 = vcmp.eq.f32.partialorder %v1977, %v2046
        %vm2143 = vcmp.eq.f32.partialorder %v1981, %v2046
        %vm2144 = vcmp.eq.f32.partialorder %v1977, %v2050
        %vm2145 = vcmp.eq.f32.partialorder %v1981, %v2050
        %vm2146 = vcmp.eq.f32.partialorder %v1977, %v2054
        %vm2147 = vcmp.eq.f32.partialorder %v1981, %v2054
        %vm2148 = vcmp.eq.f32.partialorder %v1977, %v2058
        %vm2149 = vcmp.eq.f32.partialorder %v1981, %v2058
        %vm2150 = vcmp.eq.f32.partialorder %v1977, %v2062
        %vm2151 = vcmp.eq.f32.partialorder %v1981, %v2062
        %vm2152 = vcmp.eq.f32.partialorder %v1977, %v2066
        %vm2153 = vcmp.eq.f32.partialorder %v1981, %v2066
        %vm2154 = vcmp.eq.f32.partialorder %v1977, %v2070
        %vm2155 = vcmp.eq.f32.partialorder %v1981, %v2070
        %vm2156 = vcmp.eq.f32.partialorder %v1977, %v2074
        %vm2157 = vcmp.eq.f32.partialorder %v1981, %v2074
        %vm2158 = vcmp.eq.f32.partialorder %v1977, %v2078
        %vm2159 = vcmp.eq.f32.partialorder %v1981, %v2078
        %vm2160 = vcmp.eq.f32.partialorder %v1977, %v2082
        %vm2161 = vcmp.eq.f32.partialorder %v1981, %v2082
        %vm2162 = vcmp.eq.f32.partialorder %v1977, %v2086
        %vm2163 = vcmp.eq.f32.partialorder %v1981, %v2086
        %vm2164 = vcmp.eq.f32.partialorder %v1977, %v2090
        %vm2165 = vcmp.eq.f32.partialorder %v1981, %v2090
        %vm2166 = vcmp.eq.f32.partialorder %v1977, %v2094
        %vm2167 = vcmp.eq.f32.partialorder %v1981, %v2094
        %vm2168 = vcmp.eq.f32.partialorder %v1977, %v2098
        %vm2169 = vcmp.eq.f32.partialorder %v1981, %v2098
        %vm2170 = vcmp.eq.f32.partialorder %v1977, %v2102
        %vm2171 = vcmp.eq.f32.partialorder %v1981, %v2102
        %vm2172 = vcmp.eq.f32.partialorder %v1977, %v2106
        %vm2173 = vcmp.eq.f32.partialorder %v1981, %v2106
        %vm2174 = vcmp.eq.f32.partialorder %v1977, %v2110
        %vm2175 = vcmp.eq.f32.partialorder %v1981, %v2110
        %2176 = vset.pattern.permute.xlu0 0
        %2177 = vperm.xlu0 %2176, %v1077
        %v2178 = vpop.permute.xlu0 %2177
        %2180 = vset.pattern.permute.xlu0 0
        %2181 = vperm.xlu0 %2180, %v1078
        %v2182 = vpop.permute.xlu0 %2181
        %2184 = vset.pattern.permute.xlu0 0
        %2185 = vperm.xlu0 %2184, %v1079
        %v2186 = vpop.permute.xlu0 %2185
        %2188 = vset.pattern.permute.xlu0 0
        %2189 = vperm.xlu0 %2188, %v1080
        %v2190 = vpop.permute.xlu0 %2189
        %2192 = vset.pattern.permute.xlu0 0
        %2193 = vperm.xlu0 %2192, %v1081
        %v2194 = vpop.permute.xlu0 %2193
        %2196 = vset.pattern.permute.xlu0 0
        %2197 = vperm.xlu0 %2196, %v1082
        %v2198 = vpop.permute.xlu0 %2197
        %2200 = vset.pattern.permute.xlu0 0
        %2201 = vperm.xlu0 %2200, %v1083
        %v2202 = vpop.permute.xlu0 %2201
        %2204 = vset.pattern.permute.xlu0 0
        %2205 = vperm.xlu0 %2204, %v1084
        %v2206 = vpop.permute.xlu0 %2205
        %2208 = vset.pattern.permute.xlu0 0
        %2209 = vperm.xlu0 %2208, %v1085
        %v2210 = vpop.permute.xlu0 %2209
        %2212 = vset.pattern.permute.xlu0 0
        %2213 = vperm.xlu0 %2212, %v1086
        %v2214 = vpop.permute.xlu0 %2213
        %2216 = vset.pattern.permute.xlu0 0
        %2217 = vperm.xlu0 %2216, %v1087
        %v2218 = vpop.permute.xlu0 %2217
        %2220 = vset.pattern.permute.xlu0 0
        %2221 = vperm.xlu0 %2220, %v1088
        %v2222 = vpop.permute.xlu0 %2221
        %2224 = vset.pattern.permute.xlu0 0
        %2225 = vperm.xlu0 %2224, %v1089
        %v2226 = vpop.permute.xlu0 %2225
        %2228 = vset.pattern.permute.xlu0 0
        %2229 = vperm.xlu0 %2228, %v1090
        %v2230 = vpop.permute.xlu0 %2229
        %2232 = vset.pattern.permute.xlu0 0
        %2233 = vperm.xlu0 %2232, %v1091
        %v2234 = vpop.permute.xlu0 %2233
        %2236 = vset.pattern.permute.xlu0 0
        %2237 = vperm.xlu0 %2236, %v1092
        %v2238 = vpop.permute.xlu0 %2237
        %2240 = vset.pattern.permute.xlu0 0
        %2241 = vperm.xlu0 %2240, %v1093
        %v2242 = vpop.permute.xlu0 %2241
        %2244 = vset.pattern.permute.xlu0 0
        %2245 = vperm.xlu0 %2244, %v1094
        %v2246 = vpop.permute.xlu0 %2245
        %2248 = vset.pattern.permute.xlu0 0
        %2249 = vperm.xlu0 %2248, %v1095
        %v2250 = vpop.permute.xlu0 %2249
        %2252 = vset.pattern.permute.xlu0 0
        %2253 = vperm.xlu0 %2252, %v1096
        %v2254 = vpop.permute.xlu0 %2253
        %2256 = vset.pattern.permute.xlu0 0
        %2257 = vperm.xlu0 %2256, %v1097
        %v2258 = vpop.permute.xlu0 %2257
        %2260 = vset.pattern.permute.xlu0 0
        %2261 = vperm.xlu0 %2260, %v1098
        %v2262 = vpop.permute.xlu0 %2261
        %2264 = vset.pattern.permute.xlu0 0
        %2265 = vperm.xlu0 %2264, %v1099
        %v2266 = vpop.permute.xlu0 %2265
        %2268 = vset.pattern.permute.xlu0 0
        %2269 = vperm.xlu0 %2268, %v1100
        %v2270 = vpop.permute.xlu0 %2269
        %2272 = vset.pattern.permute.xlu0 0
        %2273 = vperm.xlu0 %2272, %v1101
        %v2274 = vpop.permute.xlu0 %2273
        %2276 = vset.pattern.permute.xlu0 0
        %2277 = vperm.xlu0 %2276, %v1102
        %v2278 = vpop.permute.xlu0 %2277
        %2280 = vset.pattern.permute.xlu0 0
        %2281 = vperm.xlu0 %2280, %v1103
        %v2282 = vpop.permute.xlu0 %2281
        %2284 = vset.pattern.permute.xlu0 0
        %2285 = vperm.xlu0 %2284, %v1104
        %v2286 = vpop.permute.xlu0 %2285
        %2288 = vset.pattern.permute.xlu0 0
        %2289 = vperm.xlu0 %2288, %v1105
        %v2290 = vpop.permute.xlu0 %2289
        %2292 = vset.pattern.permute.xlu0 0
        %2293 = vperm.xlu0 %2292, %v1106
        %v2294 = vpop.permute.xlu0 %2293
        %2296 = vset.pattern.permute.xlu0 0
        %2297 = vperm.xlu0 %2296, %v1107
        %v2298 = vpop.permute.xlu0 %2297
        %2300 = vset.pattern.permute.xlu0 0
        %2301 = vperm.xlu0 %2300, %v1108
        %v2302 = vpop.permute.xlu0 %2301
        %v2304 = vsel %vm2112, %v2178, 0.0
        %v2305 = vsel %vm2113, %v2178, 0.0
        %v2306 = vsel %vm2114, %v2182, 0.0
        %v2307 = vsel %vm2115, %v2182, 0.0
        %v2308 = vsel %vm2116, %v2186, 0.0
        %v2309 = vsel %vm2117, %v2186, 0.0
        %v2310 = vsel %vm2118, %v2190, 0.0
        %v2311 = vsel %vm2119, %v2190, 0.0
        %v2312 = vsel %vm2120, %v2194, 0.0
        %v2313 = vsel %vm2121, %v2194, 0.0
        %v2314 = vsel %vm2122, %v2198, 0.0
        %v2315 = vsel %vm2123, %v2198, 0.0
        %v2316 = vsel %vm2124, %v2202, 0.0
        %v2317 = vsel %vm2125, %v2202, 0.0
        %v2318 = vsel %vm2126, %v2206, 0.0
        %v2319 = vsel %vm2127, %v2206, 0.0
        %v2320 = vsel %vm2128, %v2210, 0.0
        %v2321 = vsel %vm2129, %v2210, 0.0
        %v2322 = vsel %vm2130, %v2214, 0.0
        %v2323 = vsel %vm2131, %v2214, 0.0
        %v2324 = vsel %vm2132, %v2218, 0.0
        %v2325 = vsel %vm2133, %v2218, 0.0
        %v2326 = vsel %vm2134, %v2222, 0.0
        %v2327 = vsel %vm2135, %v2222, 0.0
        %v2328 = vsel %vm2136, %v2226, 0.0
        %v2329 = vsel %vm2137, %v2226, 0.0
        %v2330 = vsel %vm2138, %v2230, 0.0
        %v2331 = vsel %vm2139, %v2230, 0.0
        %v2332 = vsel %vm2140, %v2234, 0.0
        %v2333 = vsel %vm2141, %v2234, 0.0
        %v2334 = vsel %vm2142, %v2238, 0.0
        %v2335 = vsel %vm2143, %v2238, 0.0
        %v2336 = vsel %vm2144, %v2242, 0.0
        %v2337 = vsel %vm2145, %v2242, 0.0
        %v2338 = vsel %vm2146, %v2246, 0.0
        %v2339 = vsel %vm2147, %v2246, 0.0
        %v2340 = vsel %vm2148, %v2250, 0.0
        %v2341 = vsel %vm2149, %v2250, 0.0
        %v2342 = vsel %vm2150, %v2254, 0.0
        %v2343 = vsel %vm2151, %v2254, 0.0
        %v2344 = vsel %vm2152, %v2258, 0.0
        %v2345 = vsel %vm2153, %v2258, 0.0
        %v2346 = vsel %vm2154, %v2262, 0.0
        %v2347 = vsel %vm2155, %v2262, 0.0
        %v2348 = vsel %vm2156, %v2266, 0.0
        %v2349 = vsel %vm2157, %v2266, 0.0
        %v2350 = vsel %vm2158, %v2270, 0.0
        %v2351 = vsel %vm2159, %v2270, 0.0
        %v2352 = vsel %vm2160, %v2274, 0.0
        %v2353 = vsel %vm2161, %v2274, 0.0
        %v2354 = vsel %vm2162, %v2278, 0.0
        %v2355 = vsel %vm2163, %v2278, 0.0
        %v2356 = vsel %vm2164, %v2282, 0.0
        %v2357 = vsel %vm2165, %v2282, 0.0
        %v2358 = vsel %vm2166, %v2286, 0.0
        %v2359 = vsel %vm2167, %v2286, 0.0
        %v2360 = vsel %vm2168, %v2290, 0.0
        %v2361 = vsel %vm2169, %v2290, 0.0
        %v2362 = vsel %vm2170, %v2294, 0.0
        %v2363 = vsel %vm2171, %v2294, 0.0
        %v2364 = vsel %vm2172, %v2298, 0.0
        %v2365 = vsel %vm2173, %v2298, 0.0
        %v2366 = vsel %vm2174, %v2302, 0.0
        %v2367 = vsel %vm2175, %v2302, 0.0
        %v2368 = vadd.f32 %v2304, 0.0
        %v2369 = vadd.f32 %v2305, 0.0
        %v2370 = vadd.f32 %v2306, 0.0
        %v2371 = vadd.f32 %v2307, 0.0
        %v2372 = vadd.f32 %v2308, 0.0
        %v2373 = vadd.f32 %v2309, 0.0
        %v2374 = vadd.f32 %v2310, 0.0
        %v2375 = vadd.f32 %v2311, 0.0
        %v2376 = vadd.f32 %v2312, 0.0
        %v2377 = vadd.f32 %v2313, 0.0
        %v2378 = vadd.f32 %v2314, 0.0
        %v2379 = vadd.f32 %v2315, 0.0
        %v2380 = vadd.f32 %v2316, 0.0
        %v2381 = vadd.f32 %v2317, 0.0
        %v2382 = vadd.f32 %v2318, 0.0
        %v2383 = vadd.f32 %v2319, 0.0
        %v2384 = vadd.f32 %v2320, 0.0
        %v2385 = vadd.f32 %v2321, 0.0
        %v2386 = vadd.f32 %v2322, 0.0
        %v2387 = vadd.f32 %v2323, 0.0
        %v2388 = vadd.f32 %v2324, 0.0
        %v2389 = vadd.f32 %v2325, 0.0
        %v2390 = vadd.f32 %v2326, 0.0
        %v2391 = vadd.f32 %v2327, 0.0
        %v2392 = vadd.f32 %v2328, 0.0
        %v2393 = vadd.f32 %v2329, 0.0
        %v2394 = vadd.f32 %v2330, 0.0
        %v2395 = vadd.f32 %v2331, 0.0
        %v2396 = vadd.f32 %v2332, 0.0
        %v2397 = vadd.f32 %v2333, 0.0
        %v2398 = vadd.f32 %v2334, 0.0
        %v2399 = vadd.f32 %v2335, 0.0
        %v2400 = vadd.f32 %v2336, 0.0
        %v2401 = vadd.f32 %v2337, 0.0
        %v2402 = vadd.f32 %v2338, 0.0
        %v2403 = vadd.f32 %v2339, 0.0
        %v2404 = vadd.f32 %v2340, 0.0
        %v2405 = vadd.f32 %v2341, 0.0
        %v2406 = vadd.f32 %v2342, 0.0
        %v2407 = vadd.f32 %v2343, 0.0
        %v2408 = vadd.f32 %v2344, 0.0
        %v2409 = vadd.f32 %v2345, 0.0
        %v2410 = vadd.f32 %v2346, 0.0
        %v2411 = vadd.f32 %v2347, 0.0
        %v2412 = vadd.f32 %v2348, 0.0
        %v2413 = vadd.f32 %v2349, 0.0
        %v2414 = vadd.f32 %v2350, 0.0
        %v2415 = vadd.f32 %v2351, 0.0
        %v2416 = vadd.f32 %v2352, 0.0
        %v2417 = vadd.f32 %v2353, 0.0
        %v2418 = vadd.f32 %v2354, 0.0
        %v2419 = vadd.f32 %v2355, 0.0
        %v2420 = vadd.f32 %v2356, 0.0
        %v2421 = vadd.f32 %v2357, 0.0
        %v2422 = vadd.f32 %v2358, 0.0
        %v2423 = vadd.f32 %v2359, 0.0
        %v2424 = vadd.f32 %v2360, 0.0
        %v2425 = vadd.f32 %v2361, 0.0
        %v2426 = vadd.f32 %v2362, 0.0
        %v2427 = vadd.f32 %v2363, 0.0
        %v2428 = vadd.f32 %v2364, 0.0
        %v2429 = vadd.f32 %v2365, 0.0
        %v2430 = vadd.f32 %v2366, 0.0
        %v2431 = vadd.f32 %v2367, 0.0
        %2432 = vset.pattern.permute.xlu0 0
        %2433 = vperm.xlu0 %2432, %v778
        %v2434 = vpop.permute.xlu0 %2433
        %2436 = vset.pattern.permute.xlu0 0
        %2437 = vperm.xlu0 %2436, %v779
        %v2438 = vpop.permute.xlu0 %2437
        %2440 = vset.pattern.permute.xlu0 0
        %2441 = vperm.xlu0 %2440, %v780
        %v2442 = vpop.permute.xlu0 %2441
        %2444 = vset.pattern.permute.xlu0 0
        %2445 = vperm.xlu0 %2444, %v781
        %v2446 = vpop.permute.xlu0 %2445
        %2448 = vset.pattern.permute.xlu0 0
        %2449 = vperm.xlu0 %2448, %v782
        %v2450 = vpop.permute.xlu0 %2449
        %2452 = vset.pattern.permute.xlu0 0
        %2453 = vperm.xlu0 %2452, %v783
        %v2454 = vpop.permute.xlu0 %2453
        %2456 = vset.pattern.permute.xlu0 0
        %2457 = vperm.xlu0 %2456, %v784
        %v2458 = vpop.permute.xlu0 %2457
        %2460 = vset.pattern.permute.xlu0 0
        %2461 = vperm.xlu0 %2460, %v785
        %v2462 = vpop.permute.xlu0 %2461
        %2464 = vset.pattern.permute.xlu0 0
        %2465 = vperm.xlu0 %2464, %v786
        %v2466 = vpop.permute.xlu0 %2465
        %2468 = vset.pattern.permute.xlu0 0
        %2469 = vperm.xlu0 %2468, %v787
        %v2470 = vpop.permute.xlu0 %2469
        %2472 = vset.pattern.permute.xlu0 0
        %2473 = vperm.xlu0 %2472, %v788
        %v2474 = vpop.permute.xlu0 %2473
        %2476 = vset.pattern.permute.xlu0 0
        %2477 = vperm.xlu0 %2476, %v789
        %v2478 = vpop.permute.xlu0 %2477
        %2480 = vset.pattern.permute.xlu0 0
        %2481 = vperm.xlu0 %2480, %v790
        %v2482 = vpop.permute.xlu0 %2481
        %2484 = vset.pattern.permute.xlu0 0
        %2485 = vperm.xlu0 %2484, %v791
        %v2486 = vpop.permute.xlu0 %2485
        %2488 = vset.pattern.permute.xlu0 0
        %2489 = vperm.xlu0 %2488, %v792
        %v2490 = vpop.permute.xlu0 %2489
        %2492 = vset.pattern.permute.xlu0 0
        %2493 = vperm.xlu0 %2492, %v793
        %v2494 = vpop.permute.xlu0 %2493
        %2496 = vset.pattern.permute.xlu0 0
        %2497 = vperm.xlu0 %2496, %v794
        %v2498 = vpop.permute.xlu0 %2497
        %2500 = vset.pattern.permute.xlu0 0
        %2501 = vperm.xlu0 %2500, %v795
        %v2502 = vpop.permute.xlu0 %2501
        %2504 = vset.pattern.permute.xlu0 0
        %2505 = vperm.xlu0 %2504, %v796
        %v2506 = vpop.permute.xlu0 %2505
        %2508 = vset.pattern.permute.xlu0 0
        %2509 = vperm.xlu0 %2508, %v797
        %v2510 = vpop.permute.xlu0 %2509
        %2512 = vset.pattern.permute.xlu0 0
        %2513 = vperm.xlu0 %2512, %v798
        %v2514 = vpop.permute.xlu0 %2513
        %2516 = vset.pattern.permute.xlu0 0
        %2517 = vperm.xlu0 %2516, %v799
        %v2518 = vpop.permute.xlu0 %2517
        %2520 = vset.pattern.permute.xlu0 0
        %2521 = vperm.xlu0 %2520, %v800
        %v2522 = vpop.permute.xlu0 %2521
        %2524 = vset.pattern.permute.xlu0 0
        %2525 = vperm.xlu0 %2524, %v801
        %v2526 = vpop.permute.xlu0 %2525
        %2528 = vset.pattern.permute.xlu0 0
        %2529 = vperm.xlu0 %2528, %v802
        %v2530 = vpop.permute.xlu0 %2529
        %2532 = vset.pattern.permute.xlu0 0
        %2533 = vperm.xlu0 %2532, %v803
        %v2534 = vpop.permute.xlu0 %2533
        %2536 = vset.pattern.permute.xlu0 0
        %2537 = vperm.xlu0 %2536, %v804
        %v2538 = vpop.permute.xlu0 %2537
        %2540 = vset.pattern.permute.xlu0 0
        %2541 = vperm.xlu0 %2540, %v805
        %v2542 = vpop.permute.xlu0 %2541
        %2544 = vset.pattern.permute.xlu0 0
        %2545 = vperm.xlu0 %2544, %v806
        %v2546 = vpop.permute.xlu0 %2545
        %2548 = vset.pattern.permute.xlu0 0
        %2549 = vperm.xlu0 %2548, %v807
        %v2550 = vpop.permute.xlu0 %2549
        %2552 = vset.pattern.permute.xlu0 0
        %2553 = vperm.xlu0 %2552, %v808
        %v2554 = vpop.permute.xlu0 %2553
        %2556 = vset.pattern.permute.xlu0 0
        %2557 = vperm.xlu0 %2556, %v809
        %v2558 = vpop.permute.xlu0 %2557
        %vm2560 = vcmp.eq.f32.partialorder %v1977, %v2434
        %vm2561 = vcmp.eq.f32.partialorder %v1981, %v2434
        %vm2562 = vcmp.eq.f32.partialorder %v1977, %v2438
        %vm2563 = vcmp.eq.f32.partialorder %v1981, %v2438
        %vm2564 = vcmp.eq.f32.partialorder %v1977, %v2442
        %vm2565 = vcmp.eq.f32.partialorder %v1981, %v2442
        %vm2566 = vcmp.eq.f32.partialorder %v1977, %v2446
        %vm2567 = vcmp.eq.f32.partialorder %v1981, %v2446
        %vm2568 = vcmp.eq.f32.partialorder %v1977, %v2450
        %vm2569 = vcmp.eq.f32.partialorder %v1981, %v2450
        %vm2570 = vcmp.eq.f32.partialorder %v1977, %v2454
        %vm2571 = vcmp.eq.f32.partialorder %v1981, %v2454
        %vm2572 = vcmp.eq.f32.partialorder %v1977, %v2458
        %vm2573 = vcmp.eq.f32.partialorder %v1981, %v2458
        %vm2574 = vcmp.eq.f32.partialorder %v1977, %v2462
        %vm2575 = vcmp.eq.f32.partialorder %v1981, %v2462
        %vm2576 = vcmp.eq.f32.partialorder %v1977, %v2466
        %vm2577 = vcmp.eq.f32.partialorder %v1981, %v2466
        %vm2578 = vcmp.eq.f32.partialorder %v1977, %v2470
        %vm2579 = vcmp.eq.f32.partialorder %v1981, %v2470
        %vm2580 = vcmp.eq.f32.partialorder %v1977, %v2474
        %vm2581 = vcmp.eq.f32.partialorder %v1981, %v2474
        %vm2582 = vcmp.eq.f32.partialorder %v1977, %v2478
        %vm2583 = vcmp.eq.f32.partialorder %v1981, %v2478
        %vm2584 = vcmp.eq.f32.partialorder %v1977, %v2482
        %vm2585 = vcmp.eq.f32.partialorder %v1981, %v2482
        %vm2586 = vcmp.eq.f32.partialorder %v1977, %v2486
        %vm2587 = vcmp.eq.f32.partialorder %v1981, %v2486
        %vm2588 = vcmp.eq.f32.partialorder %v1977, %v2490
        %vm2589 = vcmp.eq.f32.partialorder %v1981, %v2490
        %vm2590 = vcmp.eq.f32.partialorder %v1977, %v2494
        %vm2591 = vcmp.eq.f32.partialorder %v1981, %v2494
        %vm2592 = vcmp.eq.f32.partialorder %v1977, %v2498
        %vm2593 = vcmp.eq.f32.partialorder %v1981, %v2498
        %vm2594 = vcmp.eq.f32.partialorder %v1977, %v2502
        %vm2595 = vcmp.eq.f32.partialorder %v1981, %v2502
        %vm2596 = vcmp.eq.f32.partialorder %v1977, %v2506
        %vm2597 = vcmp.eq.f32.partialorder %v1981, %v2506
        %vm2598 = vcmp.eq.f32.partialorder %v1977, %v2510
        %vm2599 = vcmp.eq.f32.partialorder %v1981, %v2510
        %vm2600 = vcmp.eq.f32.partialorder %v1977, %v2514
        %vm2601 = vcmp.eq.f32.partialorder %v1981, %v2514
        %vm2602 = vcmp.eq.f32.partialorder %v1977, %v2518
        %vm2603 = vcmp.eq.f32.partialorder %v1981, %v2518
        %vm2604 = vcmp.eq.f32.partialorder %v1977, %v2522
        %vm2605 = vcmp.eq.f32.partialorder %v1981, %v2522
        %vm2606 = vcmp.eq.f32.partialorder %v1977, %v2526
        %vm2607 = vcmp.eq.f32.partialorder %v1981, %v2526
        %vm2608 = vcmp.eq.f32.partialorder %v1977, %v2530
        %vm2609 = vcmp.eq.f32.partialorder %v1981, %v2530
        %vm2610 = vcmp.eq.f32.partialorder %v1977, %v2534
        %vm2611 = vcmp.eq.f32.partialorder %v1981, %v2534
        %vm2612 = vcmp.eq.f32.partialorder %v1977, %v2538
        %vm2613 = vcmp.eq.f32.partialorder %v1981, %v2538
        %vm2614 = vcmp.eq.f32.partialorder %v1977, %v2542
        %vm2615 = vcmp.eq.f32.partialorder %v1981, %v2542
        %vm2616 = vcmp.eq.f32.partialorder %v1977, %v2546
        %vm2617 = vcmp.eq.f32.partialorder %v1981, %v2546
        %vm2618 = vcmp.eq.f32.partialorder %v1977, %v2550
        %vm2619 = vcmp.eq.f32.partialorder %v1981, %v2550
        %vm2620 = vcmp.eq.f32.partialorder %v1977, %v2554
        %vm2621 = vcmp.eq.f32.partialorder %v1981, %v2554
        %vm2622 = vcmp.eq.f32.partialorder %v1977, %v2558
        %vm2623 = vcmp.eq.f32.partialorder %v1981, %v2558
        %2624 = vset.pattern.permute.xlu0 0
        %2625 = vperm.xlu0 %2624, %v1621
        %v2626 = vpop.permute.xlu0 %2625
        %2628 = vset.pattern.permute.xlu0 0
        %2629 = vperm.xlu0 %2628, %v1622
        %v2630 = vpop.permute.xlu0 %2629
        %2632 = vset.pattern.permute.xlu0 0
        %2633 = vperm.xlu0 %2632, %v1623
        %v2634 = vpop.permute.xlu0 %2633
        %2636 = vset.pattern.permute.xlu0 0
        %2637 = vperm.xlu0 %2636, %v1624
        %v2638 = vpop.permute.xlu0 %2637
        %2640 = vset.pattern.permute.xlu0 0
        %2641 = vperm.xlu0 %2640, %v1625
        %v2642 = vpop.permute.xlu0 %2641
        %2644 = vset.pattern.permute.xlu0 0
        %2645 = vperm.xlu0 %2644, %v1626
        %v2646 = vpop.permute.xlu0 %2645
        %2648 = vset.pattern.permute.xlu0 0
        %2649 = vperm.xlu0 %2648, %v1627
        %v2650 = vpop.permute.xlu0 %2649
        %2652 = vset.pattern.permute.xlu0 0
        %2653 = vperm.xlu0 %2652, %v1628
        %v2654 = vpop.permute.xlu0 %2653
        %2656 = vset.pattern.permute.xlu0 0
        %2657 = vperm.xlu0 %2656, %v1629
        %v2658 = vpop.permute.xlu0 %2657
        %2660 = vset.pattern.permute.xlu0 0
        %2661 = vperm.xlu0 %2660, %v1630
        %v2662 = vpop.permute.xlu0 %2661
        %2664 = vset.pattern.permute.xlu0 0
        %2665 = vperm.xlu0 %2664, %v1631
        %v2666 = vpop.permute.xlu0 %2665
        %2668 = vset.pattern.permute.xlu0 0
        %2669 = vperm.xlu0 %2668, %v1632
        %v2670 = vpop.permute.xlu0 %2669
        %2672 = vset.pattern.permute.xlu0 0
        %2673 = vperm.xlu0 %2672, %v1633
        %v2674 = vpop.permute.xlu0 %2673
        %2676 = vset.pattern.permute.xlu0 0
        %2677 = vperm.xlu0 %2676, %v1634
        %v2678 = vpop.permute.xlu0 %2677
        %2680 = vset.pattern.permute.xlu0 0
        %2681 = vperm.xlu0 %2680, %v1635
        %v2682 = vpop.permute.xlu0 %2681
        %2684 = vset.pattern.permute.xlu0 0
        %2685 = vperm.xlu0 %2684, %v1636
        %v2686 = vpop.permute.xlu0 %2685
        %2688 = vset.pattern.permute.xlu0 0
        %2689 = vperm.xlu0 %2688, %v1637
        %v2690 = vpop.permute.xlu0 %2689
        %2692 = vset.pattern.permute.xlu0 0
        %2693 = vperm.xlu0 %2692, %v1638
        %v2694 = vpop.permute.xlu0 %2693
        %2696 = vset.pattern.permute.xlu0 0
        %2697 = vperm.xlu0 %2696, %v1639
        %v2698 = vpop.permute.xlu0 %2697
        %2700 = vset.pattern.permute.xlu0 0
        %2701 = vperm.xlu0 %2700, %v1640
        %v2702 = vpop.permute.xlu0 %2701
        %2704 = vset.pattern.permute.xlu0 0
        %2705 = vperm.xlu0 %2704, %v1641
        %v2706 = vpop.permute.xlu0 %2705
        %2708 = vset.pattern.permute.xlu0 0
        %2709 = vperm.xlu0 %2708, %v1642
        %v2710 = vpop.permute.xlu0 %2709
        %2712 = vset.pattern.permute.xlu0 0
        %2713 = vperm.xlu0 %2712, %v1643
        %v2714 = vpop.permute.xlu0 %2713
        %2716 = vset.pattern.permute.xlu0 0
        %2717 = vperm.xlu0 %2716, %v1644
        %v2718 = vpop.permute.xlu0 %2717
        %2720 = vset.pattern.permute.xlu0 0
        %2721 = vperm.xlu0 %2720, %v1645
        %v2722 = vpop.permute.xlu0 %2721
        %2724 = vset.pattern.permute.xlu0 0
        %2725 = vperm.xlu0 %2724, %v1646
        %v2726 = vpop.permute.xlu0 %2725
        %2728 = vset.pattern.permute.xlu0 0
        %2729 = vperm.xlu0 %2728, %v1647
        %v2730 = vpop.permute.xlu0 %2729
        %2732 = vset.pattern.permute.xlu0 0
        %2733 = vperm.xlu0 %2732, %v1648
        %v2734 = vpop.permute.xlu0 %2733
        %2736 = vset.pattern.permute.xlu0 0
        %2737 = vperm.xlu0 %2736, %v1649
        %v2738 = vpop.permute.xlu0 %2737
        %2740 = vset.pattern.permute.xlu0 0
        %2741 = vperm.xlu0 %2740, %v1650
        %v2742 = vpop.permute.xlu0 %2741
        %2744 = vset.pattern.permute.xlu0 0
        %2745 = vperm.xlu0 %2744, %v1651
        %v2746 = vpop.permute.xlu0 %2745
        %2748 = vset.pattern.permute.xlu0 0
        %2749 = vperm.xlu0 %2748, %v1652
        %v2750 = vpop.permute.xlu0 %2749
        %v2752 = vsel %vm2560, %v2626, 0.0
        %v2753 = vsel %vm2561, %v2626, 0.0
        %v2754 = vsel %vm2562, %v2630, 0.0
        %v2755 = vsel %vm2563, %v2630, 0.0
        %v2756 = vsel %vm2564, %v2634, 0.0
        %v2757 = vsel %vm2565, %v2634, 0.0
        %v2758 = vsel %vm2566, %v2638, 0.0
        %v2759 = vsel %vm2567, %v2638, 0.0
        %v2760 = vsel %vm2568, %v2642, 0.0
        %v2761 = vsel %vm2569, %v2642, 0.0
        %v2762 = vsel %vm2570, %v2646, 0.0
        %v2763 = vsel %vm2571, %v2646, 0.0
        %v2764 = vsel %vm2572, %v2650, 0.0
        %v2765 = vsel %vm2573, %v2650, 0.0
        %v2766 = vsel %vm2574, %v2654, 0.0
        %v2767 = vsel %vm2575, %v2654, 0.0
        %v2768 = vsel %vm2576, %v2658, 0.0
        %v2769 = vsel %vm2577, %v2658, 0.0
        %v2770 = vsel %vm2578, %v2662, 0.0
        %v2771 = vsel %vm2579, %v2662, 0.0
        %v2772 = vsel %vm2580, %v2666, 0.0
        %v2773 = vsel %vm2581, %v2666, 0.0
        %v2774 = vsel %vm2582, %v2670, 0.0
        %v2775 = vsel %vm2583, %v2670, 0.0
        %v2776 = vsel %vm2584, %v2674, 0.0
        %v2777 = vsel %vm2585, %v2674, 0.0
        %v2778 = vsel %vm2586, %v2678, 0.0
        %v2779 = vsel %vm2587, %v2678, 0.0
        %v2780 = vsel %vm2588, %v2682, 0.0
        %v2781 = vsel %vm2589, %v2682, 0.0
        %v2782 = vsel %vm2590, %v2686, 0.0
        %v2783 = vsel %vm2591, %v2686, 0.0
        %v2784 = vsel %vm2592, %v2690, 0.0
        %v2785 = vsel %vm2593, %v2690, 0.0
        %v2786 = vsel %vm2594, %v2694, 0.0
        %v2787 = vsel %vm2595, %v2694, 0.0
        %v2788 = vsel %vm2596, %v2698, 0.0
        %v2789 = vsel %vm2597, %v2698, 0.0
        %v2790 = vsel %vm2598, %v2702, 0.0
        %v2791 = vsel %vm2599, %v2702, 0.0
        %v2792 = vsel %vm2600, %v2706, 0.0
        %v2793 = vsel %vm2601, %v2706, 0.0
        %v2794 = vsel %vm2602, %v2710, 0.0
        %v2795 = vsel %vm2603, %v2710, 0.0
        %v2796 = vsel %vm2604, %v2714, 0.0
        %v2797 = vsel %vm2605, %v2714, 0.0
        %v2798 = vsel %vm2606, %v2718, 0.0
        %v2799 = vsel %vm2607, %v2718, 0.0
        %v2800 = vsel %vm2608, %v2722, 0.0
        %v2801 = vsel %vm2609, %v2722, 0.0
        %v2802 = vsel %vm2610, %v2726, 0.0
        %v2803 = vsel %vm2611, %v2726, 0.0
        %v2804 = vsel %vm2612, %v2730, 0.0
        %v2805 = vsel %vm2613, %v2730, 0.0
        %v2806 = vsel %vm2614, %v2734, 0.0
        %v2807 = vsel %vm2615, %v2734, 0.0
        %v2808 = vsel %vm2616, %v2738, 0.0
        %v2809 = vsel %vm2617, %v2738, 0.0
        %v2810 = vsel %vm2618, %v2742, 0.0
        %v2811 = vsel %vm2619, %v2742, 0.0
        %v2812 = vsel %vm2620, %v2746, 0.0
        %v2813 = vsel %vm2621, %v2746, 0.0
        %v2814 = vsel %vm2622, %v2750, 0.0
        %v2815 = vsel %vm2623, %v2750, 0.0
        %v2816 = vadd.f32 %v2368, %v2752
        %v2817 = vadd.f32 %v2369, %v2753
        %v2818 = vadd.f32 %v2370, %v2754
        %v2819 = vadd.f32 %v2371, %v2755
        %v2820 = vadd.f32 %v2372, %v2756
        %v2821 = vadd.f32 %v2373, %v2757
        %v2822 = vadd.f32 %v2374, %v2758
        %v2823 = vadd.f32 %v2375, %v2759
        %v2824 = vadd.f32 %v2376, %v2760
        %v2825 = vadd.f32 %v2377, %v2761
        %v2826 = vadd.f32 %v2378, %v2762
        %v2827 = vadd.f32 %v2379, %v2763
        %v2828 = vadd.f32 %v2380, %v2764
        %v2829 = vadd.f32 %v2381, %v2765
        %v2830 = vadd.f32 %v2382, %v2766
        %v2831 = vadd.f32 %v2383, %v2767
        %v2832 = vadd.f32 %v2384, %v2768
        %v2833 = vadd.f32 %v2385, %v2769
        %v2834 = vadd.f32 %v2386, %v2770
        %v2835 = vadd.f32 %v2387, %v2771
        %v2836 = vadd.f32 %v2388, %v2772
        %v2837 = vadd.f32 %v2389, %v2773
        %v2838 = vadd.f32 %v2390, %v2774
        %v2839 = vadd.f32 %v2391, %v2775
        %v2840 = vadd.f32 %v2392, %v2776
        %v2841 = vadd.f32 %v2393, %v2777
        %v2842 = vadd.f32 %v2394, %v2778
        %v2843 = vadd.f32 %v2395, %v2779
        %v2844 = vadd.f32 %v2396, %v2780
        %v2845 = vadd.f32 %v2397, %v2781
        %v2846 = vadd.f32 %v2398, %v2782
        %v2847 = vadd.f32 %v2399, %v2783
        %v2848 = vadd.f32 %v2400, %v2784
        %v2849 = vadd.f32 %v2401, %v2785
        %v2850 = vadd.f32 %v2402, %v2786
        %v2851 = vadd.f32 %v2403, %v2787
        %v2852 = vadd.f32 %v2404, %v2788
        %v2853 = vadd.f32 %v2405, %v2789
        %v2854 = vadd.f32 %v2406, %v2790
        %v2855 = vadd.f32 %v2407, %v2791
        %v2856 = vadd.f32 %v2408, %v2792
        %v2857 = vadd.f32 %v2409, %v2793
        %v2858 = vadd.f32 %v2410, %v2794
        %v2859 = vadd.f32 %v2411, %v2795
        %v2860 = vadd.f32 %v2412, %v2796
        %v2861 = vadd.f32 %v2413, %v2797
        %v2862 = vadd.f32 %v2414, %v2798
        %v2863 = vadd.f32 %v2415, %v2799
        %v2864 = vadd.f32 %v2416, %v2800
        %v2865 = vadd.f32 %v2417, %v2801
        %v2866 = vadd.f32 %v2418, %v2802
        %v2867 = vadd.f32 %v2419, %v2803
        %v2868 = vadd.f32 %v2420, %v2804
        %v2869 = vadd.f32 %v2421, %v2805
        %v2870 = vadd.f32 %v2422, %v2806
        %v2871 = vadd.f32 %v2423, %v2807
        %v2872 = vadd.f32 %v2424, %v2808
        %v2873 = vadd.f32 %v2425, %v2809
        %v2874 = vadd.f32 %v2426, %v2810
        %v2875 = vadd.f32 %v2427, %v2811
        %v2876 = vadd.f32 %v2428, %v2812
        %v2877 = vadd.f32 %v2429, %v2813
        %v2878 = vadd.f32 %v2430, %v2814
        %v2879 = vadd.f32 %v2431, %v2815
        %2912 = vrot.lane.b32.xlu0 %v232, 126
        %v2913 = vpop.permute.xlu0 %2912
        %2914 = vrot.lane.b32.xlu0 %v233, 126
        %v2915 = vpop.permute.xlu0 %2914
        %2916 = vrot.lane.b32.xlu0 %v234, 126
        %v2917 = vpop.permute.xlu0 %2916
        %2918 = vrot.lane.b32.xlu0 %v235, 126
        %v2919 = vpop.permute.xlu0 %2918
        %2920 = vrot.lane.b32.xlu0 %v236, 126
        %v2921 = vpop.permute.xlu0 %2920
        %2922 = vrot.lane.b32.xlu0 %v237, 126
        %v2923 = vpop.permute.xlu0 %2922
        %2924 = vrot.lane.b32.xlu0 %v238, 126
        %v2925 = vpop.permute.xlu0 %2924
        %2926 = vrot.lane.b32.xlu0 %v239, 126
        %v2927 = vpop.permute.xlu0 %2926
        %2928 = vrot.lane.b32.xlu0 %v240, 126
        %v2929 = vpop.permute.xlu0 %2928
        %2930 = vrot.lane.b32.xlu0 %v241, 126
        %v2931 = vpop.permute.xlu0 %2930
        %2932 = vrot.lane.b32.xlu0 %v242, 126
        %v2933 = vpop.permute.xlu0 %2932
        %2934 = vrot.lane.b32.xlu0 %v243, 126
        %v2935 = vpop.permute.xlu0 %2934
        %2936 = vrot.lane.b32.xlu0 %v244, 126
        %v2937 = vpop.permute.xlu0 %2936
        %2938 = vrot.lane.b32.xlu0 %v245, 126
        %v2939 = vpop.permute.xlu0 %2938
        %2940 = vrot.lane.b32.xlu0 %v246, 126
        %v2941 = vpop.permute.xlu0 %2940
        %2942 = vrot.lane.b32.xlu0 %v247, 126
        %v2943 = vpop.permute.xlu0 %2942
        %2944 = vrot.lane.b32.xlu0 %v248, 126
        %v2945 = vpop.permute.xlu0 %2944
        %2946 = vrot.lane.b32.xlu0 %v249, 126
        %v2947 = vpop.permute.xlu0 %2946
        %2948 = vrot.lane.b32.xlu0 %v250, 126
        %v2949 = vpop.permute.xlu0 %2948
        %2950 = vrot.lane.b32.xlu0 %v251, 126
        %v2951 = vpop.permute.xlu0 %2950
        %2952 = vrot.lane.b32.xlu0 %v252, 126
        %v2953 = vpop.permute.xlu0 %2952
        %2954 = vrot.lane.b32.xlu0 %v253, 126
        %v2955 = vpop.permute.xlu0 %2954
        %2956 = vrot.lane.b32.xlu0 %v254, 126
        %v2957 = vpop.permute.xlu0 %2956
        %2958 = vrot.lane.b32.xlu0 %v255, 126
        %v2959 = vpop.permute.xlu0 %2958
        %2960 = vrot.lane.b32.xlu0 %v256, 126
        %v2961 = vpop.permute.xlu0 %2960
        %2962 = vrot.lane.b32.xlu0 %v257, 126
        %v2963 = vpop.permute.xlu0 %2962
        %2964 = vrot.lane.b32.xlu0 %v258, 126
        %v2965 = vpop.permute.xlu0 %2964
        %2966 = vrot.lane.b32.xlu0 %v259, 126
        %v2967 = vpop.permute.xlu0 %2966
        %2968 = vrot.lane.b32.xlu0 %v260, 126
        %v2969 = vpop.permute.xlu0 %2968
        %2970 = vrot.lane.b32.xlu0 %v261, 126
        %v2971 = vpop.permute.xlu0 %2970
        %2972 = vrot.lane.b32.xlu0 %v262, 126
        %v2973 = vpop.permute.xlu0 %2972
        %2974 = vrot.lane.b32.xlu0 %v263, 126
        %v2975 = vpop.permute.xlu0 %2974
        %v3008 = vadd.f32 %v232, %v2913
        %v3009 = vadd.f32 %v233, %v2915
        %v3010 = vadd.f32 %v234, %v2917
        %v3011 = vadd.f32 %v235, %v2919
        %v3012 = vadd.f32 %v236, %v2921
        %v3013 = vadd.f32 %v237, %v2923
        %v3014 = vadd.f32 %v238, %v2925
        %v3015 = vadd.f32 %v239, %v2927
        %v3016 = vadd.f32 %v240, %v2929
        %v3017 = vadd.f32 %v241, %v2931
        %v3018 = vadd.f32 %v242, %v2933
        %v3019 = vadd.f32 %v243, %v2935
        %v3020 = vadd.f32 %v244, %v2937
        %v3021 = vadd.f32 %v245, %v2939
        %v3022 = vadd.f32 %v246, %v2941
        %v3023 = vadd.f32 %v247, %v2943
        %v3024 = vadd.f32 %v248, %v2945
        %v3025 = vadd.f32 %v249, %v2947
        %v3026 = vadd.f32 %v250, %v2949
        %v3027 = vadd.f32 %v251, %v2951
        %v3028 = vadd.f32 %v252, %v2953
        %v3029 = vadd.f32 %v253, %v2955
        %v3030 = vadd.f32 %v254, %v2957
        %v3031 = vadd.f32 %v255, %v2959
        %v3032 = vadd.f32 %v256, %v2961
        %v3033 = vadd.f32 %v257, %v2963
        %v3034 = vadd.f32 %v258, %v2965
        %v3035 = vadd.f32 %v259, %v2967
        %v3036 = vadd.f32 %v260, %v2969
        %v3037 = vadd.f32 %v261, %v2971
        %v3038 = vadd.f32 %v262, %v2973
        %v3039 = vadd.f32 %v263, %v2975
        %vm3040 = vcmp.ge.f32.partialorder %v3008, -0.5
        %vm3041 = vcmp.ge.f32.partialorder %v3009, -0.5
        %vm3042 = vcmp.ge.f32.partialorder %v3010, -0.5
        %vm3043 = vcmp.ge.f32.partialorder %v3011, -0.5
        %vm3044 = vcmp.ge.f32.partialorder %v3012, -0.5
        %vm3045 = vcmp.ge.f32.partialorder %v3013, -0.5
        %vm3046 = vcmp.ge.f32.partialorder %v3014, -0.5
        %vm3047 = vcmp.ge.f32.partialorder %v3015, -0.5
        %vm3048 = vcmp.ge.f32.partialorder %v3016, -0.5
        %vm3049 = vcmp.ge.f32.partialorder %v3017, -0.5
        %vm3050 = vcmp.ge.f32.partialorder %v3018, -0.5
        %vm3051 = vcmp.ge.f32.partialorder %v3019, -0.5
        %vm3052 = vcmp.ge.f32.partialorder %v3020, -0.5
        %vm3053 = vcmp.ge.f32.partialorder %v3021, -0.5
        %vm3054 = vcmp.ge.f32.partialorder %v3022, -0.5
        %vm3055 = vcmp.ge.f32.partialorder %v3023, -0.5
        %vm3056 = vcmp.ge.f32.partialorder %v3024, -0.5
        %vm3057 = vcmp.ge.f32.partialorder %v3025, -0.5
        %vm3058 = vcmp.ge.f32.partialorder %v3026, -0.5
        %vm3059 = vcmp.ge.f32.partialorder %v3027, -0.5
        %vm3060 = vcmp.ge.f32.partialorder %v3028, -0.5
        %vm3061 = vcmp.ge.f32.partialorder %v3029, -0.5
        %vm3062 = vcmp.ge.f32.partialorder %v3030, -0.5
        %vm3063 = vcmp.ge.f32.partialorder %v3031, -0.5
        %vm3064 = vcmp.ge.f32.partialorder %v3032, -0.5
        %vm3065 = vcmp.ge.f32.partialorder %v3033, -0.5
        %vm3066 = vcmp.ge.f32.partialorder %v3034, -0.5
        %vm3067 = vcmp.ge.f32.partialorder %v3035, -0.5
        %vm3068 = vcmp.ge.f32.partialorder %v3036, -0.5
        %vm3069 = vcmp.ge.f32.partialorder %v3037, -0.5
        %vm3070 = vcmp.ge.f32.partialorder %v3038, -0.5
        %vm3071 = vcmp.ge.f32.partialorder %v3039, -0.5
        %vm3072 = vcmp.le.f32.partialorder %v3008, 15.5
        %vm3073 = vcmp.le.f32.partialorder %v3009, 15.5
        %vm3074 = vcmp.le.f32.partialorder %v3010, 15.5
        %vm3075 = vcmp.le.f32.partialorder %v3011, 15.5
        %vm3076 = vcmp.le.f32.partialorder %v3012, 15.5
        %vm3077 = vcmp.le.f32.partialorder %v3013, 15.5
        %vm3078 = vcmp.le.f32.partialorder %v3014, 15.5
        %vm3079 = vcmp.le.f32.partialorder %v3015, 15.5
        %vm3080 = vcmp.le.f32.partialorder %v3016, 15.5
        %vm3081 = vcmp.le.f32.partialorder %v3017, 15.5
        %vm3082 = vcmp.le.f32.partialorder %v3018, 15.5
        %vm3083 = vcmp.le.f32.partialorder %v3019, 15.5
        %vm3084 = vcmp.le.f32.partialorder %v3020, 15.5
        %vm3085 = vcmp.le.f32.partialorder %v3021, 15.5
        %vm3086 = vcmp.le.f32.partialorder %v3022, 15.5
        %vm3087 = vcmp.le.f32.partialorder %v3023, 15.5
        %vm3088 = vcmp.le.f32.partialorder %v3024, 15.5
        %vm3089 = vcmp.le.f32.partialorder %v3025, 15.5
        %vm3090 = vcmp.le.f32.partialorder %v3026, 15.5
        %vm3091 = vcmp.le.f32.partialorder %v3027, 15.5
        %vm3092 = vcmp.le.f32.partialorder %v3028, 15.5
        %vm3093 = vcmp.le.f32.partialorder %v3029, 15.5
        %vm3094 = vcmp.le.f32.partialorder %v3030, 15.5
        %vm3095 = vcmp.le.f32.partialorder %v3031, 15.5
        %vm3096 = vcmp.le.f32.partialorder %v3032, 15.5
        %vm3097 = vcmp.le.f32.partialorder %v3033, 15.5
        %vm3098 = vcmp.le.f32.partialorder %v3034, 15.5
        %vm3099 = vcmp.le.f32.partialorder %v3035, 15.5
        %vm3100 = vcmp.le.f32.partialorder %v3036, 15.5
        %vm3101 = vcmp.le.f32.partialorder %v3037, 15.5
        %vm3102 = vcmp.le.f32.partialorder %v3038, 15.5
        %vm3103 = vcmp.le.f32.partialorder %v3039, 15.5
        %vm3104 = vmand %vm3040, %vm3072
        %vm3105 = vmand %vm3041, %vm3073
        %vm3106 = vmand %vm3042, %vm3074
        %vm3107 = vmand %vm3043, %vm3075
        %vm3108 = vmand %vm3044, %vm3076
        %vm3109 = vmand %vm3045, %vm3077
        %vm3110 = vmand %vm3046, %vm3078
        %vm3111 = vmand %vm3047, %vm3079
        %vm3112 = vmand %vm3048, %vm3080
        %vm3113 = vmand %vm3049, %vm3081
        %vm3114 = vmand %vm3050, %vm3082
        %vm3115 = vmand %vm3051, %vm3083
        %vm3116 = vmand %vm3052, %vm3084
        %vm3117 = vmand %vm3053, %vm3085
        %vm3118 = vmand %vm3054, %vm3086
        %vm3119 = vmand %vm3055, %vm3087
        %vm3120 = vmand %vm3056, %vm3088
        %vm3121 = vmand %vm3057, %vm3089
        %vm3122 = vmand %vm3058, %vm3090
        %vm3123 = vmand %vm3059, %vm3091
        %vm3124 = vmand %vm3060, %vm3092
        %vm3125 = vmand %vm3061, %vm3093
        %vm3126 = vmand %vm3062, %vm3094
        %vm3127 = vmand %vm3063, %vm3095
        %vm3128 = vmand %vm3064, %vm3096
        %vm3129 = vmand %vm3065, %vm3097
        %vm3130 = vmand %vm3066, %vm3098
        %vm3131 = vmand %vm3067, %vm3099
        %vm3132 = vmand %vm3068, %vm3100
        %vm3133 = vmand %vm3069, %vm3101
        %vm3134 = vmand %vm3070, %vm3102
        %vm3135 = vmand %vm3071, %vm3103
        %v3136 = vsel %vm3104, 1, 0
        %v3137 = vsel %vm3105, 1, 0
        %v3138 = vsel %vm3106, 1, 0
        %v3139 = vsel %vm3107, 1, 0
        %v3140 = vsel %vm3108, 1, 0
        %v3141 = vsel %vm3109, 1, 0
        %v3142 = vsel %vm3110, 1, 0
        %v3143 = vsel %vm3111, 1, 0
        %v3144 = vsel %vm3112, 1, 0
        %v3145 = vsel %vm3113, 1, 0
        %v3146 = vsel %vm3114, 1, 0
        %v3147 = vsel %vm3115, 1, 0
        %v3148 = vsel %vm3116, 1, 0
        %v3149 = vsel %vm3117, 1, 0
        %v3150 = vsel %vm3118, 1, 0
        %v3151 = vsel %vm3119, 1, 0
        %v3152 = vsel %vm3120, 1, 0
        %v3153 = vsel %vm3121, 1, 0
        %v3154 = vsel %vm3122, 1, 0
        %v3155 = vsel %vm3123, 1, 0
        %v3156 = vsel %vm3124, 1, 0
        %v3157 = vsel %vm3125, 1, 0
        %v3158 = vsel %vm3126, 1, 0
        %v3159 = vsel %vm3127, 1, 0
        %v3160 = vsel %vm3128, 1, 0
        %v3161 = vsel %vm3129, 1, 0
        %v3162 = vsel %vm3130, 1, 0
        %v3163 = vsel %vm3131, 1, 0
        %v3164 = vsel %vm3132, 1, 0
        %v3165 = vsel %vm3133, 1, 0
        %v3166 = vsel %vm3134, 1, 0
        %v3167 = vsel %vm3135, 1, 0
        %v3168 = vcvt.s32.f32 %v3136
        %v3169 = vcvt.s32.f32 %v3137
        %v3170 = vcvt.s32.f32 %v3138
        %v3171 = vcvt.s32.f32 %v3139
        %v3172 = vcvt.s32.f32 %v3140
        %v3173 = vcvt.s32.f32 %v3141
        %v3174 = vcvt.s32.f32 %v3142
        %v3175 = vcvt.s32.f32 %v3143
        %v3176 = vcvt.s32.f32 %v3144
        %v3177 = vcvt.s32.f32 %v3145
        %v3178 = vcvt.s32.f32 %v3146
        %v3179 = vcvt.s32.f32 %v3147
        %v3180 = vcvt.s32.f32 %v3148
        %v3181 = vcvt.s32.f32 %v3149
        %v3182 = vcvt.s32.f32 %v3150
        %v3183 = vcvt.s32.f32 %v3151
        %v3184 = vcvt.s32.f32 %v3152
        %v3185 = vcvt.s32.f32 %v3153
        %v3186 = vcvt.s32.f32 %v3154
        %v3187 = vcvt.s32.f32 %v3155
        %v3188 = vcvt.s32.f32 %v3156
        %v3189 = vcvt.s32.f32 %v3157
        %v3190 = vcvt.s32.f32 %v3158
        %v3191 = vcvt.s32.f32 %v3159
        %v3192 = vcvt.s32.f32 %v3160
        %v3193 = vcvt.s32.f32 %v3161
        %v3194 = vcvt.s32.f32 %v3162
        %v3195 = vcvt.s32.f32 %v3163
        %v3196 = vcvt.s32.f32 %v3164
        %v3197 = vcvt.s32.f32 %v3165
        %v3198 = vcvt.s32.f32 %v3166
        %v3199 = vcvt.s32.f32 %v3167
        %v3200 = vmax.f32 %v3008, 0.0
        %v3201 = vmax.f32 %v3009, 0.0
        %v3202 = vmax.f32 %v3010, 0.0
        %v3203 = vmax.f32 %v3011, 0.0
        %v3204 = vmax.f32 %v3012, 0.0
        %v3205 = vmax.f32 %v3013, 0.0
        %v3206 = vmax.f32 %v3014, 0.0
        %v3207 = vmax.f32 %v3015, 0.0
        %v3208 = vmax.f32 %v3016, 0.0
        %v3209 = vmax.f32 %v3017, 0.0
        %v3210 = vmax.f32 %v3018, 0.0
        %v3211 = vmax.f32 %v3019, 0.0
        %v3212 = vmax.f32 %v3020, 0.0
        %v3213 = vmax.f32 %v3021, 0.0
        %v3214 = vmax.f32 %v3022, 0.0
        %v3215 = vmax.f32 %v3023, 0.0
        %v3216 = vmax.f32 %v3024, 0.0
        %v3217 = vmax.f32 %v3025, 0.0
        %v3218 = vmax.f32 %v3026, 0.0
        %v3219 = vmax.f32 %v3027, 0.0
        %v3220 = vmax.f32 %v3028, 0.0
        %v3221 = vmax.f32 %v3029, 0.0
        %v3222 = vmax.f32 %v3030, 0.0
        %v3223 = vmax.f32 %v3031, 0.0
        %v3224 = vmax.f32 %v3032, 0.0
        %v3225 = vmax.f32 %v3033, 0.0
        %v3226 = vmax.f32 %v3034, 0.0
        %v3227 = vmax.f32 %v3035, 0.0
        %v3228 = vmax.f32 %v3036, 0.0
        %v3229 = vmax.f32 %v3037, 0.0
        %v3230 = vmax.f32 %v3038, 0.0
        %v3231 = vmax.f32 %v3039, 0.0
        %v3232 = vmin.f32 %v3200, 15.0
        %v3233 = vmin.f32 %v3201, 15.0
        %v3234 = vmin.f32 %v3202, 15.0
        %v3235 = vmin.f32 %v3203, 15.0
        %v3236 = vmin.f32 %v3204, 15.0
        %v3237 = vmin.f32 %v3205, 15.0
        %v3238 = vmin.f32 %v3206, 15.0
        %v3239 = vmin.f32 %v3207, 15.0
        %v3240 = vmin.f32 %v3208, 15.0
        %v3241 = vmin.f32 %v3209, 15.0
        %v3242 = vmin.f32 %v3210, 15.0
        %v3243 = vmin.f32 %v3211, 15.0
        %v3244 = vmin.f32 %v3212, 15.0
        %v3245 = vmin.f32 %v3213, 15.0
        %v3246 = vmin.f32 %v3214, 15.0
        %v3247 = vmin.f32 %v3215, 15.0
        %v3248 = vmin.f32 %v3216, 15.0
        %v3249 = vmin.f32 %v3217, 15.0
        %v3250 = vmin.f32 %v3218, 15.0
        %v3251 = vmin.f32 %v3219, 15.0
        %v3252 = vmin.f32 %v3220, 15.0
        %v3253 = vmin.f32 %v3221, 15.0
        %v3254 = vmin.f32 %v3222, 15.0
        %v3255 = vmin.f32 %v3223, 15.0
        %v3256 = vmin.f32 %v3224, 15.0
        %v3257 = vmin.f32 %v3225, 15.0
        %v3258 = vmin.f32 %v3226, 15.0
        %v3259 = vmin.f32 %v3227, 15.0
        %v3260 = vmin.f32 %v3228, 15.0
        %v3261 = vmin.f32 %v3229, 15.0
        %v3262 = vmin.f32 %v3230, 15.0
        %v3263 = vmin.f32 %v3231, 15.0
        %v3264 = vfloor.f32 %v3232
        %v3265 = vfloor.f32 %v3233
        %v3266 = vfloor.f32 %v3234
        %v3267 = vfloor.f32 %v3235
        %v3268 = vfloor.f32 %v3236
        %v3269 = vfloor.f32 %v3237
        %v3270 = vfloor.f32 %v3238
        %v3271 = vfloor.f32 %v3239
        %v3272 = vfloor.f32 %v3240
        %v3273 = vfloor.f32 %v3241
        %v3274 = vfloor.f32 %v3242
        %v3275 = vfloor.f32 %v3243
        %v3276 = vfloor.f32 %v3244
        %v3277 = vfloor.f32 %v3245
        %v3278 = vfloor.f32 %v3246
        %v3279 = vfloor.f32 %v3247
        %v3280 = vfloor.f32 %v3248
        %v3281 = vfloor.f32 %v3249
        %v3282 = vfloor.f32 %v3250
        %v3283 = vfloor.f32 %v3251
        %v3284 = vfloor.f32 %v3252
        %v3285 = vfloor.f32 %v3253
        %v3286 = vfloor.f32 %v3254
        %v3287 = vfloor.f32 %v3255
        %v3288 = vfloor.f32 %v3256
        %v3289 = vfloor.f32 %v3257
        %v3290 = vfloor.f32 %v3258
        %v3291 = vfloor.f32 %v3259
        %v3292 = vfloor.f32 %v3260
        %v3293 = vfloor.f32 %v3261
        %v3294 = vfloor.f32 %v3262
        %v3295 = vfloor.f32 %v3263
        %v3296 = vsub.f32 %v3232, %v3264
        %v3297 = vsub.f32 %v3233, %v3265
        %v3298 = vsub.f32 %v3234, %v3266
        %v3299 = vsub.f32 %v3235, %v3267
        %v3300 = vsub.f32 %v3236, %v3268
        %v3301 = vsub.f32 %v3237, %v3269
        %v3302 = vsub.f32 %v3238, %v3270
        %v3303 = vsub.f32 %v3239, %v3271
        %v3304 = vsub.f32 %v3240, %v3272
        %v3305 = vsub.f32 %v3241, %v3273
        %v3306 = vsub.f32 %v3242, %v3274
        %v3307 = vsub.f32 %v3243, %v3275
        %v3308 = vsub.f32 %v3244, %v3276
        %v3309 = vsub.f32 %v3245, %v3277
        %v3310 = vsub.f32 %v3246, %v3278
        %v3311 = vsub.f32 %v3247, %v3279
        %v3312 = vsub.f32 %v3248, %v3280
        %v3313 = vsub.f32 %v3249, %v3281
        %v3314 = vsub.f32 %v3250, %v3282
        %v3315 = vsub.f32 %v3251, %v3283
        %v3316 = vsub.f32 %v3252, %v3284
        %v3317 = vsub.f32 %v3253, %v3285
        %v3318 = vsub.f32 %v3254, %v3286
        %v3319 = vsub.f32 %v3255, %v3287
        %v3320 = vsub.f32 %v3256, %v3288
        %v3321 = vsub.f32 %v3257, %v3289
        %v3322 = vsub.f32 %v3258, %v3290
        %v3323 = vsub.f32 %v3259, %v3291
        %v3324 = vsub.f32 %v3260, %v3292
        %v3325 = vsub.f32 %v3261, %v3293
        %v3326 = vsub.f32 %v3262, %v3294
        %v3327 = vsub.f32 %v3263, %v3295
        %v3328 = vadd.f32 %v3264, 1.0
        %v3329 = vadd.f32 %v3265, 1.0
        %v3330 = vadd.f32 %v3266, 1.0
        %v3331 = vadd.f32 %v3267, 1.0
        %v3332 = vadd.f32 %v3268, 1.0
        %v3333 = vadd.f32 %v3269, 1.0
        %v3334 = vadd.f32 %v3270, 1.0
        %v3335 = vadd.f32 %v3271, 1.0
        %v3336 = vadd.f32 %v3272, 1.0
        %v3337 = vadd.f32 %v3273, 1.0
        %v3338 = vadd.f32 %v3274, 1.0
        %v3339 = vadd.f32 %v3275, 1.0
        %v3340 = vadd.f32 %v3276, 1.0
        %v3341 = vadd.f32 %v3277, 1.0
        %v3342 = vadd.f32 %v3278, 1.0
        %v3343 = vadd.f32 %v3279, 1.0
        %v3344 = vadd.f32 %v3280, 1.0
        %v3345 = vadd.f32 %v3281, 1.0
        %v3346 = vadd.f32 %v3282, 1.0
        %v3347 = vadd.f32 %v3283, 1.0
        %v3348 = vadd.f32 %v3284, 1.0
        %v3349 = vadd.f32 %v3285, 1.0
        %v3350 = vadd.f32 %v3286, 1.0
        %v3351 = vadd.f32 %v3287, 1.0
        %v3352 = vadd.f32 %v3288, 1.0
        %v3353 = vadd.f32 %v3289, 1.0
        %v3354 = vadd.f32 %v3290, 1.0
        %v3355 = vadd.f32 %v3291, 1.0
        %v3356 = vadd.f32 %v3292, 1.0
        %v3357 = vadd.f32 %v3293, 1.0
        %v3358 = vadd.f32 %v3294, 1.0
        %v3359 = vadd.f32 %v3295, 1.0
        %v3360 = vmin.f32 %v3328, 15.0
        %v3361 = vmin.f32 %v3329, 15.0
        %v3362 = vmin.f32 %v3330, 15.0
        %v3363 = vmin.f32 %v3331, 15.0
        %v3364 = vmin.f32 %v3332, 15.0
        %v3365 = vmin.f32 %v3333, 15.0
        %v3366 = vmin.f32 %v3334, 15.0
        %v3367 = vmin.f32 %v3335, 15.0
        %v3368 = vmin.f32 %v3336, 15.0
        %v3369 = vmin.f32 %v3337, 15.0
        %v3370 = vmin.f32 %v3338, 15.0
        %v3371 = vmin.f32 %v3339, 15.0
        %v3372 = vmin.f32 %v3340, 15.0
        %v3373 = vmin.f32 %v3341, 15.0
        %v3374 = vmin.f32 %v3342, 15.0
        %v3375 = vmin.f32 %v3343, 15.0
        %v3376 = vmin.f32 %v3344, 15.0
        %v3377 = vmin.f32 %v3345, 15.0
        %v3378 = vmin.f32 %v3346, 15.0
        %v3379 = vmin.f32 %v3347, 15.0
        %v3380 = vmin.f32 %v3348, 15.0
        %v3381 = vmin.f32 %v3349, 15.0
        %v3382 = vmin.f32 %v3350, 15.0
        %v3383 = vmin.f32 %v3351, 15.0
        %v3384 = vmin.f32 %v3352, 15.0
        %v3385 = vmin.f32 %v3353, 15.0
        %v3386 = vmin.f32 %v3354, 15.0
        %v3387 = vmin.f32 %v3355, 15.0
        %v3388 = vmin.f32 %v3356, 15.0
        %v3389 = vmin.f32 %v3357, 15.0
        %v3390 = vmin.f32 %v3358, 15.0
        %v3391 = vmin.f32 %v3359, 15.0
        %3393 = vset.pattern.permute.xlu0 1
        %3394 = vperm.xlu0 %3393, %v3264
        %v3395 = vpop.permute.xlu0 %3394
        %3398 = vset.pattern.permute.xlu0 1
        %3399 = vperm.xlu0 %3398, %v3265
        %v3400 = vpop.permute.xlu0 %3399
        %3403 = vset.pattern.permute.xlu0 1
        %3404 = vperm.xlu0 %3403, %v3266
        %v3405 = vpop.permute.xlu0 %3404
        %3408 = vset.pattern.permute.xlu0 1
        %3409 = vperm.xlu0 %3408, %v3267
        %v3410 = vpop.permute.xlu0 %3409
        %3413 = vset.pattern.permute.xlu0 1
        %3414 = vperm.xlu0 %3413, %v3268
        %v3415 = vpop.permute.xlu0 %3414
        %3418 = vset.pattern.permute.xlu0 1
        %3419 = vperm.xlu0 %3418, %v3269
        %v3420 = vpop.permute.xlu0 %3419
        %3423 = vset.pattern.permute.xlu0 1
        %3424 = vperm.xlu0 %3423, %v3270
        %v3425 = vpop.permute.xlu0 %3424
        %3428 = vset.pattern.permute.xlu0 1
        %3429 = vperm.xlu0 %3428, %v3271
        %v3430 = vpop.permute.xlu0 %3429
        %3433 = vset.pattern.permute.xlu0 1
        %3434 = vperm.xlu0 %3433, %v3272
        %v3435 = vpop.permute.xlu0 %3434
        %3438 = vset.pattern.permute.xlu0 1
        %3439 = vperm.xlu0 %3438, %v3273
        %v3440 = vpop.permute.xlu0 %3439
        %3443 = vset.pattern.permute.xlu0 1
        %3444 = vperm.xlu0 %3443, %v3274
        %v3445 = vpop.permute.xlu0 %3444
        %3448 = vset.pattern.permute.xlu0 1
        %3449 = vperm.xlu0 %3448, %v3275
        %v3450 = vpop.permute.xlu0 %3449
        %3453 = vset.pattern.permute.xlu0 1
        %3454 = vperm.xlu0 %3453, %v3276
        %v3455 = vpop.permute.xlu0 %3454
        %3458 = vset.pattern.permute.xlu0 1
        %3459 = vperm.xlu0 %3458, %v3277
        %v3460 = vpop.permute.xlu0 %3459
        %3463 = vset.pattern.permute.xlu0 1
        %3464 = vperm.xlu0 %3463, %v3278
        %v3465 = vpop.permute.xlu0 %3464
        %3468 = vset.pattern.permute.xlu0 1
        %3469 = vperm.xlu0 %3468, %v3279
        %v3470 = vpop.permute.xlu0 %3469
        %3473 = vset.pattern.permute.xlu0 1
        %3474 = vperm.xlu0 %3473, %v3280
        %v3475 = vpop.permute.xlu0 %3474
        %3478 = vset.pattern.permute.xlu0 1
        %3479 = vperm.xlu0 %3478, %v3281
        %v3480 = vpop.permute.xlu0 %3479
        %3483 = vset.pattern.permute.xlu0 1
        %3484 = vperm.xlu0 %3483, %v3282
        %v3485 = vpop.permute.xlu0 %3484
        %3488 = vset.pattern.permute.xlu0 1
        %3489 = vperm.xlu0 %3488, %v3283
        %v3490 = vpop.permute.xlu0 %3489
        %3493 = vset.pattern.permute.xlu0 1
        %3494 = vperm.xlu0 %3493, %v3284
        %v3495 = vpop.permute.xlu0 %3494
        %3498 = vset.pattern.permute.xlu0 1
        %3499 = vperm.xlu0 %3498, %v3285
        %v3500 = vpop.permute.xlu0 %3499
        %3503 = vset.pattern.permute.xlu0 1
        %3504 = vperm.xlu0 %3503, %v3286
        %v3505 = vpop.permute.xlu0 %3504
        %3508 = vset.pattern.permute.xlu0 1
        %3509 = vperm.xlu0 %3508, %v3287
        %v3510 = vpop.permute.xlu0 %3509
        %3513 = vset.pattern.permute.xlu0 1
        %3514 = vperm.xlu0 %3513, %v3288
        %v3515 = vpop.permute.xlu0 %3514
        %3518 = vset.pattern.permute.xlu0 1
        %3519 = vperm.xlu0 %3518, %v3289
        %v3520 = vpop.permute.xlu0 %3519
        %3523 = vset.pattern.permute.xlu0 1
        %3524 = vperm.xlu0 %3523, %v3290
        %v3525 = vpop.permute.xlu0 %3524
        %3528 = vset.pattern.permute.xlu0 1
        %3529 = vperm.xlu0 %3528, %v3291
        %v3530 = vpop.permute.xlu0 %3529
        %3533 = vset.pattern.permute.xlu0 1
        %3534 = vperm.xlu0 %3533, %v3292
        %v3535 = vpop.permute.xlu0 %3534
        %3538 = vset.pattern.permute.xlu0 1
        %3539 = vperm.xlu0 %3538, %v3293
        %v3540 = vpop.permute.xlu0 %3539
        %3543 = vset.pattern.permute.xlu0 1
        %3544 = vperm.xlu0 %3543, %v3294
        %v3545 = vpop.permute.xlu0 %3544
        %3548 = vset.pattern.permute.xlu0 1
        %3549 = vperm.xlu0 %3548, %v3295
        %v3550 = vpop.permute.xlu0 %3549
        %vm3552 = vcmp.eq.f32.partialorder %v814, %v3395
        %vm3553 = vcmp.eq.f32.partialorder %v818, %v3395
        %vm3554 = vcmp.eq.f32.partialorder %v814, %v3400
        %vm3555 = vcmp.eq.f32.partialorder %v818, %v3400
        %vm3556 = vcmp.eq.f32.partialorder %v814, %v3405
        %vm3557 = vcmp.eq.f32.partialorder %v818, %v3405
        %vm3558 = vcmp.eq.f32.partialorder %v814, %v3410
        %vm3559 = vcmp.eq.f32.partialorder %v818, %v3410
        %vm3560 = vcmp.eq.f32.partialorder %v814, %v3415
        %vm3561 = vcmp.eq.f32.partialorder %v818, %v3415
        %vm3562 = vcmp.eq.f32.partialorder %v814, %v3420
        %vm3563 = vcmp.eq.f32.partialorder %v818, %v3420
        %vm3564 = vcmp.eq.f32.partialorder %v814, %v3425
        %vm3565 = vcmp.eq.f32.partialorder %v818, %v3425
        %vm3566 = vcmp.eq.f32.partialorder %v814, %v3430
        %vm3567 = vcmp.eq.f32.partialorder %v818, %v3430
        %vm3568 = vcmp.eq.f32.partialorder %v814, %v3435
        %vm3569 = vcmp.eq.f32.partialorder %v818, %v3435
        %vm3570 = vcmp.eq.f32.partialorder %v814, %v3440
        %vm3571 = vcmp.eq.f32.partialorder %v818, %v3440
        %vm3572 = vcmp.eq.f32.partialorder %v814, %v3445
        %vm3573 = vcmp.eq.f32.partialorder %v818, %v3445
        %vm3574 = vcmp.eq.f32.partialorder %v814, %v3450
        %vm3575 = vcmp.eq.f32.partialorder %v818, %v3450
        %vm3576 = vcmp.eq.f32.partialorder %v814, %v3455
        %vm3577 = vcmp.eq.f32.partialorder %v818, %v3455
        %vm3578 = vcmp.eq.f32.partialorder %v814, %v3460
        %vm3579 = vcmp.eq.f32.partialorder %v818, %v3460
        %vm3580 = vcmp.eq.f32.partialorder %v814, %v3465
        %vm3581 = vcmp.eq.f32.partialorder %v818, %v3465
        %vm3582 = vcmp.eq.f32.partialorder %v814, %v3470
        %vm3583 = vcmp.eq.f32.partialorder %v818, %v3470
        %vm3584 = vcmp.eq.f32.partialorder %v814, %v3475
        %vm3585 = vcmp.eq.f32.partialorder %v818, %v3475
        %vm3586 = vcmp.eq.f32.partialorder %v814, %v3480
        %vm3587 = vcmp.eq.f32.partialorder %v818, %v3480
        %vm3588 = vcmp.eq.f32.partialorder %v814, %v3485
        %vm3589 = vcmp.eq.f32.partialorder %v818, %v3485
        %vm3590 = vcmp.eq.f32.partialorder %v814, %v3490
        %vm3591 = vcmp.eq.f32.partialorder %v818, %v3490
        %vm3592 = vcmp.eq.f32.partialorder %v814, %v3495
        %vm3593 = vcmp.eq.f32.partialorder %v818, %v3495
        %vm3594 = vcmp.eq.f32.partialorder %v814, %v3500
        %vm3595 = vcmp.eq.f32.partialorder %v818, %v3500
        %vm3596 = vcmp.eq.f32.partialorder %v814, %v3505
        %vm3597 = vcmp.eq.f32.partialorder %v818, %v3505
        %vm3598 = vcmp.eq.f32.partialorder %v814, %v3510
        %vm3599 = vcmp.eq.f32.partialorder %v818, %v3510
        %vm3600 = vcmp.eq.f32.partialorder %v814, %v3515
        %vm3601 = vcmp.eq.f32.partialorder %v818, %v3515
        %vm3602 = vcmp.eq.f32.partialorder %v814, %v3520
        %vm3603 = vcmp.eq.f32.partialorder %v818, %v3520
        %vm3604 = vcmp.eq.f32.partialorder %v814, %v3525
        %vm3605 = vcmp.eq.f32.partialorder %v818, %v3525
        %vm3606 = vcmp.eq.f32.partialorder %v814, %v3530
        %vm3607 = vcmp.eq.f32.partialorder %v818, %v3530
        %vm3608 = vcmp.eq.f32.partialorder %v814, %v3535
        %vm3609 = vcmp.eq.f32.partialorder %v818, %v3535
        %vm3610 = vcmp.eq.f32.partialorder %v814, %v3540
        %vm3611 = vcmp.eq.f32.partialorder %v818, %v3540
        %vm3612 = vcmp.eq.f32.partialorder %v814, %v3545
        %vm3613 = vcmp.eq.f32.partialorder %v818, %v3545
        %vm3614 = vcmp.eq.f32.partialorder %v814, %v3550
        %vm3615 = vcmp.eq.f32.partialorder %v818, %v3550
        %v3616 = vsub.f32 1.0, %v3296
        %v3617 = vsub.f32 1.0, %v3297
        %v3618 = vsub.f32 1.0, %v3298
        %v3619 = vsub.f32 1.0, %v3299
        %v3620 = vsub.f32 1.0, %v3300
        %v3621 = vsub.f32 1.0, %v3301
        %v3622 = vsub.f32 1.0, %v3302
        %v3623 = vsub.f32 1.0, %v3303
        %v3624 = vsub.f32 1.0, %v3304
        %v3625 = vsub.f32 1.0, %v3305
        %v3626 = vsub.f32 1.0, %v3306
        %v3627 = vsub.f32 1.0, %v3307
        %v3628 = vsub.f32 1.0, %v3308
        %v3629 = vsub.f32 1.0, %v3309
        %v3630 = vsub.f32 1.0, %v3310
        %v3631 = vsub.f32 1.0, %v3311
        %v3632 = vsub.f32 1.0, %v3312
        %v3633 = vsub.f32 1.0, %v3313
        %v3634 = vsub.f32 1.0, %v3314
        %v3635 = vsub.f32 1.0, %v3315
        %v3636 = vsub.f32 1.0, %v3316
        %v3637 = vsub.f32 1.0, %v3317
        %v3638 = vsub.f32 1.0, %v3318
        %v3639 = vsub.f32 1.0, %v3319
        %v3640 = vsub.f32 1.0, %v3320
        %v3641 = vsub.f32 1.0, %v3321
        %v3642 = vsub.f32 1.0, %v3322
        %v3643 = vsub.f32 1.0, %v3323
        %v3644 = vsub.f32 1.0, %v3324
        %v3645 = vsub.f32 1.0, %v3325
        %v3646 = vsub.f32 1.0, %v3326
        %v3647 = vsub.f32 1.0, %v3327
        %v3648 = vmul.f32 %v3616, %v3168
        %v3649 = vmul.f32 %v3617, %v3169
        %v3650 = vmul.f32 %v3618, %v3170
        %v3651 = vmul.f32 %v3619, %v3171
        %v3652 = vmul.f32 %v3620, %v3172
        %v3653 = vmul.f32 %v3621, %v3173
        %v3654 = vmul.f32 %v3622, %v3174
        %v3655 = vmul.f32 %v3623, %v3175
        %v3656 = vmul.f32 %v3624, %v3176
        %v3657 = vmul.f32 %v3625, %v3177
        %v3658 = vmul.f32 %v3626, %v3178
        %v3659 = vmul.f32 %v3627, %v3179
        %v3660 = vmul.f32 %v3628, %v3180
        %v3661 = vmul.f32 %v3629, %v3181
        %v3662 = vmul.f32 %v3630, %v3182
        %v3663 = vmul.f32 %v3631, %v3183
        %v3664 = vmul.f32 %v3632, %v3184
        %v3665 = vmul.f32 %v3633, %v3185
        %v3666 = vmul.f32 %v3634, %v3186
        %v3667 = vmul.f32 %v3635, %v3187
        %v3668 = vmul.f32 %v3636, %v3188
        %v3669 = vmul.f32 %v3637, %v3189
        %v3670 = vmul.f32 %v3638, %v3190
        %v3671 = vmul.f32 %v3639, %v3191
        %v3672 = vmul.f32 %v3640, %v3192
        %v3673 = vmul.f32 %v3641, %v3193
        %v3674 = vmul.f32 %v3642, %v3194
        %v3675 = vmul.f32 %v3643, %v3195
        %v3676 = vmul.f32 %v3644, %v3196
        %v3677 = vmul.f32 %v3645, %v3197
        %v3678 = vmul.f32 %v3646, %v3198
        %v3679 = vmul.f32 %v3647, %v3199
        %3681 = vset.pattern.permute.xlu0 1
        %3682 = vperm.xlu0 %3681, %v3648
        %v3683 = vpop.permute.xlu0 %3682
        %3686 = vset.pattern.permute.xlu0 1
        %3687 = vperm.xlu0 %3686, %v3649
        %v3688 = vpop.permute.xlu0 %3687
        %3691 = vset.pattern.permute.xlu0 1
        %3692 = vperm.xlu0 %3691, %v3650
        %v3693 = vpop.permute.xlu0 %3692
        %3696 = vset.pattern.permute.xlu0 1
        %3697 = vperm.xlu0 %3696, %v3651
        %v3698 = vpop.permute.xlu0 %3697
        %3701 = vset.pattern.permute.xlu0 1
        %3702 = vperm.xlu0 %3701, %v3652
        %v3703 = vpop.permute.xlu0 %3702
        %3706 = vset.pattern.permute.xlu0 1
        %3707 = vperm.xlu0 %3706, %v3653
        %v3708 = vpop.permute.xlu0 %3707
        %3711 = vset.pattern.permute.xlu0 1
        %3712 = vperm.xlu0 %3711, %v3654
        %v3713 = vpop.permute.xlu0 %3712
        %3716 = vset.pattern.permute.xlu0 1
        %3717 = vperm.xlu0 %3716, %v3655
        %v3718 = vpop.permute.xlu0 %3717
        %3721 = vset.pattern.permute.xlu0 1
        %3722 = vperm.xlu0 %3721, %v3656
        %v3723 = vpop.permute.xlu0 %3722
        %3726 = vset.pattern.permute.xlu0 1
        %3727 = vperm.xlu0 %3726, %v3657
        %v3728 = vpop.permute.xlu0 %3727
        %3731 = vset.pattern.permute.xlu0 1
        %3732 = vperm.xlu0 %3731, %v3658
        %v3733 = vpop.permute.xlu0 %3732
        %3736 = vset.pattern.permute.xlu0 1
        %3737 = vperm.xlu0 %3736, %v3659
        %v3738 = vpop.permute.xlu0 %3737
        %3741 = vset.pattern.permute.xlu0 1
        %3742 = vperm.xlu0 %3741, %v3660
        %v3743 = vpop.permute.xlu0 %3742
        %3746 = vset.pattern.permute.xlu0 1
        %3747 = vperm.xlu0 %3746, %v3661
        %v3748 = vpop.permute.xlu0 %3747
        %3751 = vset.pattern.permute.xlu0 1
        %3752 = vperm.xlu0 %3751, %v3662
        %v3753 = vpop.permute.xlu0 %3752
        %3756 = vset.pattern.permute.xlu0 1
        %3757 = vperm.xlu0 %3756, %v3663
        %v3758 = vpop.permute.xlu0 %3757
        %3761 = vset.pattern.permute.xlu0 1
        %3762 = vperm.xlu0 %3761, %v3664
        %v3763 = vpop.permute.xlu0 %3762
        %3766 = vset.pattern.permute.xlu0 1
        %3767 = vperm.xlu0 %3766, %v3665
        %v3768 = vpop.permute.xlu0 %3767
        %3771 = vset.pattern.permute.xlu0 1
        %3772 = vperm.xlu0 %3771, %v3666
        %v3773 = vpop.permute.xlu0 %3772
        %3776 = vset.pattern.permute.xlu0 1
        %3777 = vperm.xlu0 %3776, %v3667
        %v3778 = vpop.permute.xlu0 %3777
        %3781 = vset.pattern.permute.xlu0 1
        %3782 = vperm.xlu0 %3781, %v3668
        %v3783 = vpop.permute.xlu0 %3782
        %3786 = vset.pattern.permute.xlu0 1
        %3787 = vperm.xlu0 %3786, %v3669
        %v3788 = vpop.permute.xlu0 %3787
        %3791 = vset.pattern.permute.xlu0 1
        %3792 = vperm.xlu0 %3791, %v3670
        %v3793 = vpop.permute.xlu0 %3792
        %3796 = vset.pattern.permute.xlu0 1
        %3797 = vperm.xlu0 %3796, %v3671
        %v3798 = vpop.permute.xlu0 %3797
        %3801 = vset.pattern.permute.xlu0 1
        %3802 = vperm.xlu0 %3801, %v3672
        %v3803 = vpop.permute.xlu0 %3802
        %3806 = vset.pattern.permute.xlu0 1
        %3807 = vperm.xlu0 %3806, %v3673
        %v3808 = vpop.permute.xlu0 %3807
        %3811 = vset.pattern.permute.xlu0 1
        %3812 = vperm.xlu0 %3811, %v3674
        %v3813 = vpop.permute.xlu0 %3812
        %3816 = vset.pattern.permute.xlu0 1
        %3817 = vperm.xlu0 %3816, %v3675
        %v3818 = vpop.permute.xlu0 %3817
        %3821 = vset.pattern.permute.xlu0 1
        %3822 = vperm.xlu0 %3821, %v3676
        %v3823 = vpop.permute.xlu0 %3822
        %3826 = vset.pattern.permute.xlu0 1
        %3827 = vperm.xlu0 %3826, %v3677
        %v3828 = vpop.permute.xlu0 %3827
        %3831 = vset.pattern.permute.xlu0 1
        %3832 = vperm.xlu0 %3831, %v3678
        %v3833 = vpop.permute.xlu0 %3832
        %3836 = vset.pattern.permute.xlu0 1
        %3837 = vperm.xlu0 %3836, %v3679
        %v3838 = vpop.permute.xlu0 %3837
        %v3840 = vsel %vm3552, %v3683, 0.0
        %v3841 = vsel %vm3553, %v3683, 0.0
        %v3842 = vsel %vm3554, %v3688, 0.0
        %v3843 = vsel %vm3555, %v3688, 0.0
        %v3844 = vsel %vm3556, %v3693, 0.0
        %v3845 = vsel %vm3557, %v3693, 0.0
        %v3846 = vsel %vm3558, %v3698, 0.0
        %v3847 = vsel %vm3559, %v3698, 0.0
        %v3848 = vsel %vm3560, %v3703, 0.0
        %v3849 = vsel %vm3561, %v3703, 0.0
        %v3850 = vsel %vm3562, %v3708, 0.0
        %v3851 = vsel %vm3563, %v3708, 0.0
        %v3852 = vsel %vm3564, %v3713, 0.0
        %v3853 = vsel %vm3565, %v3713, 0.0
        %v3854 = vsel %vm3566, %v3718, 0.0
        %v3855 = vsel %vm3567, %v3718, 0.0
        %v3856 = vsel %vm3568, %v3723, 0.0
        %v3857 = vsel %vm3569, %v3723, 0.0
        %v3858 = vsel %vm3570, %v3728, 0.0
        %v3859 = vsel %vm3571, %v3728, 0.0
        %v3860 = vsel %vm3572, %v3733, 0.0
        %v3861 = vsel %vm3573, %v3733, 0.0
        %v3862 = vsel %vm3574, %v3738, 0.0
        %v3863 = vsel %vm3575, %v3738, 0.0
        %v3864 = vsel %vm3576, %v3743, 0.0
        %v3865 = vsel %vm3577, %v3743, 0.0
        %v3866 = vsel %vm3578, %v3748, 0.0
        %v3867 = vsel %vm3579, %v3748, 0.0
        %v3868 = vsel %vm3580, %v3753, 0.0
        %v3869 = vsel %vm3581, %v3753, 0.0
        %v3870 = vsel %vm3582, %v3758, 0.0
        %v3871 = vsel %vm3583, %v3758, 0.0
        %v3872 = vsel %vm3584, %v3763, 0.0
        %v3873 = vsel %vm3585, %v3763, 0.0
        %v3874 = vsel %vm3586, %v3768, 0.0
        %v3875 = vsel %vm3587, %v3768, 0.0
        %v3876 = vsel %vm3588, %v3773, 0.0
        %v3877 = vsel %vm3589, %v3773, 0.0
        %v3878 = vsel %vm3590, %v3778, 0.0
        %v3879 = vsel %vm3591, %v3778, 0.0
        %v3880 = vsel %vm3592, %v3783, 0.0
        %v3881 = vsel %vm3593, %v3783, 0.0
        %v3882 = vsel %vm3594, %v3788, 0.0
        %v3883 = vsel %vm3595, %v3788, 0.0
        %v3884 = vsel %vm3596, %v3793, 0.0
        %v3885 = vsel %vm3597, %v3793, 0.0
        %v3886 = vsel %vm3598, %v3798, 0.0
        %v3887 = vsel %vm3599, %v3798, 0.0
        %v3888 = vsel %vm3600, %v3803, 0.0
        %v3889 = vsel %vm3601, %v3803, 0.0
        %v3890 = vsel %vm3602, %v3808, 0.0
        %v3891 = vsel %vm3603, %v3808, 0.0
        %v3892 = vsel %vm3604, %v3813, 0.0
        %v3893 = vsel %vm3605, %v3813, 0.0
        %v3894 = vsel %vm3606, %v3818, 0.0
        %v3895 = vsel %vm3607, %v3818, 0.0
        %v3896 = vsel %vm3608, %v3823, 0.0
        %v3897 = vsel %vm3609, %v3823, 0.0
        %v3898 = vsel %vm3610, %v3828, 0.0
        %v3899 = vsel %vm3611, %v3828, 0.0
        %v3900 = vsel %vm3612, %v3833, 0.0
        %v3901 = vsel %vm3613, %v3833, 0.0
        %v3902 = vsel %vm3614, %v3838, 0.0
        %v3903 = vsel %vm3615, %v3838, 0.0
        %v3904 = vadd.f32 %v1877, %v3840
        %v3905 = vadd.f32 %v1878, %v3841
        %v3906 = vadd.f32 %v1879, %v3842
        %v3907 = vadd.f32 %v1880, %v3843
        %v3908 = vadd.f32 %v1881, %v3844
        %v3909 = vadd.f32 %v1882, %v3845
        %v3910 = vadd.f32 %v1883, %v3846
        %v3911 = vadd.f32 %v1884, %v3847
        %v3912 = vadd.f32 %v1885, %v3848
        %v3913 = vadd.f32 %v1886, %v3849
        %v3914 = vadd.f32 %v1887, %v3850
        %v3915 = vadd.f32 %v1888, %v3851
        %v3916 = vadd.f32 %v1889, %v3852
        %v3917 = vadd.f32 %v1890, %v3853
        %v3918 = vadd.f32 %v1891, %v3854
        %v3919 = vadd.f32 %v1892, %v3855
        %v3920 = vadd.f32 %v1893, %v3856
        %v3921 = vadd.f32 %v1894, %v3857
        %v3922 = vadd.f32 %v1895, %v3858
        %v3923 = vadd.f32 %v1896, %v3859
        %v3924 = vadd.f32 %v1897, %v3860
        %v3925 = vadd.f32 %v1898, %v3861
        %v3926 = vadd.f32 %v1899, %v3862
        %v3927 = vadd.f32 %v1900, %v3863
        %v3928 = vadd.f32 %v1901, %v3864
        %v3929 = vadd.f32 %v1902, %v3865
        %v3930 = vadd.f32 %v1903, %v3866
        %v3931 = vadd.f32 %v1904, %v3867
        %v3932 = vadd.f32 %v1905, %v3868
        %v3933 = vadd.f32 %v1906, %v3869
        %v3934 = vadd.f32 %v1907, %v3870
        %v3935 = vadd.f32 %v1908, %v3871
        %v3936 = vadd.f32 %v1909, %v3872
        %v3937 = vadd.f32 %v1910, %v3873
        %v3938 = vadd.f32 %v1911, %v3874
        %v3939 = vadd.f32 %v1912, %v3875
        %v3940 = vadd.f32 %v1913, %v3876
        %v3941 = vadd.f32 %v1914, %v3877
        %v3942 = vadd.f32 %v1915, %v3878
        %v3943 = vadd.f32 %v1916, %v3879
        %v3944 = vadd.f32 %v1917, %v3880
        %v3945 = vadd.f32 %v1918, %v3881
        %v3946 = vadd.f32 %v1919, %v3882
        %v3947 = vadd.f32 %v1920, %v3883
        %v3948 = vadd.f32 %v1921, %v3884
        %v3949 = vadd.f32 %v1922, %v3885
        %v3950 = vadd.f32 %v1923, %v3886
        %v3951 = vadd.f32 %v1924, %v3887
        %v3952 = vadd.f32 %v1925, %v3888
        %v3953 = vadd.f32 %v1926, %v3889
        %v3954 = vadd.f32 %v1927, %v3890
        %v3955 = vadd.f32 %v1928, %v3891
        %v3956 = vadd.f32 %v1929, %v3892
        %v3957 = vadd.f32 %v1930, %v3893
        %v3958 = vadd.f32 %v1931, %v3894
        %v3959 = vadd.f32 %v1932, %v3895
        %v3960 = vadd.f32 %v1933, %v3896
        %v3961 = vadd.f32 %v1934, %v3897
        %v3962 = vadd.f32 %v1935, %v3898
        %v3963 = vadd.f32 %v1936, %v3899
        %v3964 = vadd.f32 %v1937, %v3900
        %v3965 = vadd.f32 %v1938, %v3901
        %v3966 = vadd.f32 %v1939, %v3902
        %v3967 = vadd.f32 %v1940, %v3903
        %3969 = vset.pattern.permute.xlu0 1
        %3970 = vperm.xlu0 %3969, %v3360
        %v3971 = vpop.permute.xlu0 %3970
        %3974 = vset.pattern.permute.xlu0 1
        %3975 = vperm.xlu0 %3974, %v3361
        %v3976 = vpop.permute.xlu0 %3975
        %3979 = vset.pattern.permute.xlu0 1
        %3980 = vperm.xlu0 %3979, %v3362
        %v3981 = vpop.permute.xlu0 %3980
        %3984 = vset.pattern.permute.xlu0 1
        %3985 = vperm.xlu0 %3984, %v3363
        %v3986 = vpop.permute.xlu0 %3985
        %3989 = vset.pattern.permute.xlu0 1
        %3990 = vperm.xlu0 %3989, %v3364
        %v3991 = vpop.permute.xlu0 %3990
        %3994 = vset.pattern.permute.xlu0 1
        %3995 = vperm.xlu0 %3994, %v3365
        %v3996 = vpop.permute.xlu0 %3995
        %3999 = vset.pattern.permute.xlu0 1
        %4000 = vperm.xlu0 %3999, %v3366
        %v4001 = vpop.permute.xlu0 %4000
        %4004 = vset.pattern.permute.xlu0 1
        %4005 = vperm.xlu0 %4004, %v3367
        %v4006 = vpop.permute.xlu0 %4005
        %4009 = vset.pattern.permute.xlu0 1
        %4010 = vperm.xlu0 %4009, %v3368
        %v4011 = vpop.permute.xlu0 %4010
        %4014 = vset.pattern.permute.xlu0 1
        %4015 = vperm.xlu0 %4014, %v3369
        %v4016 = vpop.permute.xlu0 %4015
        %4019 = vset.pattern.permute.xlu0 1
        %4020 = vperm.xlu0 %4019, %v3370
        %v4021 = vpop.permute.xlu0 %4020
        %4024 = vset.pattern.permute.xlu0 1
        %4025 = vperm.xlu0 %4024, %v3371
        %v4026 = vpop.permute.xlu0 %4025
        %4029 = vset.pattern.permute.xlu0 1
        %4030 = vperm.xlu0 %4029, %v3372
        %v4031 = vpop.permute.xlu0 %4030
        %4034 = vset.pattern.permute.xlu0 1
        %4035 = vperm.xlu0 %4034, %v3373
        %v4036 = vpop.permute.xlu0 %4035
        %4039 = vset.pattern.permute.xlu0 1
        %4040 = vperm.xlu0 %4039, %v3374
        %v4041 = vpop.permute.xlu0 %4040
        %4044 = vset.pattern.permute.xlu0 1
        %4045 = vperm.xlu0 %4044, %v3375
        %v4046 = vpop.permute.xlu0 %4045
        %4049 = vset.pattern.permute.xlu0 1
        %4050 = vperm.xlu0 %4049, %v3376
        %v4051 = vpop.permute.xlu0 %4050
        %4054 = vset.pattern.permute.xlu0 1
        %4055 = vperm.xlu0 %4054, %v3377
        %v4056 = vpop.permute.xlu0 %4055
        %4059 = vset.pattern.permute.xlu0 1
        %4060 = vperm.xlu0 %4059, %v3378
        %v4061 = vpop.permute.xlu0 %4060
        %4064 = vset.pattern.permute.xlu0 1
        %4065 = vperm.xlu0 %4064, %v3379
        %v4066 = vpop.permute.xlu0 %4065
        %4069 = vset.pattern.permute.xlu0 1
        %4070 = vperm.xlu0 %4069, %v3380
        %v4071 = vpop.permute.xlu0 %4070
        %4074 = vset.pattern.permute.xlu0 1
        %4075 = vperm.xlu0 %4074, %v3381
        %v4076 = vpop.permute.xlu0 %4075
        %4079 = vset.pattern.permute.xlu0 1
        %4080 = vperm.xlu0 %4079, %v3382
        %v4081 = vpop.permute.xlu0 %4080
        %4084 = vset.pattern.permute.xlu0 1
        %4085 = vperm.xlu0 %4084, %v3383
        %v4086 = vpop.permute.xlu0 %4085
        %4089 = vset.pattern.permute.xlu0 1
        %4090 = vperm.xlu0 %4089, %v3384
        %v4091 = vpop.permute.xlu0 %4090
        %4094 = vset.pattern.permute.xlu0 1
        %4095 = vperm.xlu0 %4094, %v3385
        %v4096 = vpop.permute.xlu0 %4095
        %4099 = vset.pattern.permute.xlu0 1
        %4100 = vperm.xlu0 %4099, %v3386
        %v4101 = vpop.permute.xlu0 %4100
        %4104 = vset.pattern.permute.xlu0 1
        %4105 = vperm.xlu0 %4104, %v3387
        %v4106 = vpop.permute.xlu0 %4105
        %4109 = vset.pattern.permute.xlu0 1
        %4110 = vperm.xlu0 %4109, %v3388
        %v4111 = vpop.permute.xlu0 %4110
        %4114 = vset.pattern.permute.xlu0 1
        %4115 = vperm.xlu0 %4114, %v3389
        %v4116 = vpop.permute.xlu0 %4115
        %4119 = vset.pattern.permute.xlu0 1
        %4120 = vperm.xlu0 %4119, %v3390
        %v4121 = vpop.permute.xlu0 %4120
        %4124 = vset.pattern.permute.xlu0 1
        %4125 = vperm.xlu0 %4124, %v3391
        %v4126 = vpop.permute.xlu0 %4125
        %vm4128 = vcmp.eq.f32.partialorder %v814, %v3971
        %vm4129 = vcmp.eq.f32.partialorder %v818, %v3971
        %vm4130 = vcmp.eq.f32.partialorder %v814, %v3976
        %vm4131 = vcmp.eq.f32.partialorder %v818, %v3976
        %vm4132 = vcmp.eq.f32.partialorder %v814, %v3981
        %vm4133 = vcmp.eq.f32.partialorder %v818, %v3981
        %vm4134 = vcmp.eq.f32.partialorder %v814, %v3986
        %vm4135 = vcmp.eq.f32.partialorder %v818, %v3986
        %vm4136 = vcmp.eq.f32.partialorder %v814, %v3991
        %vm4137 = vcmp.eq.f32.partialorder %v818, %v3991
        %vm4138 = vcmp.eq.f32.partialorder %v814, %v3996
        %vm4139 = vcmp.eq.f32.partialorder %v818, %v3996
        %vm4140 = vcmp.eq.f32.partialorder %v814, %v4001
        %vm4141 = vcmp.eq.f32.partialorder %v818, %v4001
        %vm4142 = vcmp.eq.f32.partialorder %v814, %v4006
        %vm4143 = vcmp.eq.f32.partialorder %v818, %v4006
        %vm4144 = vcmp.eq.f32.partialorder %v814, %v4011
        %vm4145 = vcmp.eq.f32.partialorder %v818, %v4011
        %vm4146 = vcmp.eq.f32.partialorder %v814, %v4016
        %vm4147 = vcmp.eq.f32.partialorder %v818, %v4016
        %vm4148 = vcmp.eq.f32.partialorder %v814, %v4021
        %vm4149 = vcmp.eq.f32.partialorder %v818, %v4021
        %vm4150 = vcmp.eq.f32.partialorder %v814, %v4026
        %vm4151 = vcmp.eq.f32.partialorder %v818, %v4026
        %vm4152 = vcmp.eq.f32.partialorder %v814, %v4031
        %vm4153 = vcmp.eq.f32.partialorder %v818, %v4031
        %vm4154 = vcmp.eq.f32.partialorder %v814, %v4036
        %vm4155 = vcmp.eq.f32.partialorder %v818, %v4036
        %vm4156 = vcmp.eq.f32.partialorder %v814, %v4041
        %vm4157 = vcmp.eq.f32.partialorder %v818, %v4041
        %vm4158 = vcmp.eq.f32.partialorder %v814, %v4046
        %vm4159 = vcmp.eq.f32.partialorder %v818, %v4046
        %vm4160 = vcmp.eq.f32.partialorder %v814, %v4051
        %vm4161 = vcmp.eq.f32.partialorder %v818, %v4051
        %vm4162 = vcmp.eq.f32.partialorder %v814, %v4056
        %vm4163 = vcmp.eq.f32.partialorder %v818, %v4056
        %vm4164 = vcmp.eq.f32.partialorder %v814, %v4061
        %vm4165 = vcmp.eq.f32.partialorder %v818, %v4061
        %vm4166 = vcmp.eq.f32.partialorder %v814, %v4066
        %vm4167 = vcmp.eq.f32.partialorder %v818, %v4066
        %vm4168 = vcmp.eq.f32.partialorder %v814, %v4071
        %vm4169 = vcmp.eq.f32.partialorder %v818, %v4071
        %vm4170 = vcmp.eq.f32.partialorder %v814, %v4076
        %vm4171 = vcmp.eq.f32.partialorder %v818, %v4076
        %vm4172 = vcmp.eq.f32.partialorder %v814, %v4081
        %vm4173 = vcmp.eq.f32.partialorder %v818, %v4081
        %vm4174 = vcmp.eq.f32.partialorder %v814, %v4086
        %vm4175 = vcmp.eq.f32.partialorder %v818, %v4086
        %vm4176 = vcmp.eq.f32.partialorder %v814, %v4091
        %vm4177 = vcmp.eq.f32.partialorder %v818, %v4091
        %vm4178 = vcmp.eq.f32.partialorder %v814, %v4096
        %vm4179 = vcmp.eq.f32.partialorder %v818, %v4096
        %vm4180 = vcmp.eq.f32.partialorder %v814, %v4101
        %vm4181 = vcmp.eq.f32.partialorder %v818, %v4101
        %vm4182 = vcmp.eq.f32.partialorder %v814, %v4106
        %vm4183 = vcmp.eq.f32.partialorder %v818, %v4106
        %vm4184 = vcmp.eq.f32.partialorder %v814, %v4111
        %vm4185 = vcmp.eq.f32.partialorder %v818, %v4111
        %vm4186 = vcmp.eq.f32.partialorder %v814, %v4116
        %vm4187 = vcmp.eq.f32.partialorder %v818, %v4116
        %vm4188 = vcmp.eq.f32.partialorder %v814, %v4121
        %vm4189 = vcmp.eq.f32.partialorder %v818, %v4121
        %vm4190 = vcmp.eq.f32.partialorder %v814, %v4126
        %vm4191 = vcmp.eq.f32.partialorder %v818, %v4126
        %v4192 = vmul.f32 %v3296, %v3168
        %v4193 = vmul.f32 %v3297, %v3169
        %v4194 = vmul.f32 %v3298, %v3170
        %v4195 = vmul.f32 %v3299, %v3171
        %v4196 = vmul.f32 %v3300, %v3172
        %v4197 = vmul.f32 %v3301, %v3173
        %v4198 = vmul.f32 %v3302, %v3174
        %v4199 = vmul.f32 %v3303, %v3175
        %v4200 = vmul.f32 %v3304, %v3176
        %v4201 = vmul.f32 %v3305, %v3177
        %v4202 = vmul.f32 %v3306, %v3178
        %v4203 = vmul.f32 %v3307, %v3179
        %v4204 = vmul.f32 %v3308, %v3180
        %v4205 = vmul.f32 %v3309, %v3181
        %v4206 = vmul.f32 %v3310, %v3182
        %v4207 = vmul.f32 %v3311, %v3183
        %v4208 = vmul.f32 %v3312, %v3184
        %v4209 = vmul.f32 %v3313, %v3185
        %v4210 = vmul.f32 %v3314, %v3186
        %v4211 = vmul.f32 %v3315, %v3187
        %v4212 = vmul.f32 %v3316, %v3188
        %v4213 = vmul.f32 %v3317, %v3189
        %v4214 = vmul.f32 %v3318, %v3190
        %v4215 = vmul.f32 %v3319, %v3191
        %v4216 = vmul.f32 %v3320, %v3192
        %v4217 = vmul.f32 %v3321, %v3193
        %v4218 = vmul.f32 %v3322, %v3194
        %v4219 = vmul.f32 %v3323, %v3195
        %v4220 = vmul.f32 %v3324, %v3196
        %v4221 = vmul.f32 %v3325, %v3197
        %v4222 = vmul.f32 %v3326, %v3198
        %v4223 = vmul.f32 %v3327, %v3199
        %4225 = vset.pattern.permute.xlu0 1
        %4226 = vperm.xlu0 %4225, %v4192
        %v4227 = vpop.permute.xlu0 %4226
        %4230 = vset.pattern.permute.xlu0 1
        %4231 = vperm.xlu0 %4230, %v4193
        %v4232 = vpop.permute.xlu0 %4231
        %4235 = vset.pattern.permute.xlu0 1
        %4236 = vperm.xlu0 %4235, %v4194
        %v4237 = vpop.permute.xlu0 %4236
        %4240 = vset.pattern.permute.xlu0 1
        %4241 = vperm.xlu0 %4240, %v4195
        %v4242 = vpop.permute.xlu0 %4241
        %4245 = vset.pattern.permute.xlu0 1
        %4246 = vperm.xlu0 %4245, %v4196
        %v4247 = vpop.permute.xlu0 %4246
        %4250 = vset.pattern.permute.xlu0 1
        %4251 = vperm.xlu0 %4250, %v4197
        %v4252 = vpop.permute.xlu0 %4251
        %4255 = vset.pattern.permute.xlu0 1
        %4256 = vperm.xlu0 %4255, %v4198
        %v4257 = vpop.permute.xlu0 %4256
        %4260 = vset.pattern.permute.xlu0 1
        %4261 = vperm.xlu0 %4260, %v4199
        %v4262 = vpop.permute.xlu0 %4261
        %4265 = vset.pattern.permute.xlu0 1
        %4266 = vperm.xlu0 %4265, %v4200
        %v4267 = vpop.permute.xlu0 %4266
        %4270 = vset.pattern.permute.xlu0 1
        %4271 = vperm.xlu0 %4270, %v4201
        %v4272 = vpop.permute.xlu0 %4271
        %4275 = vset.pattern.permute.xlu0 1
        %4276 = vperm.xlu0 %4275, %v4202
        %v4277 = vpop.permute.xlu0 %4276
        %4280 = vset.pattern.permute.xlu0 1
        %4281 = vperm.xlu0 %4280, %v4203
        %v4282 = vpop.permute.xlu0 %4281
        %4285 = vset.pattern.permute.xlu0 1
        %4286 = vperm.xlu0 %4285, %v4204
        %v4287 = vpop.permute.xlu0 %4286
        %4290 = vset.pattern.permute.xlu0 1
        %4291 = vperm.xlu0 %4290, %v4205
        %v4292 = vpop.permute.xlu0 %4291
        %4295 = vset.pattern.permute.xlu0 1
        %4296 = vperm.xlu0 %4295, %v4206
        %v4297 = vpop.permute.xlu0 %4296
        %4300 = vset.pattern.permute.xlu0 1
        %4301 = vperm.xlu0 %4300, %v4207
        %v4302 = vpop.permute.xlu0 %4301
        %4305 = vset.pattern.permute.xlu0 1
        %4306 = vperm.xlu0 %4305, %v4208
        %v4307 = vpop.permute.xlu0 %4306
        %4310 = vset.pattern.permute.xlu0 1
        %4311 = vperm.xlu0 %4310, %v4209
        %v4312 = vpop.permute.xlu0 %4311
        %4315 = vset.pattern.permute.xlu0 1
        %4316 = vperm.xlu0 %4315, %v4210
        %v4317 = vpop.permute.xlu0 %4316
        %4320 = vset.pattern.permute.xlu0 1
        %4321 = vperm.xlu0 %4320, %v4211
        %v4322 = vpop.permute.xlu0 %4321
        %4325 = vset.pattern.permute.xlu0 1
        %4326 = vperm.xlu0 %4325, %v4212
        %v4327 = vpop.permute.xlu0 %4326
        %4330 = vset.pattern.permute.xlu0 1
        %4331 = vperm.xlu0 %4330, %v4213
        %v4332 = vpop.permute.xlu0 %4331
        %4335 = vset.pattern.permute.xlu0 1
        %4336 = vperm.xlu0 %4335, %v4214
        %v4337 = vpop.permute.xlu0 %4336
        %4340 = vset.pattern.permute.xlu0 1
        %4341 = vperm.xlu0 %4340, %v4215
        %v4342 = vpop.permute.xlu0 %4341
        %4345 = vset.pattern.permute.xlu0 1
        %4346 = vperm.xlu0 %4345, %v4216
        %v4347 = vpop.permute.xlu0 %4346
        %4350 = vset.pattern.permute.xlu0 1
        %4351 = vperm.xlu0 %4350, %v4217
        %v4352 = vpop.permute.xlu0 %4351
        %4355 = vset.pattern.permute.xlu0 1
        %4356 = vperm.xlu0 %4355, %v4218
        %v4357 = vpop.permute.xlu0 %4356
        %4360 = vset.pattern.permute.xlu0 1
        %4361 = vperm.xlu0 %4360, %v4219
        %v4362 = vpop.permute.xlu0 %4361
        %4365 = vset.pattern.permute.xlu0 1
        %4366 = vperm.xlu0 %4365, %v4220
        %v4367 = vpop.permute.xlu0 %4366
        %4370 = vset.pattern.permute.xlu0 1
        %4371 = vperm.xlu0 %4370, %v4221
        %v4372 = vpop.permute.xlu0 %4371
        %4375 = vset.pattern.permute.xlu0 1
        %4376 = vperm.xlu0 %4375, %v4222
        %v4377 = vpop.permute.xlu0 %4376
        %4380 = vset.pattern.permute.xlu0 1
        %4381 = vperm.xlu0 %4380, %v4223
        %v4382 = vpop.permute.xlu0 %4381
        %v4384 = vsel %vm4128, %v4227, 0.0
        %v4385 = vsel %vm4129, %v4227, 0.0
        %v4386 = vsel %vm4130, %v4232, 0.0
        %v4387 = vsel %vm4131, %v4232, 0.0
        %v4388 = vsel %vm4132, %v4237, 0.0
        %v4389 = vsel %vm4133, %v4237, 0.0
        %v4390 = vsel %vm4134, %v4242, 0.0
        %v4391 = vsel %vm4135, %v4242, 0.0
        %v4392 = vsel %vm4136, %v4247, 0.0
        %v4393 = vsel %vm4137, %v4247, 0.0
        %v4394 = vsel %vm4138, %v4252, 0.0
        %v4395 = vsel %vm4139, %v4252, 0.0
        %v4396 = vsel %vm4140, %v4257, 0.0
        %v4397 = vsel %vm4141, %v4257, 0.0
        %v4398 = vsel %vm4142, %v4262, 0.0
        %v4399 = vsel %vm4143, %v4262, 0.0
        %v4400 = vsel %vm4144, %v4267, 0.0
        %v4401 = vsel %vm4145, %v4267, 0.0
        %v4402 = vsel %vm4146, %v4272, 0.0
        %v4403 = vsel %vm4147, %v4272, 0.0
        %v4404 = vsel %vm4148, %v4277, 0.0
        %v4405 = vsel %vm4149, %v4277, 0.0
        %v4406 = vsel %vm4150, %v4282, 0.0
        %v4407 = vsel %vm4151, %v4282, 0.0
        %v4408 = vsel %vm4152, %v4287, 0.0
        %v4409 = vsel %vm4153, %v4287, 0.0
        %v4410 = vsel %vm4154, %v4292, 0.0
        %v4411 = vsel %vm4155, %v4292, 0.0
        %v4412 = vsel %vm4156, %v4297, 0.0
        %v4413 = vsel %vm4157, %v4297, 0.0
        %v4414 = vsel %vm4158, %v4302, 0.0
        %v4415 = vsel %vm4159, %v4302, 0.0
        %v4416 = vsel %vm4160, %v4307, 0.0
        %v4417 = vsel %vm4161, %v4307, 0.0
        %v4418 = vsel %vm4162, %v4312, 0.0
        %v4419 = vsel %vm4163, %v4312, 0.0
        %v4420 = vsel %vm4164, %v4317, 0.0
        %v4421 = vsel %vm4165, %v4317, 0.0
        %v4422 = vsel %vm4166, %v4322, 0.0
        %v4423 = vsel %vm4167, %v4322, 0.0
        %v4424 = vsel %vm4168, %v4327, 0.0
        %v4425 = vsel %vm4169, %v4327, 0.0
        %v4426 = vsel %vm4170, %v4332, 0.0
        %v4427 = vsel %vm4171, %v4332, 0.0
        %v4428 = vsel %vm4172, %v4337, 0.0
        %v4429 = vsel %vm4173, %v4337, 0.0
        %v4430 = vsel %vm4174, %v4342, 0.0
        %v4431 = vsel %vm4175, %v4342, 0.0
        %v4432 = vsel %vm4176, %v4347, 0.0
        %v4433 = vsel %vm4177, %v4347, 0.0
        %v4434 = vsel %vm4178, %v4352, 0.0
        %v4435 = vsel %vm4179, %v4352, 0.0
        %v4436 = vsel %vm4180, %v4357, 0.0
        %v4437 = vsel %vm4181, %v4357, 0.0
        %v4438 = vsel %vm4182, %v4362, 0.0
        %v4439 = vsel %vm4183, %v4362, 0.0
        %v4440 = vsel %vm4184, %v4367, 0.0
        %v4441 = vsel %vm4185, %v4367, 0.0
        %v4442 = vsel %vm4186, %v4372, 0.0
        %v4443 = vsel %vm4187, %v4372, 0.0
        %v4444 = vsel %vm4188, %v4377, 0.0
        %v4445 = vsel %vm4189, %v4377, 0.0
        %v4446 = vsel %vm4190, %v4382, 0.0
        %v4447 = vsel %vm4191, %v4382, 0.0
        %v4448 = vadd.f32 %v3904, %v4384
        %v4449 = vadd.f32 %v3905, %v4385
        %v4450 = vadd.f32 %v3906, %v4386
        %v4451 = vadd.f32 %v3907, %v4387
        %v4452 = vadd.f32 %v3908, %v4388
        %v4453 = vadd.f32 %v3909, %v4389
        %v4454 = vadd.f32 %v3910, %v4390
        %v4455 = vadd.f32 %v3911, %v4391
        %v4456 = vadd.f32 %v3912, %v4392
        %v4457 = vadd.f32 %v3913, %v4393
        %v4458 = vadd.f32 %v3914, %v4394
        %v4459 = vadd.f32 %v3915, %v4395
        %v4460 = vadd.f32 %v3916, %v4396
        %v4461 = vadd.f32 %v3917, %v4397
        %v4462 = vadd.f32 %v3918, %v4398
        %v4463 = vadd.f32 %v3919, %v4399
        %v4464 = vadd.f32 %v3920, %v4400
        %v4465 = vadd.f32 %v3921, %v4401
        %v4466 = vadd.f32 %v3922, %v4402
        %v4467 = vadd.f32 %v3923, %v4403
        %v4468 = vadd.f32 %v3924, %v4404
        %v4469 = vadd.f32 %v3925, %v4405
        %v4470 = vadd.f32 %v3926, %v4406
        %v4471 = vadd.f32 %v3927, %v4407
        %v4472 = vadd.f32 %v3928, %v4408
        %v4473 = vadd.f32 %v3929, %v4409
        %v4474 = vadd.f32 %v3930, %v4410
        %v4475 = vadd.f32 %v3931, %v4411
        %v4476 = vadd.f32 %v3932, %v4412
        %v4477 = vadd.f32 %v3933, %v4413
        %v4478 = vadd.f32 %v3934, %v4414
        %v4479 = vadd.f32 %v3935, %v4415
        %v4480 = vadd.f32 %v3936, %v4416
        %v4481 = vadd.f32 %v3937, %v4417
        %v4482 = vadd.f32 %v3938, %v4418
        %v4483 = vadd.f32 %v3939, %v4419
        %v4484 = vadd.f32 %v3940, %v4420
        %v4485 = vadd.f32 %v3941, %v4421
        %v4486 = vadd.f32 %v3942, %v4422
        %v4487 = vadd.f32 %v3943, %v4423
        %v4488 = vadd.f32 %v3944, %v4424
        %v4489 = vadd.f32 %v3945, %v4425
        %v4490 = vadd.f32 %v3946, %v4426
        %v4491 = vadd.f32 %v3947, %v4427
        %v4492 = vadd.f32 %v3948, %v4428
        %v4493 = vadd.f32 %v3949, %v4429
        %v4494 = vadd.f32 %v3950, %v4430
        %v4495 = vadd.f32 %v3951, %v4431
        %v4496 = vadd.f32 %v3952, %v4432
        %v4497 = vadd.f32 %v3953, %v4433
        %v4498 = vadd.f32 %v3954, %v4434
        %v4499 = vadd.f32 %v3955, %v4435
        %v4500 = vadd.f32 %v3956, %v4436
        %v4501 = vadd.f32 %v3957, %v4437
        %v4502 = vadd.f32 %v3958, %v4438
        %v4503 = vadd.f32 %v3959, %v4439
        %v4504 = vadd.f32 %v3960, %v4440
        %v4505 = vadd.f32 %v3961, %v4441
        %v4506 = vadd.f32 %v3962, %v4442
        %v4507 = vadd.f32 %v3963, %v4443
        %v4508 = vadd.f32 %v3964, %v4444
        %v4509 = vadd.f32 %v3965, %v4445
        %v4510 = vadd.f32 %v3966, %v4446
        %v4511 = vadd.f32 %v3967, %v4447
        %v4512 = vadd.f32 %v1941, %v3168
        %v4513 = vadd.f32 %v1942, %v3169
        %v4514 = vadd.f32 %v1943, %v3170
        %v4515 = vadd.f32 %v1944, %v3171
        %v4516 = vadd.f32 %v1945, %v3172
        %v4517 = vadd.f32 %v1946, %v3173
        %v4518 = vadd.f32 %v1947, %v3174
        %v4519 = vadd.f32 %v1948, %v3175
        %v4520 = vadd.f32 %v1949, %v3176
        %v4521 = vadd.f32 %v1950, %v3177
        %v4522 = vadd.f32 %v1951, %v3178
        %v4523 = vadd.f32 %v1952, %v3179
        %v4524 = vadd.f32 %v1953, %v3180
        %v4525 = vadd.f32 %v1954, %v3181
        %v4526 = vadd.f32 %v1955, %v3182
        %v4527 = vadd.f32 %v1956, %v3183
        %v4528 = vadd.f32 %v1957, %v3184
        %v4529 = vadd.f32 %v1958, %v3185
        %v4530 = vadd.f32 %v1959, %v3186
        %v4531 = vadd.f32 %v1960, %v3187
        %v4532 = vadd.f32 %v1961, %v3188
        %v4533 = vadd.f32 %v1962, %v3189
        %v4534 = vadd.f32 %v1963, %v3190
        %v4535 = vadd.f32 %v1964, %v3191
        %v4536 = vadd.f32 %v1965, %v3192
        %v4537 = vadd.f32 %v1966, %v3193
        %v4538 = vadd.f32 %v1967, %v3194
        %v4539 = vadd.f32 %v1968, %v3195
        %v4540 = vadd.f32 %v1969, %v3196
        %v4541 = vadd.f32 %v1970, %v3197
        %v4542 = vadd.f32 %v1971, %v3198
        %v4543 = vadd.f32 %v1972, %v3199
        %4544 = vset.pattern.permute.xlu0 0
        %4545 = vperm.xlu0 %4544, %v3264
        %v4546 = vpop.permute.xlu0 %4545
        %4548 = vset.pattern.permute.xlu0 0
        %4549 = vperm.xlu0 %4548, %v3265
        %v4550 = vpop.permute.xlu0 %4549
        %4552 = vset.pattern.permute.xlu0 0
        %4553 = vperm.xlu0 %4552, %v3266
        %v4554 = vpop.permute.xlu0 %4553
        %4556 = vset.pattern.permute.xlu0 0
        %4557 = vperm.xlu0 %4556, %v3267
        %v4558 = vpop.permute.xlu0 %4557
        %4560 = vset.pattern.permute.xlu0 0
        %4561 = vperm.xlu0 %4560, %v3268
        %v4562 = vpop.permute.xlu0 %4561
        %4564 = vset.pattern.permute.xlu0 0
        %4565 = vperm.xlu0 %4564, %v3269
        %v4566 = vpop.permute.xlu0 %4565
        %4568 = vset.pattern.permute.xlu0 0
        %4569 = vperm.xlu0 %4568, %v3270
        %v4570 = vpop.permute.xlu0 %4569
        %4572 = vset.pattern.permute.xlu0 0
        %4573 = vperm.xlu0 %4572, %v3271
        %v4574 = vpop.permute.xlu0 %4573
        %4576 = vset.pattern.permute.xlu0 0
        %4577 = vperm.xlu0 %4576, %v3272
        %v4578 = vpop.permute.xlu0 %4577
        %4580 = vset.pattern.permute.xlu0 0
        %4581 = vperm.xlu0 %4580, %v3273
        %v4582 = vpop.permute.xlu0 %4581
        %4584 = vset.pattern.permute.xlu0 0
        %4585 = vperm.xlu0 %4584, %v3274
        %v4586 = vpop.permute.xlu0 %4585
        %4588 = vset.pattern.permute.xlu0 0
        %4589 = vperm.xlu0 %4588, %v3275
        %v4590 = vpop.permute.xlu0 %4589
        %4592 = vset.pattern.permute.xlu0 0
        %4593 = vperm.xlu0 %4592, %v3276
        %v4594 = vpop.permute.xlu0 %4593
        %4596 = vset.pattern.permute.xlu0 0
        %4597 = vperm.xlu0 %4596, %v3277
        %v4598 = vpop.permute.xlu0 %4597
        %4600 = vset.pattern.permute.xlu0 0
        %4601 = vperm.xlu0 %4600, %v3278
        %v4602 = vpop.permute.xlu0 %4601
        %4604 = vset.pattern.permute.xlu0 0
        %4605 = vperm.xlu0 %4604, %v3279
        %v4606 = vpop.permute.xlu0 %4605
        %4608 = vset.pattern.permute.xlu0 0
        %4609 = vperm.xlu0 %4608, %v3280
        %v4610 = vpop.permute.xlu0 %4609
        %4612 = vset.pattern.permute.xlu0 0
        %4613 = vperm.xlu0 %4612, %v3281
        %v4614 = vpop.permute.xlu0 %4613
        %4616 = vset.pattern.permute.xlu0 0
        %4617 = vperm.xlu0 %4616, %v3282
        %v4618 = vpop.permute.xlu0 %4617
        %4620 = vset.pattern.permute.xlu0 0
        %4621 = vperm.xlu0 %4620, %v3283
        %v4622 = vpop.permute.xlu0 %4621
        %4624 = vset.pattern.permute.xlu0 0
        %4625 = vperm.xlu0 %4624, %v3284
        %v4626 = vpop.permute.xlu0 %4625
        %4628 = vset.pattern.permute.xlu0 0
        %4629 = vperm.xlu0 %4628, %v3285
        %v4630 = vpop.permute.xlu0 %4629
        %4632 = vset.pattern.permute.xlu0 0
        %4633 = vperm.xlu0 %4632, %v3286
        %v4634 = vpop.permute.xlu0 %4633
        %4636 = vset.pattern.permute.xlu0 0
        %4637 = vperm.xlu0 %4636, %v3287
        %v4638 = vpop.permute.xlu0 %4637
        %4640 = vset.pattern.permute.xlu0 0
        %4641 = vperm.xlu0 %4640, %v3288
        %v4642 = vpop.permute.xlu0 %4641
        %4644 = vset.pattern.permute.xlu0 0
        %4645 = vperm.xlu0 %4644, %v3289
        %v4646 = vpop.permute.xlu0 %4645
        %4648 = vset.pattern.permute.xlu0 0
        %4649 = vperm.xlu0 %4648, %v3290
        %v4650 = vpop.permute.xlu0 %4649
        %4652 = vset.pattern.permute.xlu0 0
        %4653 = vperm.xlu0 %4652, %v3291
        %v4654 = vpop.permute.xlu0 %4653
        %4656 = vset.pattern.permute.xlu0 0
        %4657 = vperm.xlu0 %4656, %v3292
        %v4658 = vpop.permute.xlu0 %4657
        %4660 = vset.pattern.permute.xlu0 0
        %4661 = vperm.xlu0 %4660, %v3293
        %v4662 = vpop.permute.xlu0 %4661
        %4664 = vset.pattern.permute.xlu0 0
        %4665 = vperm.xlu0 %4664, %v3294
        %v4666 = vpop.permute.xlu0 %4665
        %4668 = vset.pattern.permute.xlu0 0
        %4669 = vperm.xlu0 %4668, %v3295
        %v4670 = vpop.permute.xlu0 %4669
        %vm4672 = vcmp.eq.f32.partialorder %v1977, %v4546
        %vm4673 = vcmp.eq.f32.partialorder %v1981, %v4546
        %vm4674 = vcmp.eq.f32.partialorder %v1977, %v4550
        %vm4675 = vcmp.eq.f32.partialorder %v1981, %v4550
        %vm4676 = vcmp.eq.f32.partialorder %v1977, %v4554
        %vm4677 = vcmp.eq.f32.partialorder %v1981, %v4554
        %vm4678 = vcmp.eq.f32.partialorder %v1977, %v4558
        %vm4679 = vcmp.eq.f32.partialorder %v1981, %v4558
        %vm4680 = vcmp.eq.f32.partialorder %v1977, %v4562
        %vm4681 = vcmp.eq.f32.partialorder %v1981, %v4562
        %vm4682 = vcmp.eq.f32.partialorder %v1977, %v4566
        %vm4683 = vcmp.eq.f32.partialorder %v1981, %v4566
        %vm4684 = vcmp.eq.f32.partialorder %v1977, %v4570
        %vm4685 = vcmp.eq.f32.partialorder %v1981, %v4570
        %vm4686 = vcmp.eq.f32.partialorder %v1977, %v4574
        %vm4687 = vcmp.eq.f32.partialorder %v1981, %v4574
        %vm4688 = vcmp.eq.f32.partialorder %v1977, %v4578
        %vm4689 = vcmp.eq.f32.partialorder %v1981, %v4578
        %vm4690 = vcmp.eq.f32.partialorder %v1977, %v4582
        %vm4691 = vcmp.eq.f32.partialorder %v1981, %v4582
        %vm4692 = vcmp.eq.f32.partialorder %v1977, %v4586
        %vm4693 = vcmp.eq.f32.partialorder %v1981, %v4586
        %vm4694 = vcmp.eq.f32.partialorder %v1977, %v4590
        %vm4695 = vcmp.eq.f32.partialorder %v1981, %v4590
        %vm4696 = vcmp.eq.f32.partialorder %v1977, %v4594
        %vm4697 = vcmp.eq.f32.partialorder %v1981, %v4594
        %vm4698 = vcmp.eq.f32.partialorder %v1977, %v4598
        %vm4699 = vcmp.eq.f32.partialorder %v1981, %v4598
        %vm4700 = vcmp.eq.f32.partialorder %v1977, %v4602
        %vm4701 = vcmp.eq.f32.partialorder %v1981, %v4602
        %vm4702 = vcmp.eq.f32.partialorder %v1977, %v4606
        %vm4703 = vcmp.eq.f32.partialorder %v1981, %v4606
        %vm4704 = vcmp.eq.f32.partialorder %v1977, %v4610
        %vm4705 = vcmp.eq.f32.partialorder %v1981, %v4610
        %vm4706 = vcmp.eq.f32.partialorder %v1977, %v4614
        %vm4707 = vcmp.eq.f32.partialorder %v1981, %v4614
        %vm4708 = vcmp.eq.f32.partialorder %v1977, %v4618
        %vm4709 = vcmp.eq.f32.partialorder %v1981, %v4618
        %vm4710 = vcmp.eq.f32.partialorder %v1977, %v4622
        %vm4711 = vcmp.eq.f32.partialorder %v1981, %v4622
        %vm4712 = vcmp.eq.f32.partialorder %v1977, %v4626
        %vm4713 = vcmp.eq.f32.partialorder %v1981, %v4626
        %vm4714 = vcmp.eq.f32.partialorder %v1977, %v4630
        %vm4715 = vcmp.eq.f32.partialorder %v1981, %v4630
        %vm4716 = vcmp.eq.f32.partialorder %v1977, %v4634
        %vm4717 = vcmp.eq.f32.partialorder %v1981, %v4634
        %vm4718 = vcmp.eq.f32.partialorder %v1977, %v4638
        %vm4719 = vcmp.eq.f32.partialorder %v1981, %v4638
        %vm4720 = vcmp.eq.f32.partialorder %v1977, %v4642
        %vm4721 = vcmp.eq.f32.partialorder %v1981, %v4642
        %vm4722 = vcmp.eq.f32.partialorder %v1977, %v4646
        %vm4723 = vcmp.eq.f32.partialorder %v1981, %v4646
        %vm4724 = vcmp.eq.f32.partialorder %v1977, %v4650
        %vm4725 = vcmp.eq.f32.partialorder %v1981, %v4650
        %vm4726 = vcmp.eq.f32.partialorder %v1977, %v4654
        %vm4727 = vcmp.eq.f32.partialorder %v1981, %v4654
        %vm4728 = vcmp.eq.f32.partialorder %v1977, %v4658
        %vm4729 = vcmp.eq.f32.partialorder %v1981, %v4658
        %vm4730 = vcmp.eq.f32.partialorder %v1977, %v4662
        %vm4731 = vcmp.eq.f32.partialorder %v1981, %v4662
        %vm4732 = vcmp.eq.f32.partialorder %v1977, %v4666
        %vm4733 = vcmp.eq.f32.partialorder %v1981, %v4666
        %vm4734 = vcmp.eq.f32.partialorder %v1977, %v4670
        %vm4735 = vcmp.eq.f32.partialorder %v1981, %v4670
        %4736 = vset.pattern.permute.xlu0 0
        %4737 = vperm.xlu0 %4736, %v3648
        %v4738 = vpop.permute.xlu0 %4737
        %4740 = vset.pattern.permute.xlu0 0
        %4741 = vperm.xlu0 %4740, %v3649
        %v4742 = vpop.permute.xlu0 %4741
        %4744 = vset.pattern.permute.xlu0 0
        %4745 = vperm.xlu0 %4744, %v3650
        %v4746 = vpop.permute.xlu0 %4745
        %4748 = vset.pattern.permute.xlu0 0
        %4749 = vperm.xlu0 %4748, %v3651
        %v4750 = vpop.permute.xlu0 %4749
        %4752 = vset.pattern.permute.xlu0 0
        %4753 = vperm.xlu0 %4752, %v3652
        %v4754 = vpop.permute.xlu0 %4753
        %4756 = vset.pattern.permute.xlu0 0
        %4757 = vperm.xlu0 %4756, %v3653
        %v4758 = vpop.permute.xlu0 %4757
        %4760 = vset.pattern.permute.xlu0 0
        %4761 = vperm.xlu0 %4760, %v3654
        %v4762 = vpop.permute.xlu0 %4761
        %4764 = vset.pattern.permute.xlu0 0
        %4765 = vperm.xlu0 %4764, %v3655
        %v4766 = vpop.permute.xlu0 %4765
        %4768 = vset.pattern.permute.xlu0 0
        %4769 = vperm.xlu0 %4768, %v3656
        %v4770 = vpop.permute.xlu0 %4769
        %4772 = vset.pattern.permute.xlu0 0
        %4773 = vperm.xlu0 %4772, %v3657
        %v4774 = vpop.permute.xlu0 %4773
        %4776 = vset.pattern.permute.xlu0 0
        %4777 = vperm.xlu0 %4776, %v3658
        %v4778 = vpop.permute.xlu0 %4777
        %4780 = vset.pattern.permute.xlu0 0
        %4781 = vperm.xlu0 %4780, %v3659
        %v4782 = vpop.permute.xlu0 %4781
        %4784 = vset.pattern.permute.xlu0 0
        %4785 = vperm.xlu0 %4784, %v3660
        %v4786 = vpop.permute.xlu0 %4785
        %4788 = vset.pattern.permute.xlu0 0
        %4789 = vperm.xlu0 %4788, %v3661
        %v4790 = vpop.permute.xlu0 %4789
        %4792 = vset.pattern.permute.xlu0 0
        %4793 = vperm.xlu0 %4792, %v3662
        %v4794 = vpop.permute.xlu0 %4793
        %4796 = vset.pattern.permute.xlu0 0
        %4797 = vperm.xlu0 %4796, %v3663
        %v4798 = vpop.permute.xlu0 %4797
        %4800 = vset.pattern.permute.xlu0 0
        %4801 = vperm.xlu0 %4800, %v3664
        %v4802 = vpop.permute.xlu0 %4801
        %4804 = vset.pattern.permute.xlu0 0
        %4805 = vperm.xlu0 %4804, %v3665
        %v4806 = vpop.permute.xlu0 %4805
        %4808 = vset.pattern.permute.xlu0 0
        %4809 = vperm.xlu0 %4808, %v3666
        %v4810 = vpop.permute.xlu0 %4809
        %4812 = vset.pattern.permute.xlu0 0
        %4813 = vperm.xlu0 %4812, %v3667
        %v4814 = vpop.permute.xlu0 %4813
        %4816 = vset.pattern.permute.xlu0 0
        %4817 = vperm.xlu0 %4816, %v3668
        %v4818 = vpop.permute.xlu0 %4817
        %4820 = vset.pattern.permute.xlu0 0
        %4821 = vperm.xlu0 %4820, %v3669
        %v4822 = vpop.permute.xlu0 %4821
        %4824 = vset.pattern.permute.xlu0 0
        %4825 = vperm.xlu0 %4824, %v3670
        %v4826 = vpop.permute.xlu0 %4825
        %4828 = vset.pattern.permute.xlu0 0
        %4829 = vperm.xlu0 %4828, %v3671
        %v4830 = vpop.permute.xlu0 %4829
        %4832 = vset.pattern.permute.xlu0 0
        %4833 = vperm.xlu0 %4832, %v3672
        %v4834 = vpop.permute.xlu0 %4833
        %4836 = vset.pattern.permute.xlu0 0
        %4837 = vperm.xlu0 %4836, %v3673
        %v4838 = vpop.permute.xlu0 %4837
        %4840 = vset.pattern.permute.xlu0 0
        %4841 = vperm.xlu0 %4840, %v3674
        %v4842 = vpop.permute.xlu0 %4841
        %4844 = vset.pattern.permute.xlu0 0
        %4845 = vperm.xlu0 %4844, %v3675
        %v4846 = vpop.permute.xlu0 %4845
        %4848 = vset.pattern.permute.xlu0 0
        %4849 = vperm.xlu0 %4848, %v3676
        %v4850 = vpop.permute.xlu0 %4849
        %4852 = vset.pattern.permute.xlu0 0
        %4853 = vperm.xlu0 %4852, %v3677
        %v4854 = vpop.permute.xlu0 %4853
        %4856 = vset.pattern.permute.xlu0 0
        %4857 = vperm.xlu0 %4856, %v3678
        %v4858 = vpop.permute.xlu0 %4857
        %4860 = vset.pattern.permute.xlu0 0
        %4861 = vperm.xlu0 %4860, %v3679
        %v4862 = vpop.permute.xlu0 %4861
        %v4864 = vsel %vm4672, %v4738, 0.0
        %v4865 = vsel %vm4673, %v4738, 0.0
        %v4866 = vsel %vm4674, %v4742, 0.0
        %v4867 = vsel %vm4675, %v4742, 0.0
        %v4868 = vsel %vm4676, %v4746, 0.0
        %v4869 = vsel %vm4677, %v4746, 0.0
        %v4870 = vsel %vm4678, %v4750, 0.0
        %v4871 = vsel %vm4679, %v4750, 0.0
        %v4872 = vsel %vm4680, %v4754, 0.0
        %v4873 = vsel %vm4681, %v4754, 0.0
        %v4874 = vsel %vm4682, %v4758, 0.0
        %v4875 = vsel %vm4683, %v4758, 0.0
        %v4876 = vsel %vm4684, %v4762, 0.0
        %v4877 = vsel %vm4685, %v4762, 0.0
        %v4878 = vsel %vm4686, %v4766, 0.0
        %v4879 = vsel %vm4687, %v4766, 0.0
        %v4880 = vsel %vm4688, %v4770, 0.0
        %v4881 = vsel %vm4689, %v4770, 0.0
        %v4882 = vsel %vm4690, %v4774, 0.0
        %v4883 = vsel %vm4691, %v4774, 0.0
        %v4884 = vsel %vm4692, %v4778, 0.0
        %v4885 = vsel %vm4693, %v4778, 0.0
        %v4886 = vsel %vm4694, %v4782, 0.0
        %v4887 = vsel %vm4695, %v4782, 0.0
        %v4888 = vsel %vm4696, %v4786, 0.0
        %v4889 = vsel %vm4697, %v4786, 0.0
        %v4890 = vsel %vm4698, %v4790, 0.0
        %v4891 = vsel %vm4699, %v4790, 0.0
        %v4892 = vsel %vm4700, %v4794, 0.0
        %v4893 = vsel %vm4701, %v4794, 0.0
        %v4894 = vsel %vm4702, %v4798, 0.0
        %v4895 = vsel %vm4703, %v4798, 0.0
        %v4896 = vsel %vm4704, %v4802, 0.0
        %v4897 = vsel %vm4705, %v4802, 0.0
        %v4898 = vsel %vm4706, %v4806, 0.0
        %v4899 = vsel %vm4707, %v4806, 0.0
        %v4900 = vsel %vm4708, %v4810, 0.0
        %v4901 = vsel %vm4709, %v4810, 0.0
        %v4902 = vsel %vm4710, %v4814, 0.0
        %v4903 = vsel %vm4711, %v4814, 0.0
        %v4904 = vsel %vm4712, %v4818, 0.0
        %v4905 = vsel %vm4713, %v4818, 0.0
        %v4906 = vsel %vm4714, %v4822, 0.0
        %v4907 = vsel %vm4715, %v4822, 0.0
        %v4908 = vsel %vm4716, %v4826, 0.0
        %v4909 = vsel %vm4717, %v4826, 0.0
        %v4910 = vsel %vm4718, %v4830, 0.0
        %v4911 = vsel %vm4719, %v4830, 0.0
        %v4912 = vsel %vm4720, %v4834, 0.0
        %v4913 = vsel %vm4721, %v4834, 0.0
        %v4914 = vsel %vm4722, %v4838, 0.0
        %v4915 = vsel %vm4723, %v4838, 0.0
        %v4916 = vsel %vm4724, %v4842, 0.0
        %v4917 = vsel %vm4725, %v4842, 0.0
        %v4918 = vsel %vm4726, %v4846, 0.0
        %v4919 = vsel %vm4727, %v4846, 0.0
        %v4920 = vsel %vm4728, %v4850, 0.0
        %v4921 = vsel %vm4729, %v4850, 0.0
        %v4922 = vsel %vm4730, %v4854, 0.0
        %v4923 = vsel %vm4731, %v4854, 0.0
        %v4924 = vsel %vm4732, %v4858, 0.0
        %v4925 = vsel %vm4733, %v4858, 0.0
        %v4926 = vsel %vm4734, %v4862, 0.0
        %v4927 = vsel %vm4735, %v4862, 0.0
        %v4928 = vadd.f32 %v2816, %v4864
        %v4929 = vadd.f32 %v2817, %v4865
        %v4930 = vadd.f32 %v2818, %v4866
        %v4931 = vadd.f32 %v2819, %v4867
        %v4932 = vadd.f32 %v2820, %v4868
        %v4933 = vadd.f32 %v2821, %v4869
        %v4934 = vadd.f32 %v2822, %v4870
        %v4935 = vadd.f32 %v2823, %v4871
        %v4936 = vadd.f32 %v2824, %v4872
        %v4937 = vadd.f32 %v2825, %v4873
        %v4938 = vadd.f32 %v2826, %v4874
        %v4939 = vadd.f32 %v2827, %v4875
        %v4940 = vadd.f32 %v2828, %v4876
        %v4941 = vadd.f32 %v2829, %v4877
        %v4942 = vadd.f32 %v2830, %v4878
        %v4943 = vadd.f32 %v2831, %v4879
        %v4944 = vadd.f32 %v2832, %v4880
        %v4945 = vadd.f32 %v2833, %v4881
        %v4946 = vadd.f32 %v2834, %v4882
        %v4947 = vadd.f32 %v2835, %v4883
        %v4948 = vadd.f32 %v2836, %v4884
        %v4949 = vadd.f32 %v2837, %v4885
        %v4950 = vadd.f32 %v2838, %v4886
        %v4951 = vadd.f32 %v2839, %v4887
        %v4952 = vadd.f32 %v2840, %v4888
        %v4953 = vadd.f32 %v2841, %v4889
        %v4954 = vadd.f32 %v2842, %v4890
        %v4955 = vadd.f32 %v2843, %v4891
        %v4956 = vadd.f32 %v2844, %v4892
        %v4957 = vadd.f32 %v2845, %v4893
        %v4958 = vadd.f32 %v2846, %v4894
        %v4959 = vadd.f32 %v2847, %v4895
        %v4960 = vadd.f32 %v2848, %v4896
        %v4961 = vadd.f32 %v2849, %v4897
        %v4962 = vadd.f32 %v2850, %v4898
        %v4963 = vadd.f32 %v2851, %v4899
        %v4964 = vadd.f32 %v2852, %v4900
        %v4965 = vadd.f32 %v2853, %v4901
        %v4966 = vadd.f32 %v2854, %v4902
        %v4967 = vadd.f32 %v2855, %v4903
        %v4968 = vadd.f32 %v2856, %v4904
        %v4969 = vadd.f32 %v2857, %v4905
        %v4970 = vadd.f32 %v2858, %v4906
        %v4971 = vadd.f32 %v2859, %v4907
        %v4972 = vadd.f32 %v2860, %v4908
        %v4973 = vadd.f32 %v2861, %v4909
        %v4974 = vadd.f32 %v2862, %v4910
        %v4975 = vadd.f32 %v2863, %v4911
        %v4976 = vadd.f32 %v2864, %v4912
        %v4977 = vadd.f32 %v2865, %v4913
        %v4978 = vadd.f32 %v2866, %v4914
        %v4979 = vadd.f32 %v2867, %v4915
        %v4980 = vadd.f32 %v2868, %v4916
        %v4981 = vadd.f32 %v2869, %v4917
        %v4982 = vadd.f32 %v2870, %v4918
        %v4983 = vadd.f32 %v2871, %v4919
        %v4984 = vadd.f32 %v2872, %v4920
        %v4985 = vadd.f32 %v2873, %v4921
        %v4986 = vadd.f32 %v2874, %v4922
        %v4987 = vadd.f32 %v2875, %v4923
        %v4988 = vadd.f32 %v2876, %v4924
        %v4989 = vadd.f32 %v2877, %v4925
        %v4990 = vadd.f32 %v2878, %v4926
        %v4991 = vadd.f32 %v2879, %v4927
        %4992 = vset.pattern.permute.xlu0 0
        %4993 = vperm.xlu0 %4992, %v3360
        %v4994 = vpop.permute.xlu0 %4993
        %4996 = vset.pattern.permute.xlu0 0
        %4997 = vperm.xlu0 %4996, %v3361
        %v4998 = vpop.permute.xlu0 %4997
        %5000 = vset.pattern.permute.xlu0 0
        %5001 = vperm.xlu0 %5000, %v3362
        %v5002 = vpop.permute.xlu0 %5001
        %5004 = vset.pattern.permute.xlu0 0
        %5005 = vperm.xlu0 %5004, %v3363
        %v5006 = vpop.permute.xlu0 %5005
        %5008 = vset.pattern.permute.xlu0 0
        %5009 = vperm.xlu0 %5008, %v3364
        %v5010 = vpop.permute.xlu0 %5009
        %5012 = vset.pattern.permute.xlu0 0
        %5013 = vperm.xlu0 %5012, %v3365
        %v5014 = vpop.permute.xlu0 %5013
        %5016 = vset.pattern.permute.xlu0 0
        %5017 = vperm.xlu0 %5016, %v3366
        %v5018 = vpop.permute.xlu0 %5017
        %5020 = vset.pattern.permute.xlu0 0
        %5021 = vperm.xlu0 %5020, %v3367
        %v5022 = vpop.permute.xlu0 %5021
        %5024 = vset.pattern.permute.xlu0 0
        %5025 = vperm.xlu0 %5024, %v3368
        %v5026 = vpop.permute.xlu0 %5025
        %5028 = vset.pattern.permute.xlu0 0
        %5029 = vperm.xlu0 %5028, %v3369
        %v5030 = vpop.permute.xlu0 %5029
        %5032 = vset.pattern.permute.xlu0 0
        %5033 = vperm.xlu0 %5032, %v3370
        %v5034 = vpop.permute.xlu0 %5033
        %5036 = vset.pattern.permute.xlu0 0
        %5037 = vperm.xlu0 %5036, %v3371
        %v5038 = vpop.permute.xlu0 %5037
        %5040 = vset.pattern.permute.xlu0 0
        %5041 = vperm.xlu0 %5040, %v3372
        %v5042 = vpop.permute.xlu0 %5041
        %5044 = vset.pattern.permute.xlu0 0
        %5045 = vperm.xlu0 %5044, %v3373
        %v5046 = vpop.permute.xlu0 %5045
        %5048 = vset.pattern.permute.xlu0 0
        %5049 = vperm.xlu0 %5048, %v3374
        %v5050 = vpop.permute.xlu0 %5049
        %5052 = vset.pattern.permute.xlu0 0
        %5053 = vperm.xlu0 %5052, %v3375
        %v5054 = vpop.permute.xlu0 %5053
        %5056 = vset.pattern.permute.xlu0 0
        %5057 = vperm.xlu0 %5056, %v3376
        %v5058 = vpop.permute.xlu0 %5057
        %5060 = vset.pattern.permute.xlu0 0
        %5061 = vperm.xlu0 %5060, %v3377
        %v5062 = vpop.permute.xlu0 %5061
        %5064 = vset.pattern.permute.xlu0 0
        %5065 = vperm.xlu0 %5064, %v3378
        %v5066 = vpop.permute.xlu0 %5065
        %5068 = vset.pattern.permute.xlu0 0
        %5069 = vperm.xlu0 %5068, %v3379
        %v5070 = vpop.permute.xlu0 %5069
        %5072 = vset.pattern.permute.xlu0 0
        %5073 = vperm.xlu0 %5072, %v3380
        %v5074 = vpop.permute.xlu0 %5073
        %5076 = vset.pattern.permute.xlu0 0
        %5077 = vperm.xlu0 %5076, %v3381
        %v5078 = vpop.permute.xlu0 %5077
        %5080 = vset.pattern.permute.xlu0 0
        %5081 = vperm.xlu0 %5080, %v3382
        %v5082 = vpop.permute.xlu0 %5081
        %5084 = vset.pattern.permute.xlu0 0
        %5085 = vperm.xlu0 %5084, %v3383
        %v5086 = vpop.permute.xlu0 %5085
        %5088 = vset.pattern.permute.xlu0 0
        %5089 = vperm.xlu0 %5088, %v3384
        %v5090 = vpop.permute.xlu0 %5089
        %5092 = vset.pattern.permute.xlu0 0
        %5093 = vperm.xlu0 %5092, %v3385
        %v5094 = vpop.permute.xlu0 %5093
        %5096 = vset.pattern.permute.xlu0 0
        %5097 = vperm.xlu0 %5096, %v3386
        %v5098 = vpop.permute.xlu0 %5097
        %5100 = vset.pattern.permute.xlu0 0
        %5101 = vperm.xlu0 %5100, %v3387
        %v5102 = vpop.permute.xlu0 %5101
        %5104 = vset.pattern.permute.xlu0 0
        %5105 = vperm.xlu0 %5104, %v3388
        %v5106 = vpop.permute.xlu0 %5105
        %5108 = vset.pattern.permute.xlu0 0
        %5109 = vperm.xlu0 %5108, %v3389
        %v5110 = vpop.permute.xlu0 %5109
        %5112 = vset.pattern.permute.xlu0 0
        %5113 = vperm.xlu0 %5112, %v3390
        %v5114 = vpop.permute.xlu0 %5113
        %5116 = vset.pattern.permute.xlu0 0
        %5117 = vperm.xlu0 %5116, %v3391
        %v5118 = vpop.permute.xlu0 %5117
        %vm5120 = vcmp.eq.f32.partialorder %v1977, %v4994
        %vm5121 = vcmp.eq.f32.partialorder %v1981, %v4994
        %vm5122 = vcmp.eq.f32.partialorder %v1977, %v4998
        %vm5123 = vcmp.eq.f32.partialorder %v1981, %v4998
        %vm5124 = vcmp.eq.f32.partialorder %v1977, %v5002
        %vm5125 = vcmp.eq.f32.partialorder %v1981, %v5002
        %vm5126 = vcmp.eq.f32.partialorder %v1977, %v5006
        %vm5127 = vcmp.eq.f32.partialorder %v1981, %v5006
        %vm5128 = vcmp.eq.f32.partialorder %v1977, %v5010
        %vm5129 = vcmp.eq.f32.partialorder %v1981, %v5010
        %vm5130 = vcmp.eq.f32.partialorder %v1977, %v5014
        %vm5131 = vcmp.eq.f32.partialorder %v1981, %v5014
        %vm5132 = vcmp.eq.f32.partialorder %v1977, %v5018
        %vm5133 = vcmp.eq.f32.partialorder %v1981, %v5018
        %vm5134 = vcmp.eq.f32.partialorder %v1977, %v5022
        %vm5135 = vcmp.eq.f32.partialorder %v1981, %v5022
        %vm5136 = vcmp.eq.f32.partialorder %v1977, %v5026
        %vm5137 = vcmp.eq.f32.partialorder %v1981, %v5026
        %vm5138 = vcmp.eq.f32.partialorder %v1977, %v5030
        %vm5139 = vcmp.eq.f32.partialorder %v1981, %v5030
        %vm5140 = vcmp.eq.f32.partialorder %v1977, %v5034
        %vm5141 = vcmp.eq.f32.partialorder %v1981, %v5034
        %vm5142 = vcmp.eq.f32.partialorder %v1977, %v5038
        %vm5143 = vcmp.eq.f32.partialorder %v1981, %v5038
        %vm5144 = vcmp.eq.f32.partialorder %v1977, %v5042
        %vm5145 = vcmp.eq.f32.partialorder %v1981, %v5042
        %vm5146 = vcmp.eq.f32.partialorder %v1977, %v5046
        %vm5147 = vcmp.eq.f32.partialorder %v1981, %v5046
        %vm5148 = vcmp.eq.f32.partialorder %v1977, %v5050
        %vm5149 = vcmp.eq.f32.partialorder %v1981, %v5050
        %vm5150 = vcmp.eq.f32.partialorder %v1977, %v5054
        %vm5151 = vcmp.eq.f32.partialorder %v1981, %v5054
        %vm5152 = vcmp.eq.f32.partialorder %v1977, %v5058
        %vm5153 = vcmp.eq.f32.partialorder %v1981, %v5058
        %vm5154 = vcmp.eq.f32.partialorder %v1977, %v5062
        %vm5155 = vcmp.eq.f32.partialorder %v1981, %v5062
        %vm5156 = vcmp.eq.f32.partialorder %v1977, %v5066
        %vm5157 = vcmp.eq.f32.partialorder %v1981, %v5066
        %vm5158 = vcmp.eq.f32.partialorder %v1977, %v5070
        %vm5159 = vcmp.eq.f32.partialorder %v1981, %v5070
        %vm5160 = vcmp.eq.f32.partialorder %v1977, %v5074
        %vm5161 = vcmp.eq.f32.partialorder %v1981, %v5074
        %vm5162 = vcmp.eq.f32.partialorder %v1977, %v5078
        %vm5163 = vcmp.eq.f32.partialorder %v1981, %v5078
        %vm5164 = vcmp.eq.f32.partialorder %v1977, %v5082
        %vm5165 = vcmp.eq.f32.partialorder %v1981, %v5082
        %vm5166 = vcmp.eq.f32.partialorder %v1977, %v5086
        %vm5167 = vcmp.eq.f32.partialorder %v1981, %v5086
        %vm5168 = vcmp.eq.f32.partialorder %v1977, %v5090
        %vm5169 = vcmp.eq.f32.partialorder %v1981, %v5090
        %vm5170 = vcmp.eq.f32.partialorder %v1977, %v5094
        %vm5171 = vcmp.eq.f32.partialorder %v1981, %v5094
        %vm5172 = vcmp.eq.f32.partialorder %v1977, %v5098
        %vm5173 = vcmp.eq.f32.partialorder %v1981, %v5098
        %vm5174 = vcmp.eq.f32.partialorder %v1977, %v5102
        %vm5175 = vcmp.eq.f32.partialorder %v1981, %v5102
        %vm5176 = vcmp.eq.f32.partialorder %v1977, %v5106
        %vm5177 = vcmp.eq.f32.partialorder %v1981, %v5106
        %vm5178 = vcmp.eq.f32.partialorder %v1977, %v5110
        %vm5179 = vcmp.eq.f32.partialorder %v1981, %v5110
        %vm5180 = vcmp.eq.f32.partialorder %v1977, %v5114
        %vm5181 = vcmp.eq.f32.partialorder %v1981, %v5114
        %vm5182 = vcmp.eq.f32.partialorder %v1977, %v5118
        %vm5183 = vcmp.eq.f32.partialorder %v1981, %v5118
        %5184 = vset.pattern.permute.xlu0 0
        %5185 = vperm.xlu0 %5184, %v4192
        %v5186 = vpop.permute.xlu0 %5185
        %5188 = vset.pattern.permute.xlu0 0
        %5189 = vperm.xlu0 %5188, %v4193
        %v5190 = vpop.permute.xlu0 %5189
        %5192 = vset.pattern.permute.xlu0 0
        %5193 = vperm.xlu0 %5192, %v4194
        %v5194 = vpop.permute.xlu0 %5193
        %5196 = vset.pattern.permute.xlu0 0
        %5197 = vperm.xlu0 %5196, %v4195
        %v5198 = vpop.permute.xlu0 %5197
        %5200 = vset.pattern.permute.xlu0 0
        %5201 = vperm.xlu0 %5200, %v4196
        %v5202 = vpop.permute.xlu0 %5201
        %5204 = vset.pattern.permute.xlu0 0
        %5205 = vperm.xlu0 %5204, %v4197
        %v5206 = vpop.permute.xlu0 %5205
        %5208 = vset.pattern.permute.xlu0 0
        %5209 = vperm.xlu0 %5208, %v4198
        %v5210 = vpop.permute.xlu0 %5209
        %5212 = vset.pattern.permute.xlu0 0
        %5213 = vperm.xlu0 %5212, %v4199
        %v5214 = vpop.permute.xlu0 %5213
        %5216 = vset.pattern.permute.xlu0 0
        %5217 = vperm.xlu0 %5216, %v4200
        %v5218 = vpop.permute.xlu0 %5217
        %5220 = vset.pattern.permute.xlu0 0
        %5221 = vperm.xlu0 %5220, %v4201
        %v5222 = vpop.permute.xlu0 %5221
        %5224 = vset.pattern.permute.xlu0 0
        %5225 = vperm.xlu0 %5224, %v4202
        %v5226 = vpop.permute.xlu0 %5225
        %5228 = vset.pattern.permute.xlu0 0
        %5229 = vperm.xlu0 %5228, %v4203
        %v5230 = vpop.permute.xlu0 %5229
        %5232 = vset.pattern.permute.xlu0 0
        %5233 = vperm.xlu0 %5232, %v4204
        %v5234 = vpop.permute.xlu0 %5233
        %5236 = vset.pattern.permute.xlu0 0
        %5237 = vperm.xlu0 %5236, %v4205
        %v5238 = vpop.permute.xlu0 %5237
        %5240 = vset.pattern.permute.xlu0 0
        %5241 = vperm.xlu0 %5240, %v4206
        %v5242 = vpop.permute.xlu0 %5241
        %5244 = vset.pattern.permute.xlu0 0
        %5245 = vperm.xlu0 %5244, %v4207
        %v5246 = vpop.permute.xlu0 %5245
        %5248 = vset.pattern.permute.xlu0 0
        %5249 = vperm.xlu0 %5248, %v4208
        %v5250 = vpop.permute.xlu0 %5249
        %5252 = vset.pattern.permute.xlu0 0
        %5253 = vperm.xlu0 %5252, %v4209
        %v5254 = vpop.permute.xlu0 %5253
        %5256 = vset.pattern.permute.xlu0 0
        %5257 = vperm.xlu0 %5256, %v4210
        %v5258 = vpop.permute.xlu0 %5257
        %5260 = vset.pattern.permute.xlu0 0
        %5261 = vperm.xlu0 %5260, %v4211
        %v5262 = vpop.permute.xlu0 %5261
        %5264 = vset.pattern.permute.xlu0 0
        %5265 = vperm.xlu0 %5264, %v4212
        %v5266 = vpop.permute.xlu0 %5265
        %5268 = vset.pattern.permute.xlu0 0
        %5269 = vperm.xlu0 %5268, %v4213
        %v5270 = vpop.permute.xlu0 %5269
        %5272 = vset.pattern.permute.xlu0 0
        %5273 = vperm.xlu0 %5272, %v4214
        %v5274 = vpop.permute.xlu0 %5273
        %5276 = vset.pattern.permute.xlu0 0
        %5277 = vperm.xlu0 %5276, %v4215
        %v5278 = vpop.permute.xlu0 %5277
        %5280 = vset.pattern.permute.xlu0 0
        %5281 = vperm.xlu0 %5280, %v4216
        %v5282 = vpop.permute.xlu0 %5281
        %5284 = vset.pattern.permute.xlu0 0
        %5285 = vperm.xlu0 %5284, %v4217
        %v5286 = vpop.permute.xlu0 %5285
        %5288 = vset.pattern.permute.xlu0 0
        %5289 = vperm.xlu0 %5288, %v4218
        %v5290 = vpop.permute.xlu0 %5289
        %5292 = vset.pattern.permute.xlu0 0
        %5293 = vperm.xlu0 %5292, %v4219
        %v5294 = vpop.permute.xlu0 %5293
        %5296 = vset.pattern.permute.xlu0 0
        %5297 = vperm.xlu0 %5296, %v4220
        %v5298 = vpop.permute.xlu0 %5297
        %5300 = vset.pattern.permute.xlu0 0
        %5301 = vperm.xlu0 %5300, %v4221
        %v5302 = vpop.permute.xlu0 %5301
        %5304 = vset.pattern.permute.xlu0 0
        %5305 = vperm.xlu0 %5304, %v4222
        %v5306 = vpop.permute.xlu0 %5305
        %5308 = vset.pattern.permute.xlu0 0
        %5309 = vperm.xlu0 %5308, %v4223
        %v5310 = vpop.permute.xlu0 %5309
        %v5312 = vsel %vm5120, %v5186, 0.0
        %v5313 = vsel %vm5121, %v5186, 0.0
        %v5314 = vsel %vm5122, %v5190, 0.0
        %v5315 = vsel %vm5123, %v5190, 0.0
        %v5316 = vsel %vm5124, %v5194, 0.0
        %v5317 = vsel %vm5125, %v5194, 0.0
        %v5318 = vsel %vm5126, %v5198, 0.0
        %v5319 = vsel %vm5127, %v5198, 0.0
        %v5320 = vsel %vm5128, %v5202, 0.0
        %v5321 = vsel %vm5129, %v5202, 0.0
        %v5322 = vsel %vm5130, %v5206, 0.0
        %v5323 = vsel %vm5131, %v5206, 0.0
        %v5324 = vsel %vm5132, %v5210, 0.0
        %v5325 = vsel %vm5133, %v5210, 0.0
        %v5326 = vsel %vm5134, %v5214, 0.0
        %v5327 = vsel %vm5135, %v5214, 0.0
        %v5328 = vsel %vm5136, %v5218, 0.0
        %v5329 = vsel %vm5137, %v5218, 0.0
        %v5330 = vsel %vm5138, %v5222, 0.0
        %v5331 = vsel %vm5139, %v5222, 0.0
        %v5332 = vsel %vm5140, %v5226, 0.0
        %v5333 = vsel %vm5141, %v5226, 0.0
        %v5334 = vsel %vm5142, %v5230, 0.0
        %v5335 = vsel %vm5143, %v5230, 0.0
        %v5336 = vsel %vm5144, %v5234, 0.0
        %v5337 = vsel %vm5145, %v5234, 0.0
        %v5338 = vsel %vm5146, %v5238, 0.0
        %v5339 = vsel %vm5147, %v5238, 0.0
        %v5340 = vsel %vm5148, %v5242, 0.0
        %v5341 = vsel %vm5149, %v5242, 0.0
        %v5342 = vsel %vm5150, %v5246, 0.0
        %v5343 = vsel %vm5151, %v5246, 0.0
        %v5344 = vsel %vm5152, %v5250, 0.0
        %v5345 = vsel %vm5153, %v5250, 0.0
        %v5346 = vsel %vm5154, %v5254, 0.0
        %v5347 = vsel %vm5155, %v5254, 0.0
        %v5348 = vsel %vm5156, %v5258, 0.0
        %v5349 = vsel %vm5157, %v5258, 0.0
        %v5350 = vsel %vm5158, %v5262, 0.0
        %v5351 = vsel %vm5159, %v5262, 0.0
        %v5352 = vsel %vm5160, %v5266, 0.0
        %v5353 = vsel %vm5161, %v5266, 0.0
        %v5354 = vsel %vm5162, %v5270, 0.0
        %v5355 = vsel %vm5163, %v5270, 0.0
        %v5356 = vsel %vm5164, %v5274, 0.0
        %v5357 = vsel %vm5165, %v5274, 0.0
        %v5358 = vsel %vm5166, %v5278, 0.0
        %v5359 = vsel %vm5167, %v5278, 0.0
        %v5360 = vsel %vm5168, %v5282, 0.0
        %v5361 = vsel %vm5169, %v5282, 0.0
        %v5362 = vsel %vm5170, %v5286, 0.0
        %v5363 = vsel %vm5171, %v5286, 0.0
        %v5364 = vsel %vm5172, %v5290, 0.0
        %v5365 = vsel %vm5173, %v5290, 0.0
        %v5366 = vsel %vm5174, %v5294, 0.0
        %v5367 = vsel %vm5175, %v5294, 0.0
        %v5368 = vsel %vm5176, %v5298, 0.0
        %v5369 = vsel %vm5177, %v5298, 0.0
        %v5370 = vsel %vm5178, %v5302, 0.0
        %v5371 = vsel %vm5179, %v5302, 0.0
        %v5372 = vsel %vm5180, %v5306, 0.0
        %v5373 = vsel %vm5181, %v5306, 0.0
        %v5374 = vsel %vm5182, %v5310, 0.0
        %v5375 = vsel %vm5183, %v5310, 0.0
        %v5376 = vadd.f32 %v4928, %v5312
        %v5377 = vadd.f32 %v4929, %v5313
        %v5378 = vadd.f32 %v4930, %v5314
        %v5379 = vadd.f32 %v4931, %v5315
        %v5380 = vadd.f32 %v4932, %v5316
        %v5381 = vadd.f32 %v4933, %v5317
        %v5382 = vadd.f32 %v4934, %v5318
        %v5383 = vadd.f32 %v4935, %v5319
        %v5384 = vadd.f32 %v4936, %v5320
        %v5385 = vadd.f32 %v4937, %v5321
        %v5386 = vadd.f32 %v4938, %v5322
        %v5387 = vadd.f32 %v4939, %v5323
        %v5388 = vadd.f32 %v4940, %v5324
        %v5389 = vadd.f32 %v4941, %v5325
        %v5390 = vadd.f32 %v4942, %v5326
        %v5391 = vadd.f32 %v4943, %v5327
        %v5392 = vadd.f32 %v4944, %v5328
        %v5393 = vadd.f32 %v4945, %v5329
        %v5394 = vadd.f32 %v4946, %v5330
        %v5395 = vadd.f32 %v4947, %v5331
        %v5396 = vadd.f32 %v4948, %v5332
        %v5397 = vadd.f32 %v4949, %v5333
        %v5398 = vadd.f32 %v4950, %v5334
        %v5399 = vadd.f32 %v4951, %v5335
        %v5400 = vadd.f32 %v4952, %v5336
        %v5401 = vadd.f32 %v4953, %v5337
        %v5402 = vadd.f32 %v4954, %v5338
        %v5403 = vadd.f32 %v4955, %v5339
        %v5404 = vadd.f32 %v4956, %v5340
        %v5405 = vadd.f32 %v4957, %v5341
        %v5406 = vadd.f32 %v4958, %v5342
        %v5407 = vadd.f32 %v4959, %v5343
        %v5408 = vadd.f32 %v4960, %v5344
        %v5409 = vadd.f32 %v4961, %v5345
        %v5410 = vadd.f32 %v4962, %v5346
        %v5411 = vadd.f32 %v4963, %v5347
        %v5412 = vadd.f32 %v4964, %v5348
        %v5413 = vadd.f32 %v4965, %v5349
        %v5414 = vadd.f32 %v4966, %v5350
        %v5415 = vadd.f32 %v4967, %v5351
        %v5416 = vadd.f32 %v4968, %v5352
        %v5417 = vadd.f32 %v4969, %v5353
        %v5418 = vadd.f32 %v4970, %v5354
        %v5419 = vadd.f32 %v4971, %v5355
        %v5420 = vadd.f32 %v4972, %v5356
        %v5421 = vadd.f32 %v4973, %v5357
        %v5422 = vadd.f32 %v4974, %v5358
        %v5423 = vadd.f32 %v4975, %v5359
        %v5424 = vadd.f32 %v4976, %v5360
        %v5425 = vadd.f32 %v4977, %v5361
        %v5426 = vadd.f32 %v4978, %v5362
        %v5427 = vadd.f32 %v4979, %v5363
        %v5428 = vadd.f32 %v4980, %v5364
        %v5429 = vadd.f32 %v4981, %v5365
        %v5430 = vadd.f32 %v4982, %v5366
        %v5431 = vadd.f32 %v4983, %v5367
        %v5432 = vadd.f32 %v4984, %v5368
        %v5433 = vadd.f32 %v4985, %v5369
        %v5434 = vadd.f32 %v4986, %v5370
        %v5435 = vadd.f32 %v4987, %v5371
        %v5436 = vadd.f32 %v4988, %v5372
        %v5437 = vadd.f32 %v4989, %v5373
        %v5438 = vadd.f32 %v4990, %v5374
        %v5439 = vadd.f32 %v4991, %v5375
        %v5440 = vmul.f32 %v4448, %v5376
        %v5441 = vmul.f32 %v4449, %v5377
        %v5442 = vmul.f32 %v4450, %v5378
        %v5443 = vmul.f32 %v4451, %v5379
        %v5444 = vmul.f32 %v4452, %v5380
        %v5445 = vmul.f32 %v4453, %v5381
        %v5446 = vmul.f32 %v4454, %v5382
        %v5447 = vmul.f32 %v4455, %v5383
        %v5448 = vmul.f32 %v4456, %v5384
        %v5449 = vmul.f32 %v4457, %v5385
        %v5450 = vmul.f32 %v4458, %v5386
        %v5451 = vmul.f32 %v4459, %v5387
        %v5452 = vmul.f32 %v4460, %v5388
        %v5453 = vmul.f32 %v4461, %v5389
        %v5454 = vmul.f32 %v4462, %v5390
        %v5455 = vmul.f32 %v4463, %v5391
        %v5456 = vmul.f32 %v4464, %v5392
        %v5457 = vmul.f32 %v4465, %v5393
        %v5458 = vmul.f32 %v4466, %v5394
        %v5459 = vmul.f32 %v4467, %v5395
        %v5460 = vmul.f32 %v4468, %v5396
        %v5461 = vmul.f32 %v4469, %v5397
        %v5462 = vmul.f32 %v4470, %v5398
        %v5463 = vmul.f32 %v4471, %v5399
        %v5464 = vmul.f32 %v4472, %v5400
        %v5465 = vmul.f32 %v4473, %v5401
        %v5466 = vmul.f32 %v4474, %v5402
        %v5467 = vmul.f32 %v4475, %v5403
        %v5468 = vmul.f32 %v4476, %v5404
        %v5469 = vmul.f32 %v4477, %v5405
        %v5470 = vmul.f32 %v4478, %v5406
        %v5471 = vmul.f32 %v4479, %v5407
        %v5472 = vmul.f32 %v4480, %v5408
        %v5473 = vmul.f32 %v4481, %v5409
        %v5474 = vmul.f32 %v4482, %v5410
        %v5475 = vmul.f32 %v4483, %v5411
        %v5476 = vmul.f32 %v4484, %v5412
        %v5477 = vmul.f32 %v4485, %v5413
        %v5478 = vmul.f32 %v4486, %v5414
        %v5479 = vmul.f32 %v4487, %v5415
        %v5480 = vmul.f32 %v4488, %v5416
        %v5481 = vmul.f32 %v4489, %v5417
        %v5482 = vmul.f32 %v4490, %v5418
        %v5483 = vmul.f32 %v4491, %v5419
        %v5484 = vmul.f32 %v4492, %v5420
        %v5485 = vmul.f32 %v4493, %v5421
        %v5486 = vmul.f32 %v4494, %v5422
        %v5487 = vmul.f32 %v4495, %v5423
        %v5488 = vmul.f32 %v4496, %v5424
        %v5489 = vmul.f32 %v4497, %v5425
        %v5490 = vmul.f32 %v4498, %v5426
        %v5491 = vmul.f32 %v4499, %v5427
        %v5492 = vmul.f32 %v4500, %v5428
        %v5493 = vmul.f32 %v4501, %v5429
        %v5494 = vmul.f32 %v4502, %v5430
        %v5495 = vmul.f32 %v4503, %v5431
        %v5496 = vmul.f32 %v4504, %v5432
        %v5497 = vmul.f32 %v4505, %v5433
        %v5498 = vmul.f32 %v4506, %v5434
        %v5499 = vmul.f32 %v4507, %v5435
        %v5500 = vmul.f32 %v4508, %v5436
        %v5501 = vmul.f32 %v4509, %v5437
        %v5502 = vmul.f32 %v4510, %v5438
        %v5503 = vmul.f32 %v4511, %v5439
        %5536 = vrot.lane.b32.xlu0 %v4512, 1
        %v5537 = vpop.permute.xlu0 %5536
        %5538 = vrot.lane.b32.xlu0 %v4513, 1
        %v5539 = vpop.permute.xlu0 %5538
        %5540 = vrot.lane.b32.xlu0 %v4514, 1
        %v5541 = vpop.permute.xlu0 %5540
        %5542 = vrot.lane.b32.xlu0 %v4515, 1
        %v5543 = vpop.permute.xlu0 %5542
        %5544 = vrot.lane.b32.xlu0 %v4516, 1
        %v5545 = vpop.permute.xlu0 %5544
        %5546 = vrot.lane.b32.xlu0 %v4517, 1
        %v5547 = vpop.permute.xlu0 %5546
        %5548 = vrot.lane.b32.xlu0 %v4518, 1
        %v5549 = vpop.permute.xlu0 %5548
        %5550 = vrot.lane.b32.xlu0 %v4519, 1
        %v5551 = vpop.permute.xlu0 %5550
        %5552 = vrot.lane.b32.xlu0 %v4520, 1
        %v5553 = vpop.permute.xlu0 %5552
        %5554 = vrot.lane.b32.xlu0 %v4521, 1
        %v5555 = vpop.permute.xlu0 %5554
        %5556 = vrot.lane.b32.xlu0 %v4522, 1
        %v5557 = vpop.permute.xlu0 %5556
        %5558 = vrot.lane.b32.xlu0 %v4523, 1
        %v5559 = vpop.permute.xlu0 %5558
        %5560 = vrot.lane.b32.xlu0 %v4524, 1
        %v5561 = vpop.permute.xlu0 %5560
        %5562 = vrot.lane.b32.xlu0 %v4525, 1
        %v5563 = vpop.permute.xlu0 %5562
        %5564 = vrot.lane.b32.xlu0 %v4526, 1
        %v5565 = vpop.permute.xlu0 %5564
        %5566 = vrot.lane.b32.xlu0 %v4527, 1
        %v5567 = vpop.permute.xlu0 %5566
        %5568 = vrot.lane.b32.xlu0 %v4528, 1
        %v5569 = vpop.permute.xlu0 %5568
        %5570 = vrot.lane.b32.xlu0 %v4529, 1
        %v5571 = vpop.permute.xlu0 %5570
        %5572 = vrot.lane.b32.xlu0 %v4530, 1
        %v5573 = vpop.permute.xlu0 %5572
        %5574 = vrot.lane.b32.xlu0 %v4531, 1
        %v5575 = vpop.permute.xlu0 %5574
        %5576 = vrot.lane.b32.xlu0 %v4532, 1
        %v5577 = vpop.permute.xlu0 %5576
        %5578 = vrot.lane.b32.xlu0 %v4533, 1
        %v5579 = vpop.permute.xlu0 %5578
        %5580 = vrot.lane.b32.xlu0 %v4534, 1
        %v5581 = vpop.permute.xlu0 %5580
        %5582 = vrot.lane.b32.xlu0 %v4535, 1
        %v5583 = vpop.permute.xlu0 %5582
        %5584 = vrot.lane.b32.xlu0 %v4536, 1
        %v5585 = vpop.permute.xlu0 %5584
        %5586 = vrot.lane.b32.xlu0 %v4537, 1
        %v5587 = vpop.permute.xlu0 %5586
        %5588 = vrot.lane.b32.xlu0 %v4538, 1
        %v5589 = vpop.permute.xlu0 %5588
        %5590 = vrot.lane.b32.xlu0 %v4539, 1
        %v5591 = vpop.permute.xlu0 %5590
        %5592 = vrot.lane.b32.xlu0 %v4540, 1
        %v5593 = vpop.permute.xlu0 %5592
        %5594 = vrot.lane.b32.xlu0 %v4541, 1
        %v5595 = vpop.permute.xlu0 %5594
        %5596 = vrot.lane.b32.xlu0 %v4542, 1
        %v5597 = vpop.permute.xlu0 %5596
        %5598 = vrot.lane.b32.xlu0 %v4543, 1
        %v5599 = vpop.permute.xlu0 %5598
        %v5632 = vmul.f32 %v4512, %v5537
        %v5633 = vmul.f32 %v4513, %v5539
        %v5634 = vmul.f32 %v4514, %v5541
        %v5635 = vmul.f32 %v4515, %v5543
        %v5636 = vmul.f32 %v4516, %v5545
        %v5637 = vmul.f32 %v4517, %v5547
        %v5638 = vmul.f32 %v4518, %v5549
        %v5639 = vmul.f32 %v4519, %v5551
        %v5640 = vmul.f32 %v4520, %v5553
        %v5641 = vmul.f32 %v4521, %v5555
        %v5642 = vmul.f32 %v4522, %v5557
        %v5643 = vmul.f32 %v4523, %v5559
        %v5644 = vmul.f32 %v4524, %v5561
        %v5645 = vmul.f32 %v4525, %v5563
        %v5646 = vmul.f32 %v4526, %v5565
        %v5647 = vmul.f32 %v4527, %v5567
        %v5648 = vmul.f32 %v4528, %v5569
        %v5649 = vmul.f32 %v4529, %v5571
        %v5650 = vmul.f32 %v4530, %v5573
        %v5651 = vmul.f32 %v4531, %v5575
        %v5652 = vmul.f32 %v4532, %v5577
        %v5653 = vmul.f32 %v4533, %v5579
        %v5654 = vmul.f32 %v4534, %v5581
        %v5655 = vmul.f32 %v4535, %v5583
        %v5656 = vmul.f32 %v4536, %v5585
        %v5657 = vmul.f32 %v4537, %v5587
        %v5658 = vmul.f32 %v4538, %v5589
        %v5659 = vmul.f32 %v4539, %v5591
        %v5660 = vmul.f32 %v4540, %v5593
        %v5661 = vmul.f32 %v4541, %v5595
        %v5662 = vmul.f32 %v4542, %v5597
        %v5663 = vmul.f32 %v4543, %v5599
        %v5664 = vld [vmem:[%s230] sm:$0xff]
        %v5665 = vld [vmem:[%s230 + $0x8] sm:$0xff]
        %v5666 = vld [vmem:[%s230 + $0x10] sm:$0xff]
        %v5667 = vld [vmem:[%s230 + $0x18] sm:$0xff]
        %v5668 = vld [vmem:[%s230 + $0x20] sm:$0xff]
        %v5669 = vld [vmem:[%s230 + $0x28] sm:$0xff]
        %v5670 = vld [vmem:[%s230 + $0x30] sm:$0xff]
        %v5671 = vld [vmem:[%s230 + $0x38] sm:$0xff]
        %v5672 = vld [vmem:[%s230 + $0x40] sm:$0xff]
        %v5673 = vld [vmem:[%s230 + $0x48] sm:$0xff]
        %v5674 = vld [vmem:[%s230 + $0x50] sm:$0xff]
        %v5675 = vld [vmem:[%s230 + $0x58] sm:$0xff]
        %v5676 = vld [vmem:[%s230 + $0x60] sm:$0xff]
        %v5677 = vld [vmem:[%s230 + $0x68] sm:$0xff]
        %v5678 = vld [vmem:[%s230 + $0x70] sm:$0xff]
        %v5679 = vld [vmem:[%s230 + $0x78] sm:$0xff]
        %v5680 = vld [vmem:[%s230 + $0x80] sm:$0xff]
        %v5681 = vld [vmem:[%s230 + $0x88] sm:$0xff]
        %v5682 = vld [vmem:[%s230 + $0x90] sm:$0xff]
        %v5683 = vld [vmem:[%s230 + $0x98] sm:$0xff]
        %v5684 = vld [vmem:[%s230 + $0xa0] sm:$0xff]
        %v5685 = vld [vmem:[%s230 + $0xa8] sm:$0xff]
        %v5686 = vld [vmem:[%s230 + $0xb0] sm:$0xff]
        %v5687 = vld [vmem:[%s230 + $0xb8] sm:$0xff]
        %v5688 = vld [vmem:[%s230 + $0xc0] sm:$0xff]
        %v5689 = vld [vmem:[%s230 + $0xc8] sm:$0xff]
        %v5690 = vld [vmem:[%s230 + $0xd0] sm:$0xff]
        %v5691 = vld [vmem:[%s230 + $0xd8] sm:$0xff]
        %v5692 = vld [vmem:[%s230 + $0xe0] sm:$0xff]
        %v5693 = vld [vmem:[%s230 + $0xe8] sm:$0xff]
        %v5694 = vld [vmem:[%s230 + $0xf0] sm:$0xff]
        %v5695 = vld [vmem:[%s230 + $0xf8] sm:$0xff]
        %5696 = vmatprep.subr.mxu0 0.0
        %5697 = vmatpush1.msra.mxu0 %v5664
        %5698 = vmatprep.subr.mxu0 0.0
        %5699 = vmatpush1.msra.mxu0 %v5665
        %5700 = vmatprep.subr.mxu0 0.0
        %5701 = vmatpush1.msra.mxu0 %v5666
        %5702 = vmatprep.subr.mxu0 0.0
        %5703 = vmatpush1.msra.mxu0 %v5667
        %5704 = vmatprep.subr.mxu0 0.0
        %5705 = vmatpush1.msra.mxu0 %v5668
        %5706 = vmatprep.subr.mxu0 0.0
        %5707 = vmatpush1.msra.mxu0 %v5669
        %5708 = vmatprep.subr.mxu0 0.0
        %5709 = vmatpush1.msra.mxu0 %v5670
        %5710 = vmatprep.subr.mxu0 0.0
        %5711 = vmatpush1.msra.mxu0 %v5671
        %5712 = vmatprep.subr.mxu0 0.0
        %5713 = vmatpush1.msra.mxu0 %v5672
        %5714 = vmatprep.subr.mxu0 0.0
        %5715 = vmatpush1.msra.mxu0 %v5673
        %5716 = vmatprep.subr.mxu0 0.0
        %5717 = vmatpush1.msra.mxu0 %v5674
        %5718 = vmatprep.subr.mxu0 0.0
        %5719 = vmatpush1.msra.mxu0 %v5675
        %5720 = vmatprep.subr.mxu0 0.0
        %5721 = vmatpush1.msra.mxu0 %v5676
        %5722 = vmatprep.subr.mxu0 0.0
        %5723 = vmatpush1.msra.mxu0 %v5677
        %5724 = vmatprep.subr.mxu0 0.0
        %5725 = vmatpush1.msra.mxu0 %v5678
        %5726 = vmatprep.subr.mxu0 0.0
        %5727 = vmatpush1.msra.mxu0 %v5679
        %5728 = vmatprep.subr.mxu0 0.0
        %5729 = vmatpush1.msra.mxu0 %v5680
        %5730 = vmatprep.subr.mxu0 0.0
        %5731 = vmatpush1.msra.mxu0 %v5681
        %5732 = vmatprep.subr.mxu0 0.0
        %5733 = vmatpush1.msra.mxu0 %v5682
        %5734 = vmatprep.subr.mxu0 0.0
        %5735 = vmatpush1.msra.mxu0 %v5683
        %5736 = vmatprep.subr.mxu0 0.0
        %5737 = vmatpush1.msra.mxu0 %v5684
        %5738 = vmatprep.subr.mxu0 0.0
        %5739 = vmatpush1.msra.mxu0 %v5685
        %5740 = vmatprep.subr.mxu0 0.0
        %5741 = vmatpush1.msra.mxu0 %v5686
        %5742 = vmatprep.subr.mxu0 0.0
        %5743 = vmatpush1.msra.mxu0 %v5687
        %5744 = vmatprep.subr.mxu0 0.0
        %5745 = vmatpush1.msra.mxu0 %v5688
        %5746 = vmatprep.subr.mxu0 0.0
        %5747 = vmatpush1.msra.mxu0 %v5689
        %5748 = vmatprep.subr.mxu0 0.0
        %5749 = vmatpush1.msra.mxu0 %v5690
        %5750 = vmatprep.subr.mxu0 0.0
        %5751 = vmatpush1.msra.mxu0 %v5691
        %5752 = vmatprep.subr.mxu0 0.0
        %5753 = vmatpush1.msra.mxu0 %v5692
        %5754 = vmatprep.subr.mxu0 0.0
        %5755 = vmatpush1.msra.mxu0 %v5693
        %5756 = vmatprep.subr.mxu0 0.0
        %5757 = vmatpush1.msra.mxu0 %v5694
        %5758 = vmatprep.subr.mxu0 0.0
        %5759 = vmatpush1.msra.mxu0 %v5695
        %5760 = vmatprep.mubr.f32.mxu0 %v5441
        %5761 = vmatmul.mubr.f32.gmra.mrb[0].mxu0 %v5440
        %v5762 = vpop.f32.mrb[0].mxu0
        %v5763 = vadd.f32 0.0, %v5762
        %v5764 = vpop.f32.mrb[0].mxu0
        %5765 = vmatprep.mubr.f32.mxu0 %v5443
        %5766 = vmatmul.mubr.f32.gmra.mrb[0].mxu0 %v5442
        %v5767 = vpop.f32.mrb[0].mxu0
        %v5768 = vadd.f32 0.0, %v5767
        %v5769 = vpop.f32.mrb[0].mxu0
        %5770 = vmatprep.mubr.f32.mxu0 %v5445
        %5771 = vmatmul.mubr.f32.gmra.mrb[0].mxu0 %v5444
        %v5772 = vpop.f32.mrb[0].mxu0
        %v5773 = vadd.f32 0.0, %v5772
        %v5774 = vpop.f32.mrb[0].mxu0
        %5775 = vmatprep.mubr.f32.mxu0 %v5447
        %5776 = vmatmul.mubr.f32.gmra.mrb[0].mxu0 %v5446
        %v5777 = vpop.f32.mrb[0].mxu0
        %v5778 = vadd.f32 0.0, %v5777
        %v5779 = vpop.f32.mrb[0].mxu0
        %5780 = vmatprep.mubr.f32.mxu0 %v5449
        %5781 = vmatmul.mubr.f32.gmra.mrb[0].mxu0 %v5448
        %v5782 = vpop.f32.mrb[0].mxu0
        %v5783 = vadd.f32 0.0, %v5782
        %v5784 = vpop.f32.mrb[0].mxu0
        %5785 = vmatprep.mubr.f32.mxu0 %v5451
        %5786 = vmatmul.mubr.f32.gmra.mrb[0].mxu0 %v5450
        %v5787 = vpop.f32.mrb[0].mxu0
        %v5788 = vadd.f32 0.0, %v5787
        %v5789 = vpop.f32.mrb[0].mxu0
        %5790 = vmatprep.mubr.f32.mxu0 %v5453
        %5791 = vmatmul.mubr.f32.gmra.mrb[0].mxu0 %v5452
        %v5792 = vpop.f32.mrb[0].mxu0
        %v5793 = vadd.f32 0.0, %v5792
        %v5794 = vpop.f32.mrb[0].mxu0
        %5795 = vmatprep.mubr.f32.mxu0 %v5455
        %5796 = vmatmul.mubr.f32.gmra.mrb[0].mxu0 %v5454
        %v5797 = vpop.f32.mrb[0].mxu0
        %v5798 = vadd.f32 0.0, %v5797
        %v5799 = vpop.f32.mrb[0].mxu0
        %5800 = vmatprep.mubr.f32.mxu0 %v5457
        %5801 = vmatmul.mubr.f32.gmra.mrb[0].mxu0 %v5456
        %v5802 = vpop.f32.mrb[0].mxu0
        %v5803 = vadd.f32 0.0, %v5802
        %v5804 = vpop.f32.mrb[0].mxu0
        %5805 = vmatprep.mubr.f32.mxu0 %v5459
        %5806 = vmatmul.mubr.f32.gmra.mrb[0].mxu0 %v5458
        %v5807 = vpop.f32.mrb[0].mxu0
        %v5808 = vadd.f32 0.0, %v5807
        %v5809 = vpop.f32.mrb[0].mxu0
        %5810 = vmatprep.mubr.f32.mxu0 %v5461
        %5811 = vmatmul.mubr.f32.gmra.mrb[0].mxu0 %v5460
        %v5812 = vpop.f32.mrb[0].mxu0
        %v5813 = vadd.f32 0.0, %v5812
        %v5814 = vpop.f32.mrb[0].mxu0
        %5815 = vmatprep.mubr.f32.mxu0 %v5463
        %5816 = vmatmul.mubr.f32.gmra.mrb[0].mxu0 %v5462
        %v5817 = vpop.f32.mrb[0].mxu0
        %v5818 = vadd.f32 0.0, %v5817
        %v5819 = vpop.f32.mrb[0].mxu0
        %5820 = vmatprep.mubr.f32.mxu0 %v5465
        %5821 = vmatmul.mubr.f32.gmra.mrb[0].mxu0 %v5464
        %v5822 = vpop.f32.mrb[0].mxu0
        %v5823 = vadd.f32 0.0, %v5822
        %v5824 = vpop.f32.mrb[0].mxu0
        %5825 = vmatprep.mubr.f32.mxu0 %v5467
        %5826 = vmatmul.mubr.f32.gmra.mrb[0].mxu0 %v5466
        %v5827 = vpop.f32.mrb[0].mxu0
        %v5828 = vadd.f32 0.0, %v5827
        %v5829 = vpop.f32.mrb[0].mxu0
        %5830 = vmatprep.mubr.f32.mxu0 %v5469
        %5831 = vmatmul.mubr.f32.gmra.mrb[0].mxu0 %v5468
        %v5832 = vpop.f32.mrb[0].mxu0
        %v5833 = vadd.f32 0.0, %v5832
        %v5834 = vpop.f32.mrb[0].mxu0
        %5835 = vmatprep.mubr.f32.mxu0 %v5471
        %5836 = vmatmul.mubr.f32.gmra.mrb[0].mxu0 %v5470
        %v5837 = vpop.f32.mrb[0].mxu0
        %v5838 = vadd.f32 0.0, %v5837
        %v5839 = vpop.f32.mrb[0].mxu0
        %5840 = vmatprep.mubr.f32.mxu0 %v5473
        %5841 = vmatmul.mubr.f32.gmra.mrb[0].mxu0 %v5472
        %v5842 = vpop.f32.mrb[0].mxu0
        %v5843 = vadd.f32 0.0, %v5842
        %v5844 = vpop.f32.mrb[0].mxu0
        %5845 = vmatprep.mubr.f32.mxu0 %v5475
        %5846 = vmatmul.mubr.f32.gmra.mrb[0].mxu0 %v5474
        %v5847 = vpop.f32.mrb[0].mxu0
        %v5848 = vadd.f32 0.0, %v5847
        %v5849 = vpop.f32.mrb[0].mxu0
        %5850 = vmatprep.mubr.f32.mxu0 %v5477
        %5851 = vmatmul.mubr.f32.gmra.mrb[0].mxu0 %v5476
        %v5852 = vpop.f32.mrb[0].mxu0
        %v5853 = vadd.f32 0.0, %v5852
        %v5854 = vpop.f32.mrb[0].mxu0
        %5855 = vmatprep.mubr.f32.mxu0 %v5479
        %5856 = vmatmul.mubr.f32.gmra.mrb[0].mxu0 %v5478
        %v5857 = vpop.f32.mrb[0].mxu0
        %v5858 = vadd.f32 0.0, %v5857
        %v5859 = vpop.f32.mrb[0].mxu0
        %5860 = vmatprep.mubr.f32.mxu0 %v5481
        %5861 = vmatmul.mubr.f32.gmra.mrb[0].mxu0 %v5480
        %v5862 = vpop.f32.mrb[0].mxu0
        %v5863 = vadd.f32 0.0, %v5862
        %v5864 = vpop.f32.mrb[0].mxu0
        %5865 = vmatprep.mubr.f32.mxu0 %v5483
        %5866 = vmatmul.mubr.f32.gmra.mrb[0].mxu0 %v5482
        %v5867 = vpop.f32.mrb[0].mxu0
        %v5868 = vadd.f32 0.0, %v5867
        %v5869 = vpop.f32.mrb[0].mxu0
        %5870 = vmatprep.mubr.f32.mxu0 %v5485
        %5871 = vmatmul.mubr.f32.gmra.mrb[0].mxu0 %v5484
        %v5872 = vpop.f32.mrb[0].mxu0
        %v5873 = vadd.f32 0.0, %v5872
        %v5874 = vpop.f32.mrb[0].mxu0
        %5875 = vmatprep.mubr.f32.mxu0 %v5487
        %5876 = vmatmul.mubr.f32.gmra.mrb[0].mxu0 %v5486
        %v5877 = vpop.f32.mrb[0].mxu0
        %v5878 = vadd.f32 0.0, %v5877
        %v5879 = vpop.f32.mrb[0].mxu0
        %5880 = vmatprep.mubr.f32.mxu0 %v5489
        %5881 = vmatmul.mubr.f32.gmra.mrb[0].mxu0 %v5488
        %v5882 = vpop.f32.mrb[0].mxu0
        %v5883 = vadd.f32 0.0, %v5882
        %v5884 = vpop.f32.mrb[0].mxu0
        %5885 = vmatprep.mubr.f32.mxu0 %v5491
        %5886 = vmatmul.mubr.f32.gmra.mrb[0].mxu0 %v5490
        %v5887 = vpop.f32.mrb[0].mxu0
        %v5888 = vadd.f32 0.0, %v5887
        %v5889 = vpop.f32.mrb[0].mxu0
        %5890 = vmatprep.mubr.f32.mxu0 %v5493
        %5891 = vmatmul.mubr.f32.gmra.mrb[0].mxu0 %v5492
        %v5892 = vpop.f32.mrb[0].mxu0
        %v5893 = vadd.f32 0.0, %v5892
        %v5894 = vpop.f32.mrb[0].mxu0
        %5895 = vmatprep.mubr.f32.mxu0 %v5495
        %5896 = vmatmul.mubr.f32.gmra.mrb[0].mxu0 %v5494
        %v5897 = vpop.f32.mrb[0].mxu0
        %v5898 = vadd.f32 0.0, %v5897
        %v5899 = vpop.f32.mrb[0].mxu0
        %5900 = vmatprep.mubr.f32.mxu0 %v5497
        %5901 = vmatmul.mubr.f32.gmra.mrb[0].mxu0 %v5496
        %v5902 = vpop.f32.mrb[0].mxu0
        %v5903 = vadd.f32 0.0, %v5902
        %v5904 = vpop.f32.mrb[0].mxu0
        %5905 = vmatprep.mubr.f32.mxu0 %v5499
        %5906 = vmatmul.mubr.f32.gmra.mrb[0].mxu0 %v5498
        %v5907 = vpop.f32.mrb[0].mxu0
        %v5908 = vadd.f32 0.0, %v5907
        %v5909 = vpop.f32.mrb[0].mxu0
        %5910 = vmatprep.mubr.f32.mxu0 %v5501
        %5911 = vmatmul.mubr.f32.gmra.mrb[0].mxu0 %v5500
        %v5912 = vpop.f32.mrb[0].mxu0
        %v5913 = vadd.f32 0.0, %v5912
        %v5914 = vpop.f32.mrb[0].mxu0
        %5915 = vmatprep.mubr.f32.mxu0 %v5503
        %5916 = vmatmul.mubr.f32.gmra.mrb[0].mxu0 %v5502
        %v5917 = vpop.f32.mrb[0].mxu0
        %v5918 = vadd.f32 0.0, %v5917
        %v5919 = vpop.f32.mrb[0].mxu0
        %5920 = vdwg.mxu0
        %vm5921 = vcmp.gt.f32.partialorder %v5632, 0.0
        %vm5922 = vcmp.gt.f32.partialorder %v5633, 0.0
        %vm5923 = vcmp.gt.f32.partialorder %v5634, 0.0
        %vm5924 = vcmp.gt.f32.partialorder %v5635, 0.0
        %vm5925 = vcmp.gt.f32.partialorder %v5636, 0.0
        %vm5926 = vcmp.gt.f32.partialorder %v5637, 0.0
        %vm5927 = vcmp.gt.f32.partialorder %v5638, 0.0
        %vm5928 = vcmp.gt.f32.partialorder %v5639, 0.0
        %vm5929 = vcmp.gt.f32.partialorder %v5640, 0.0
        %vm5930 = vcmp.gt.f32.partialorder %v5641, 0.0
        %vm5931 = vcmp.gt.f32.partialorder %v5642, 0.0
        %vm5932 = vcmp.gt.f32.partialorder %v5643, 0.0
        %vm5933 = vcmp.gt.f32.partialorder %v5644, 0.0
        %vm5934 = vcmp.gt.f32.partialorder %v5645, 0.0
        %vm5935 = vcmp.gt.f32.partialorder %v5646, 0.0
        %vm5936 = vcmp.gt.f32.partialorder %v5647, 0.0
        %vm5937 = vcmp.gt.f32.partialorder %v5648, 0.0
        %vm5938 = vcmp.gt.f32.partialorder %v5649, 0.0
        %vm5939 = vcmp.gt.f32.partialorder %v5650, 0.0
        %vm5940 = vcmp.gt.f32.partialorder %v5651, 0.0
        %vm5941 = vcmp.gt.f32.partialorder %v5652, 0.0
        %vm5942 = vcmp.gt.f32.partialorder %v5653, 0.0
        %vm5943 = vcmp.gt.f32.partialorder %v5654, 0.0
        %vm5944 = vcmp.gt.f32.partialorder %v5655, 0.0
        %vm5945 = vcmp.gt.f32.partialorder %v5656, 0.0
        %vm5946 = vcmp.gt.f32.partialorder %v5657, 0.0
        %vm5947 = vcmp.gt.f32.partialorder %v5658, 0.0
        %vm5948 = vcmp.gt.f32.partialorder %v5659, 0.0
        %vm5949 = vcmp.gt.f32.partialorder %v5660, 0.0
        %vm5950 = vcmp.gt.f32.partialorder %v5661, 0.0
        %vm5951 = vcmp.gt.f32.partialorder %v5662, 0.0
        %vm5952 = vcmp.gt.f32.partialorder %v5663, 0.0
        %v5953 = vmax.f32 %v5632, 1.0
        %v5954 = vmax.f32 %v5633, 1.0
        %v5955 = vmax.f32 %v5634, 1.0
        %v5956 = vmax.f32 %v5635, 1.0
        %v5957 = vmax.f32 %v5636, 1.0
        %v5958 = vmax.f32 %v5637, 1.0
        %v5959 = vmax.f32 %v5638, 1.0
        %v5960 = vmax.f32 %v5639, 1.0
        %v5961 = vmax.f32 %v5640, 1.0
        %v5962 = vmax.f32 %v5641, 1.0
        %v5963 = vmax.f32 %v5642, 1.0
        %v5964 = vmax.f32 %v5643, 1.0
        %v5965 = vmax.f32 %v5644, 1.0
        %v5966 = vmax.f32 %v5645, 1.0
        %v5967 = vmax.f32 %v5646, 1.0
        %v5968 = vmax.f32 %v5647, 1.0
        %v5969 = vmax.f32 %v5648, 1.0
        %v5970 = vmax.f32 %v5649, 1.0
        %v5971 = vmax.f32 %v5650, 1.0
        %v5972 = vmax.f32 %v5651, 1.0
        %v5973 = vmax.f32 %v5652, 1.0
        %v5974 = vmax.f32 %v5653, 1.0
        %v5975 = vmax.f32 %v5654, 1.0
        %v5976 = vmax.f32 %v5655, 1.0
        %v5977 = vmax.f32 %v5656, 1.0
        %v5978 = vmax.f32 %v5657, 1.0
        %v5979 = vmax.f32 %v5658, 1.0
        %v5980 = vmax.f32 %v5659, 1.0
        %v5981 = vmax.f32 %v5660, 1.0
        %v5982 = vmax.f32 %v5661, 1.0
        %v5983 = vmax.f32 %v5662, 1.0
        %v5984 = vmax.f32 %v5663, 1.0
        %v5985 = vrcp.pop %v5953
        %v5986 = vmul.f32 1.0, %v5985
        %v5987 = vrcp.pop %v5954
        %v5988 = vmul.f32 1.0, %v5987
        %v5989 = vrcp.pop %v5955
        %v5990 = vmul.f32 1.0, %v5989
        %v5991 = vrcp.pop %v5956
        %v5992 = vmul.f32 1.0, %v5991
        %v5993 = vrcp.pop %v5957
        %v5994 = vmul.f32 1.0, %v5993
        %v5995 = vrcp.pop %v5958
        %v5996 = vmul.f32 1.0, %v5995
        %v5997 = vrcp.pop %v5959
        %v5998 = vmul.f32 1.0, %v5997
        %v5999 = vrcp.pop %v5960
        %v6000 = vmul.f32 1.0, %v5999
        %v6001 = vrcp.pop %v5961
        %v6002 = vmul.f32 1.0, %v6001
        %v6003 = vrcp.pop %v5962
        %v6004 = vmul.f32 1.0, %v6003
        %v6005 = vrcp.pop %v5963
        %v6006 = vmul.f32 1.0, %v6005
        %v6007 = vrcp.pop %v5964
        %v6008 = vmul.f32 1.0, %v6007
        %v6009 = vrcp.pop %v5965
        %v6010 = vmul.f32 1.0, %v6009
        %v6011 = vrcp.pop %v5966
        %v6012 = vmul.f32 1.0, %v6011
        %v6013 = vrcp.pop %v5967
        %v6014 = vmul.f32 1.0, %v6013
        %v6015 = vrcp.pop %v5968
        %v6016 = vmul.f32 1.0, %v6015
        %v6017 = vrcp.pop %v5969
        %v6018 = vmul.f32 1.0, %v6017
        %v6019 = vrcp.pop %v5970
        %v6020 = vmul.f32 1.0, %v6019
        %v6021 = vrcp.pop %v5971
        %v6022 = vmul.f32 1.0, %v6021
        %v6023 = vrcp.pop %v5972
        %v6024 = vmul.f32 1.0, %v6023
        %v6025 = vrcp.pop %v5973
        %v6026 = vmul.f32 1.0, %v6025
        %v6027 = vrcp.pop %v5974
        %v6028 = vmul.f32 1.0, %v6027
        %v6029 = vrcp.pop %v5975
        %v6030 = vmul.f32 1.0, %v6029
        %v6031 = vrcp.pop %v5976
        %v6032 = vmul.f32 1.0, %v6031
        %v6033 = vrcp.pop %v5977
        %v6034 = vmul.f32 1.0, %v6033
        %v6035 = vrcp.pop %v5978
        %v6036 = vmul.f32 1.0, %v6035
        %v6037 = vrcp.pop %v5979
        %v6038 = vmul.f32 1.0, %v6037
        %v6039 = vrcp.pop %v5980
        %v6040 = vmul.f32 1.0, %v6039
        %v6041 = vrcp.pop %v5981
        %v6042 = vmul.f32 1.0, %v6041
        %v6043 = vrcp.pop %v5982
        %v6044 = vmul.f32 1.0, %v6043
        %v6045 = vrcp.pop %v5983
        %v6046 = vmul.f32 1.0, %v6045
        %v6047 = vrcp.pop %v5984
        %v6048 = vmul.f32 1.0, %v6047
        %v6049 = vsel %vm5921, %v5986, 0.0
        %v6050 = vsel %vm5922, %v5988, 0.0
        %v6051 = vsel %vm5923, %v5990, 0.0
        %v6052 = vsel %vm5924, %v5992, 0.0
        %v6053 = vsel %vm5925, %v5994, 0.0
        %v6054 = vsel %vm5926, %v5996, 0.0
        %v6055 = vsel %vm5927, %v5998, 0.0
        %v6056 = vsel %vm5928, %v6000, 0.0
        %v6057 = vsel %vm5929, %v6002, 0.0
        %v6058 = vsel %vm5930, %v6004, 0.0
        %v6059 = vsel %vm5931, %v6006, 0.0
        %v6060 = vsel %vm5932, %v6008, 0.0
        %v6061 = vsel %vm5933, %v6010, 0.0
        %v6062 = vsel %vm5934, %v6012, 0.0
        %v6063 = vsel %vm5935, %v6014, 0.0
        %v6064 = vsel %vm5936, %v6016, 0.0
        %v6065 = vsel %vm5937, %v6018, 0.0
        %v6066 = vsel %vm5938, %v6020, 0.0
        %v6067 = vsel %vm5939, %v6022, 0.0
        %v6068 = vsel %vm5940, %v6024, 0.0
        %v6069 = vsel %vm5941, %v6026, 0.0
        %v6070 = vsel %vm5942, %v6028, 0.0
        %v6071 = vsel %vm5943, %v6030, 0.0
        %v6072 = vsel %vm5944, %v6032, 0.0
        %v6073 = vsel %vm5945, %v6034, 0.0
        %v6074 = vsel %vm5946, %v6036, 0.0
        %v6075 = vsel %vm5947, %v6038, 0.0
        %v6076 = vsel %vm5948, %v6040, 0.0
        %v6077 = vsel %vm5949, %v6042, 0.0
        %v6078 = vsel %vm5950, %v6044, 0.0
        %v6079 = vsel %vm5951, %v6046, 0.0
        %v6080 = vsel %vm5952, %v6048, 0.0
        %6082 = vset.pattern.permute.xlu0 1
        %6083 = vperm.xlu0 %6082, %v6049
        %v6084 = vpop.permute.xlu0 %6083
        %6087 = vset.pattern.permute.xlu0 1
        %6088 = vperm.xlu0 %6087, %v6050
        %v6089 = vpop.permute.xlu0 %6088
        %6092 = vset.pattern.permute.xlu0 1
        %6093 = vperm.xlu0 %6092, %v6051
        %v6094 = vpop.permute.xlu0 %6093
        %6097 = vset.pattern.permute.xlu0 1
        %6098 = vperm.xlu0 %6097, %v6052
        %v6099 = vpop.permute.xlu0 %6098
        %6102 = vset.pattern.permute.xlu0 1
        %6103 = vperm.xlu0 %6102, %v6053
        %v6104 = vpop.permute.xlu0 %6103
        %6107 = vset.pattern.permute.xlu0 1
        %6108 = vperm.xlu0 %6107, %v6054
        %v6109 = vpop.permute.xlu0 %6108
        %6112 = vset.pattern.permute.xlu0 1
        %6113 = vperm.xlu0 %6112, %v6055
        %v6114 = vpop.permute.xlu0 %6113
        %6117 = vset.pattern.permute.xlu0 1
        %6118 = vperm.xlu0 %6117, %v6056
        %v6119 = vpop.permute.xlu0 %6118
        %6122 = vset.pattern.permute.xlu0 1
        %6123 = vperm.xlu0 %6122, %v6057
        %v6124 = vpop.permute.xlu0 %6123
        %6127 = vset.pattern.permute.xlu0 1
        %6128 = vperm.xlu0 %6127, %v6058
        %v6129 = vpop.permute.xlu0 %6128
        %6132 = vset.pattern.permute.xlu0 1
        %6133 = vperm.xlu0 %6132, %v6059
        %v6134 = vpop.permute.xlu0 %6133
        %6137 = vset.pattern.permute.xlu0 1
        %6138 = vperm.xlu0 %6137, %v6060
        %v6139 = vpop.permute.xlu0 %6138
        %6142 = vset.pattern.permute.xlu0 1
        %6143 = vperm.xlu0 %6142, %v6061
        %v6144 = vpop.permute.xlu0 %6143
        %6147 = vset.pattern.permute.xlu0 1
        %6148 = vperm.xlu0 %6147, %v6062
        %v6149 = vpop.permute.xlu0 %6148
        %6152 = vset.pattern.permute.xlu0 1
        %6153 = vperm.xlu0 %6152, %v6063
        %v6154 = vpop.permute.xlu0 %6153
        %6157 = vset.pattern.permute.xlu0 1
        %6158 = vperm.xlu0 %6157, %v6064
        %v6159 = vpop.permute.xlu0 %6158
        %6162 = vset.pattern.permute.xlu0 1
        %6163 = vperm.xlu0 %6162, %v6065
        %v6164 = vpop.permute.xlu0 %6163
        %6167 = vset.pattern.permute.xlu0 1
        %6168 = vperm.xlu0 %6167, %v6066
        %v6169 = vpop.permute.xlu0 %6168
        %6172 = vset.pattern.permute.xlu0 1
        %6173 = vperm.xlu0 %6172, %v6067
        %v6174 = vpop.permute.xlu0 %6173
        %6177 = vset.pattern.permute.xlu0 1
        %6178 = vperm.xlu0 %6177, %v6068
        %v6179 = vpop.permute.xlu0 %6178
        %6182 = vset.pattern.permute.xlu0 1
        %6183 = vperm.xlu0 %6182, %v6069
        %v6184 = vpop.permute.xlu0 %6183
        %6187 = vset.pattern.permute.xlu0 1
        %6188 = vperm.xlu0 %6187, %v6070
        %v6189 = vpop.permute.xlu0 %6188
        %6192 = vset.pattern.permute.xlu0 1
        %6193 = vperm.xlu0 %6192, %v6071
        %v6194 = vpop.permute.xlu0 %6193
        %6197 = vset.pattern.permute.xlu0 1
        %6198 = vperm.xlu0 %6197, %v6072
        %v6199 = vpop.permute.xlu0 %6198
        %6202 = vset.pattern.permute.xlu0 1
        %6203 = vperm.xlu0 %6202, %v6073
        %v6204 = vpop.permute.xlu0 %6203
        %6207 = vset.pattern.permute.xlu0 1
        %6208 = vperm.xlu0 %6207, %v6074
        %v6209 = vpop.permute.xlu0 %6208
        %6212 = vset.pattern.permute.xlu0 1
        %6213 = vperm.xlu0 %6212, %v6075
        %v6214 = vpop.permute.xlu0 %6213
        %6217 = vset.pattern.permute.xlu0 1
        %6218 = vperm.xlu0 %6217, %v6076
        %v6219 = vpop.permute.xlu0 %6218
        %6222 = vset.pattern.permute.xlu0 1
        %6223 = vperm.xlu0 %6222, %v6077
        %v6224 = vpop.permute.xlu0 %6223
        %6227 = vset.pattern.permute.xlu0 1
        %6228 = vperm.xlu0 %6227, %v6078
        %v6229 = vpop.permute.xlu0 %6228
        %6232 = vset.pattern.permute.xlu0 1
        %6233 = vperm.xlu0 %6232, %v6079
        %v6234 = vpop.permute.xlu0 %6233
        %6237 = vset.pattern.permute.xlu0 1
        %6238 = vperm.xlu0 %6237, %v6080
        %v6239 = vpop.permute.xlu0 %6238
        %v6241 = vmul.f32 %v5763, %v6084
        %v6242 = vmul.f32 %v5768, %v6089
        %v6243 = vmul.f32 %v5773, %v6094
        %v6244 = vmul.f32 %v5778, %v6099
        %v6245 = vmul.f32 %v5783, %v6104
        %v6246 = vmul.f32 %v5788, %v6109
        %v6247 = vmul.f32 %v5793, %v6114
        %v6248 = vmul.f32 %v5798, %v6119
        %v6249 = vmul.f32 %v5803, %v6124
        %v6250 = vmul.f32 %v5808, %v6129
        %v6251 = vmul.f32 %v5813, %v6134
        %v6252 = vmul.f32 %v5818, %v6139
        %v6253 = vmul.f32 %v5823, %v6144
        %v6254 = vmul.f32 %v5828, %v6149
        %v6255 = vmul.f32 %v5833, %v6154
        %v6256 = vmul.f32 %v5838, %v6159
        %v6257 = vmul.f32 %v5843, %v6164
        %v6258 = vmul.f32 %v5848, %v6169
        %v6259 = vmul.f32 %v5853, %v6174
        %v6260 = vmul.f32 %v5858, %v6179
        %v6261 = vmul.f32 %v5863, %v6184
        %v6262 = vmul.f32 %v5868, %v6189
        %v6263 = vmul.f32 %v5873, %v6194
        %v6264 = vmul.f32 %v5878, %v6199
        %v6265 = vmul.f32 %v5883, %v6204
        %v6266 = vmul.f32 %v5888, %v6209
        %v6267 = vmul.f32 %v5893, %v6214
        %v6268 = vmul.f32 %v5898, %v6219
        %v6269 = vmul.f32 %v5903, %v6224
        %v6270 = vmul.f32 %v5908, %v6229
        %v6271 = vmul.f32 %v5913, %v6234
        %v6272 = vmul.f32 %v5918, %v6239
        %6273 = vst [vmem:[%s218] sm:$0xff] %v6241
        %6274 = vst [vmem:[%s218 + $0x8] sm:$0xff] %v6242
        %6275 = vst [vmem:[%s218 + $0x10] sm:$0xff] %v6243
        %6276 = vst [vmem:[%s218 + $0x18] sm:$0xff] %v6244
        %6277 = vst [vmem:[%s218 + $0x20] sm:$0xff] %v6245
        %6278 = vst [vmem:[%s218 + $0x28] sm:$0xff] %v6246
        %6279 = vst [vmem:[%s218 + $0x30] sm:$0xff] %v6247
        %6280 = vst [vmem:[%s218 + $0x38] sm:$0xff] %v6248
        %6281 = vst [vmem:[%s218 + $0x40] sm:$0xff] %v6249
        %6282 = vst [vmem:[%s218 + $0x48] sm:$0xff] %v6250
        %6283 = vst [vmem:[%s218 + $0x50] sm:$0xff] %v6251
        %6284 = vst [vmem:[%s218 + $0x58] sm:$0xff] %v6252
        %6285 = vst [vmem:[%s218 + $0x60] sm:$0xff] %v6253
        %6286 = vst [vmem:[%s218 + $0x68] sm:$0xff] %v6254
        %6287 = vst [vmem:[%s218 + $0x70] sm:$0xff] %v6255
        %6288 = vst [vmem:[%s218 + $0x78] sm:$0xff] %v6256
        %6289 = vst [vmem:[%s218 + $0x80] sm:$0xff] %v6257
        %6290 = vst [vmem:[%s218 + $0x88] sm:$0xff] %v6258
        %6291 = vst [vmem:[%s218 + $0x90] sm:$0xff] %v6259
        %6292 = vst [vmem:[%s218 + $0x98] sm:$0xff] %v6260
        %6293 = vst [vmem:[%s218 + $0xa0] sm:$0xff] %v6261
        %6294 = vst [vmem:[%s218 + $0xa8] sm:$0xff] %v6262
        %6295 = vst [vmem:[%s218 + $0xb0] sm:$0xff] %v6263
        %6296 = vst [vmem:[%s218 + $0xb8] sm:$0xff] %v6264
        %6297 = vst [vmem:[%s218 + $0xc0] sm:$0xff] %v6265
        %6298 = vst [vmem:[%s218 + $0xc8] sm:$0xff] %v6266
        %6299 = vst [vmem:[%s218 + $0xd0] sm:$0xff] %v6267
        %6300 = vst [vmem:[%s218 + $0xd8] sm:$0xff] %v6268
        %6301 = vst [vmem:[%s218 + $0xe0] sm:$0xff] %v6269
        %6302 = vst [vmem:[%s218 + $0xe8] sm:$0xff] %v6270
        %6303 = vst [vmem:[%s218 + $0xf0] sm:$0xff] %v6271
        %6304 = vst [vmem:[%s218 + $0xf8] sm:$0xff] %v6272
        %s6305 = sand.u32 %s129, 1
        %s6306 = scalar_lea.sflag [#allocation5], %s6305
        %s6307 = sand.u32 %s129, 1
        %s6308 = smul.addr %s6307, 256
        %s6309 = scalar_lea.vmem [#allocation4], %s6308
        // Predicated region
        $region37: #{tpu_custom_call.1} parent=35 // pred_check
          %p6310 = pneg %p139
        $region38: #{tpu_custom_call.1} parent=35 // pred_check_branch
          %6312 = sbr.rel (%p6310) target = $region40
        $region39: #{tpu_custom_call.1} parent=35 // pred_region
          %s6314 = ssub.s32 4096, 4096
          %6315 = vsyncadd %s6306, %s6314
          %s6316 = smul.addr %s25, 32
          %s6317 = smul.addr %s6316, 128
          %s6318 = scalar_lea.hbm %s5, %s6317
          %s6319 = sshll.u32 %s6309, 4
          %s6320 = int_to_ptr.vmem [resolvable:$true] %s6319
          %6325 = dma.vmem_to_hbm [thread:$0]  %s6320, 4096, %s6318, %s6306, 128, 128, 8
        $region40: #{tpu_custom_call.1} parent=35 // pred_fallthru
          _
      $region36: #{tpu_custom_call.1} parent=5 // pred_fallthru
        _
      %p6326 = scmp.le.s32.totalorder 2, %s20
      // Predicated region
      $region41: #{tpu_custom_call.1} parent=5 // pred_check
        %p6327 = pneg %p6326
      $region42: #{tpu_custom_call.1} parent=5 // pred_check_branch
        %6329 = sbr.rel (%p6327) target = $region44
      $region43: #{tpu_custom_call.1} parent=5 // pred_region
        %s6330 = ssub.s32 %s20, 2
        // Predicated region
        $region45: #{tpu_custom_call.1} parent=43 // pred_check
          %p6331 = pneg %p145
        $region46: #{tpu_custom_call.1} parent=43 // pred_check_branch
          %6333 = sbr.rel (%p6331) target = $region48
        $region47: #{tpu_custom_call.1} parent=43 // pred_region
          %s6334 = sand.u32 %s130, 1
          %s6335 = scalar_lea.sflag [#allocation5], %s6334
          %s6336 = sand.u32 %s130, 1
          %s6337 = smul.addr %s6336, 256
          %s6338 = scalar_lea.vmem [#allocation4], %s6337
          %6339 = dma.done %s6335, 4096
        $region48: #{tpu_custom_call.1} parent=43 // pred_fallthru
          _
      $region44: #{tpu_custom_call.1} parent=5 // pred_fallthru
        _
    $region6: #{tpu_custom_call.1} parent=1 // loop_footer
      %s24 = sadd.s32 1, %s20
    $region7: #{tpu_custom_call.1} parent=1 // loop_footer_branch
      %19 = sbr.rel target = $region3
    $region8: #{tpu_custom_call.1} parent=1 // loop_exit
      _
    %6340 = vsyncpa [#allocation5], 1
    %s6341 = scalar_lea.sflag [#allocation5], 1
    %6342 = vsyncpa %s6341, 1

</llo_original>
